<compile_context>
chip_gen: v7x
topology: tpu7x:2x2x1
jax: 0.10.0
libtpu: 0.0.40
codegen_flags: <defaults>
</compile_context>

<pallas_src>
import functools

import jax
import jax.numpy as jnp
from jax.experimental import pallas as pl
from jax.experimental.pallas import tpu as pltpu

IN_FEATURES = 6 * 2048          # 12288
HIDDEN = 512
TK = 6144                       # K-tile for the first (large) matmul: 2 grid steps


def _mlp_head_kernel(x_ref, w1_ref, s1_ref, b1_ref, w2_ref, b2_ref,
                     out_ref, acc_ref):
    """Fused Linear(12288->512, int8 weights) -> ReLU -> Linear(512->C).

    Grid axis 0 walks the K (=12288) reduction dimension of the first matmul.
    W1 arrives as int8 and is dequantized per K-tile: the int8->bf16 cast is
    exact, so the f32 accumulator holds the exact integer-weighted sum; the
    per-output-channel scale is applied once in the epilogue, followed by
    bias + ReLU and the tiny fused second matmul.
    """
    k = pl.program_id(0)

    @pl.when(k == 0)
    def _():
        acc_ref[...] = jnp.zeros_like(acc_ref)

    # int8 weights -> bf16 (exact for |w| <= 127), bf16 x bf16 -> MXU, f32 acc.
    w1 = w1_ref[...].astype(jnp.bfloat16)
    acc_ref[...] += jnp.dot(
        x_ref[...], w1, preferred_element_type=jnp.float32
    )

    @pl.when(k == pl.num_programs(0) - 1)
    def _():
        # per-channel dequant scale, bias, ReLU — all f32 on the VPU.
        h = jnp.maximum(acc_ref[...] * s1_ref[...] + b1_ref[...], 0.0)
        y = jnp.dot(h, w2_ref[...], preferred_element_type=jnp.float32)
        out_ref[...] = (y + b2_ref[...]).astype(out_ref.dtype)


@functools.partial(jax.jit, static_argnames=("num_classes",))
def lstm_head_forward(x, w1_q, w1_scale, b1, w2, b2, *, num_classes):
    """x: (B, 12288) -> (B, num_classes) f32.

    w1_q must already be int8 (per-output-channel scales in w1_scale) — the
    quantization is done once at init, never per call.
    """
    B, F = x.shape
    assert F == IN_FEATURES
    assert F % TK == 0
    assert w1_q.dtype == jnp.int8, "store W1 as int8 once at init (BW-bound path)"
    assert w1_q.shape == (IN_FEATURES, HIDDEN)
    assert w1_scale.shape == (1, HIDDEN)

    # Negligible at small B; upstream should emit bf16 directly if B grows.
    x = x.astype(jnp.bfloat16)
    grid = (F // TK,)

    return pl.pallas_call(
        _mlp_head_kernel,
        out_shape=jax.ShapeDtypeStruct((B, num_classes), jnp.float32),
        grid_spec=pltpu.PrefetchScalarGridSpec(
            num_scalar_prefetch=0,
            grid=grid,
            in_specs=[
                pl.BlockSpec((B, TK), lambda k: (0, k)),               # x K-tile (bf16)
                pl.BlockSpec((TK, HIDDEN), lambda k: (k, 0)),          # W1 K-tile (int8)
                pl.BlockSpec((1, HIDDEN), lambda k: (0, 0)),           # W1 scale (f32)
                pl.BlockSpec((1, HIDDEN), lambda k: (0, 0)),           # b1 (f32)
                pl.BlockSpec((HIDDEN, num_classes), lambda k: (0, 0)), # W2 (f32)
                pl.BlockSpec((1, num_classes), lambda k: (0, 0)),      # b2 (f32)
            ],
            out_specs=pl.BlockSpec((B, num_classes), lambda k: (0, 0)),
            scratch_shapes=[pltpu.VMEM((B, HIDDEN), jnp.float32)],
        ),
        compiler_params=pltpu.CompilerParams(
            dimension_semantics=("arbitrary",),
            # int8 W1 tile x2 buffers (~6 MiB) + per-step bf16 dequant temp
            # (~6 MiB) + small operands ~= 13 MiB; keep an explicit limit well
            # under v7x's 64 MiB physical per-TC VMEM.
            vmem_limit_bytes=32 * 1024 * 1024,
        ),
    )(x, w1_q, w1_scale, b1, w2, b2)


def init_params(key, num_classes):
    """Deterministic PyTorch-style uniform(-1/sqrt(fan_in), +1/sqrt(fan_in)).

    W1 is quantized ONCE here to int8 with symmetric per-output-channel f32
    scales (the kernel is HBM-BW bound on this tensor); biases and the tiny
    W2 stay f32.
    """
    k1, k2, k3, k4 = jax.random.split(key, 4)
    s1 = 1.0 / jnp.sqrt(jnp.float32(IN_FEATURES))
    s2 = 1.0 / jnp.sqrt(jnp.float32(HIDDEN))
    # stored as (in, out) so the kernel computes x @ W + b
    w1_f = jax.random.uniform(k1, (IN_FEATURES, HIDDEN), jnp.float32, -s1, s1)
    w1_scale = jnp.maximum(
        jnp.max(jnp.abs(w1_f), axis=0, keepdims=True) / 127.0, 1e-12
    )                                                            # (1, HIDDEN) f32
    w1_q = jnp.clip(jnp.round(w1_f / w1_scale), -127, 127).astype(jnp.int8)
    b1 = jax.random.uniform(k2, (1, HIDDEN), jnp.float32, -s1, s1)
    w2 = jax.random.uniform(k3, (HIDDEN, num_classes), jnp.float32, -s2, s2)
    b2 = jax.random.uniform(k4, (1, num_classes), jnp.float32, -s2, s2)
    return w1_q, w1_scale, b1, w2, b2


if __name__ == "__main__":
    num_classes = 10
    batch = 2

    key = jax.random.PRNGKey(0)
    kx, kp = jax.random.split(key)
    x = jax.random.normal(kx, (batch, IN_FEATURES), jnp.float32)
    w1_q, w1_scale, b1, w2, b2 = init_params(kp, num_classes)

    out = lstm_head_forward(x, w1_q, w1_scale, b1, w2, b2,
                            num_classes=num_classes)
    out = jax.block_until_ready(out)

    # pure-JAX reference check (same bf16 x / int8-dequantized W1, f32 math)
    xf = x.astype(jnp.bfloat16).astype(jnp.float32)
    w1_deq = w1_q.astype(jnp.float32) * w1_scale
    h = jnp.maximum(
        jnp.dot(xf, w1_deq, precision=jax.lax.Precision.HIGHEST) + b1, 0.0
    )
    ref = jnp.dot(h, w2, precision=jax.lax.Precision.HIGHEST) + b2

    assert out.shape == (batch, num_classes)
    assert jnp.allclose(out, ref, atol=1e-2, rtol=1e-2)

    print("KERNEL_OK")
</pallas_src>

<mosaic_0001>
module attributes {stable_mosaic.version = 11 : i64} {
  func.func @_mlp_head_kernel(%arg0: i32, %arg1: memref<2x6144xbf16, #tpu.memory_space<vmem>>, %arg2: memref<6144x512xi8, #tpu.memory_space<vmem>>, %arg3: memref<1x512xf32, #tpu.memory_space<vmem>>, %arg4: memref<1x512xf32, #tpu.memory_space<vmem>>, %arg5: memref<512x10xf32, #tpu.memory_space<vmem>>, %arg6: memref<1x10xf32, #tpu.memory_space<vmem>>, %arg7: memref<2x10xf32, #tpu.memory_space<vmem>>, %arg8: memref<2x512xf32, #tpu.memory_space<vmem>>) attributes {dimension_semantics = [#tpu.dimension_semantics<arbitrary>], iteration_bounds = array<i64: 2>, scalar_prefetch = 0 : i64, scratch_operands = 1 : i64, tpu.core_type = #tpu.core_type<tc>, window_params = [{transform_indices = @transform_0, window_bounds = array<i64: 2, 6144>}, {transform_indices = @transform_1, window_bounds = array<i64: 6144, 512>}, {pipeline_mode = #tpu.pipeline_mode<synchronous>, transform_indices = @transform_2, window_bounds = array<i64: 1, 512>}, {pipeline_mode = #tpu.pipeline_mode<synchronous>, transform_indices = @transform_3, window_bounds = array<i64: 1, 512>}, {pipeline_mode = #tpu.pipeline_mode<synchronous>, transform_indices = @transform_4, window_bounds = array<i64: 512, 10>}, {pipeline_mode = #tpu.pipeline_mode<synchronous>, transform_indices = @transform_5, window_bounds = array<i64: 1, 10>}, {pipeline_mode = #tpu.pipeline_mode<synchronous>, transform_indices = @transform_6, window_bounds = array<i64: 2, 10>}]} {
    %c0_i32 = arith.constant 0 : i32
    %0 = arith.cmpi eq, %arg0, %c0_i32 : i32
    %1 = arith.extui %0 : i1 to i32
    %c0_i32_0 = arith.constant 0 : i32
    %2 = arith.cmpi ne, %1, %c0_i32_0 : i32
    scf.if %2 {
      %cst_9 = arith.constant 0.000000e+00 : f32
      %13 = vector.broadcast %cst_9 : f32 to vector<2x512xf32>
      %c0_10 = arith.constant 0 : index
      %c0_11 = arith.constant 0 : index
      %14 = vector.load %arg8[%c0_10, %c0_11] : memref<2x512xf32, #tpu.memory_space<vmem>>, vector<2x512xf32>
      tpu.vector_store %arg8[%c0_10, %c0_11], %13 {strides = array<i32>} : memref<2x512xf32, #tpu.memory_space<vmem>>, vector<2x512xf32>,
    } else {
    }
    %c0 = arith.constant 0 : index
    %c0_1 = arith.constant 0 : index
    %3 = vector.load %arg2[%c0, %c0_1] : memref<6144x512xi8, #tpu.memory_space<vmem>>, vector<6144x512xi8>
    %4 = arith.sitofp %3 : vector<6144x512xi8> to vector<6144x512xbf16>
    %c0_2 = arith.constant 0 : index
    %c0_3 = arith.constant 0 : index
    %5 = vector.load %arg8[%c0_2, %c0_3] : memref<2x512xf32, #tpu.memory_space<vmem>>, vector<2x512xf32>
    %c0_4 = arith.constant 0 : index
    %c0_5 = arith.constant 0 : index
    %6 = vector.load %arg1[%c0_4, %c0_5] : memref<2x6144xbf16, #tpu.memory_space<vmem>>, vector<2x6144xbf16>
    %cst = arith.constant dense<0.000000e+00> : vector<2x512xf32>
    %7 = tpu.matmul %6, %4, %cst {dimension_numbers = #tpu.dot_dimension_numbers<[1], [0], [0], [1], [0, 0, 1, 1], [], []>} : vector<2x6144xbf16>, vector<6144x512xbf16>, vector<2x512xf32> -> vector<2x512xf32>
    %8 = arith.addf %5, %7 : vector<2x512xf32>
    %c0_6 = arith.constant 0 : index
    %c0_7 = arith.constant 0 : index
    %9 = vector.load %arg8[%c0_6, %c0_7] : memref<2x512xf32, #tpu.memory_space<vmem>>, vector<2x512xf32>
    tpu.vector_store %arg8[%c0_6, %c0_7], %8 {strides = array<i32>} : memref<2x512xf32, #tpu.memory_space<vmem>>, vector<2x512xf32>,
    %c1_i32 = arith.constant 1 : i32
    %10 = arith.cmpi eq, %arg0, %c1_i32 : i32
    %11 = arith.extui %10 : i1 to i32
    %c0_i32_8 = arith.constant 0 : i32
    %12 = arith.cmpi ne, %11, %c0_i32_8 : i32
    scf.if %12 {
      %c0_9 = arith.constant 0 : index
      %c0_10 = arith.constant 0 : index
      %13 = vector.load %arg8[%c0_9, %c0_10] : memref<2x512xf32, #tpu.memory_space<vmem>>, vector<2x512xf32>
      %c0_11 = arith.constant 0 : index
      %c0_12 = arith.constant 0 : index
      %14 = vector.load %arg3[%c0_11, %c0_12] : memref<1x512xf32, #tpu.memory_space<vmem>>, vector<1x512xf32>
      %15 = vector.broadcast %14 : vector<1x512xf32> to vector<2x512xf32>
      %16 = arith.mulf %13, %15 : vector<2x512xf32>
      %c0_13 = arith.constant 0 : index
      %c0_14 = arith.constant 0 : index
      %17 = vector.load %arg4[%c0_13, %c0_14] : memref<1x512xf32, #tpu.memory_space<vmem>>, vector<1x512xf32>
      %18 = vector.broadcast %17 : vector<1x512xf32> to vector<2x512xf32>
      %19 = arith.addf %16, %18 : vector<2x512xf32>
      %cst_15 = arith.constant 0.000000e+00 : f32
      %20 = vector.broadcast %cst_15 : f32 to vector<2x512xf32>
      %21 = arith.maximumf %19, %20 : vector<2x512xf32>
      %c0_16 = arith.constant 0 : index
      %c0_17 = arith.constant 0 : index
      %22 = vector.load %arg5[%c0_16, %c0_17] : memref<512x10xf32, #tpu.memory_space<vmem>>, vector<512x10xf32>
      %cst_18 = arith.constant dense<0.000000e+00> : vector<2x10xf32>
      %23 = tpu.matmul %21, %22, %cst_18 {dimension_numbers = #tpu.dot_dimension_numbers<[1], [0], [0], [1], [0, 0, 1, 1], [], []>} : vector<2x512xf32>, vector<512x10xf32>, vector<2x10xf32> -> vector<2x10xf32>
      %c0_19 = arith.constant 0 : index
      %c0_20 = arith.constant 0 : index
      %24 = vector.load %arg6[%c0_19, %c0_20] : memref<1x10xf32, #tpu.memory_space<vmem>>, vector<1x10xf32>
      %25 = vector.broadcast %24 : vector<1x10xf32> to vector<2x10xf32>
      %26 = arith.addf %23, %25 : vector<2x10xf32>
      %c0_21 = arith.constant 0 : index
      %c0_22 = arith.constant 0 : index
      %27 = vector.load %arg7[%c0_21, %c0_22] : memref<2x10xf32, #tpu.memory_space<vmem>>, vector<2x10xf32>
      tpu.vector_store %arg7[%c0_21, %c0_22], %26 {strides = array<i32>} : memref<2x10xf32, #tpu.memory_space<vmem>>, vector<2x10xf32>,
    } else {
    }
    return
  }
  func.func @transform_0(%arg0: i32) -> (i32, i32) {
    %c0_i32 = arith.constant 0 : i32
    %c0_i32_0 = arith.constant 0 : i32
    return %c0_i32, %arg0 : i32, i32
  }
  func.func @transform_1(%arg0: i32) -> (i32, i32) {
    %c0_i32 = arith.constant 0 : i32
    %c0_i32_0 = arith.constant 0 : i32
    return %arg0, %c0_i32 : i32, i32
  }
  func.func @transform_2(%arg0: i32) -> (i32, i32) {
    %c0_i32 = arith.constant 0 : i32
    %c0_i32_0 = arith.constant 0 : i32
    %c0_i32_1 = arith.constant 0 : i32
    return %c0_i32, %c0_i32_0 : i32, i32
  }
  func.func @transform_3(%arg0: i32) -> (i32, i32) {
    %c0_i32 = arith.constant 0 : i32
    %c0_i32_0 = arith.constant 0 : i32
    %c0_i32_1 = arith.constant 0 : i32
    return %c0_i32, %c0_i32_0 : i32, i32
  }
  func.func @transform_4(%arg0: i32) -> (i32, i32) {
    %c0_i32 = arith.constant 0 : i32
    %c0_i32_0 = arith.constant 0 : i32
    %c0_i32_1 = arith.constant 0 : i32
    return %c0_i32, %c0_i32_0 : i32, i32
  }
  func.func @transform_5(%arg0: i32) -> (i32, i32) {
    %c0_i32 = arith.constant 0 : i32
    %c0_i32_0 = arith.constant 0 : i32
    %c0_i32_1 = arith.constant 0 : i32
    return %c0_i32, %c0_i32_0 : i32, i32
  }
  func.func @transform_6(%arg0: i32) -> (i32, i32) {
    %c0_i32 = arith.constant 0 : i32
    %c0_i32_0 = arith.constant 0 : i32
    %c0_i32_1 = arith.constant 0 : i32
    return %c0_i32, %c0_i32_0 : i32, i32
  }
}

</mosaic_0001>

<llo_original>
// kernel: lstm_head_forward.1
$region0: #{lstm_head_forward.1}
  #allocation0 [shape = 'u32[]', space=smem, size = 0x4, offset = 0x4, fixed_abs, tag = 'smem constant byte address 0x4 - core index']
  #allocation1 [shape = 'u32[144,128]{1,0:T(1,128)}', space=vmem, size = 0x12000, scoped, tag = 'internal scratch']
  #allocation2 [shape = 'f32[2,512]{1,0:T(2,128)}', space=vmem, size = 0x1000, scoped, tag = 'scratch operand']
  %s0 = inlined_call_operand.vmem [shape: bf16[2,12288], index: 0, kind: input, shape index: {}]
  %s1 = inlined_call_operand.hbm [shape: s8[12288,512], index: 1, kind: input, shape index: {}]
  %s2 = inlined_call_operand.hbm [shape: f32[1,512], index: 2, kind: input, shape index: {}]
  %s3 = inlined_call_operand.hbm [shape: f32[1,512], index: 3, kind: input, shape index: {}]
  %s4 = inlined_call_operand.vmem [shape: f32[512,10], index: 4, kind: input, shape index: {}]
  %s5 = inlined_call_operand.hbm [shape: f32[1,10], index: 5, kind: input, shape index: {}]
  %s6 = inlined_call_operand.hbm [shape: f32[2,10], index: 6, kind: output, shape index: {}]
  %s7 = sld [smem:[#allocation0]]
  $region81: #{lstm_head_forward.1} parent=0
    _
  %s9 = ssub.s32 1, %s7
  %s10 = scalar_select 0, %s9, %s7
  $region1: #{lstm_head_forward.1} parent=0
    #allocation3 [shape = 'u8[6291456]{0}', space=vmem, size = 0x600000, scoped, tag = 'input window, operand 1']
    #allocation4 [shape = 's32[2]{0}', space=sflag, size = 0x8, scoped, tag = 'scoped memory for lstm_head_forward.1']
    #allocation5 [shape = 's32[2]{0}', space=sflag, size = 0x8, scoped, tag = 'scoped memory for lstm_head_forward.1']
    #allocation6 [shape = 'u8[2048]{0}', space=vmem, size = 0x800, scoped, tag = 'input window, operand 2, single buffered']
    #allocation7 [shape = 's32[1]{0}', space=sflag, size = 0x4, scoped, tag = 'scoped memory for lstm_head_forward.1']
    #allocation8 [shape = 'u8[2048]{0}', space=vmem, size = 0x800, scoped, tag = 'input window, operand 3, single buffered']
    #allocation9 [shape = 'u8[512]{0}', space=vmem, size = 0x400, scoped, tag = 'input window, operand 5, single buffered']
    #allocation10 [shape = 's32[1]{0}', space=sflag, size = 0x4, scoped, tag = 'scoped memory for lstm_head_forward.1']
    #allocation11 [shape = 'u8[1024]{0}', space=vmem, size = 0x400, scoped, tag = 'output window, operand 0, single buffered']
    %11 = vsyncpa [#allocation4], 0
    %s12 = scalar_lea.sflag [#allocation4], 1
    %13 = vsyncpa %s12, 0
    %14 = vsyncpa [#allocation7], 0
    %15 = vsyncpa [#allocation10], 0
    %16 = vsyncpa [#allocation5], 0
    loop: start=0, step=1, limit=4
    $region2: #{lstm_head_forward.1} parent=1 // loop_pre_header
      _
    $region3: #{lstm_head_forward.1} parent=1 // loop_header
      %s18 = sphi 0, %s22
      %p19 = scmp.ge.s32.totalorder %s18, 4
      %s28 = sphi 0, %s30
      %s31 = sphi 0, %s28
      %s32 = sphi 0, %s31
      %s48 = sphi 0, %s32
      %s54 = sphi 0, %s56
      %s57 = sphi 0, %s54
      %s58 = sphi 0, %s57
      %s74 = sphi 0, %s58
      %s78 = sphi 0, %s78
      %s80 = sphi 0, %s78
      %s81 = sphi 0, %s80
      %s95 = sphi 0, %s81
      %s99 = sphi 0, %s99
      %s101 = sphi 0, %s99
      %s102 = sphi 0, %s101
      %s116 = sphi 0, %s102
      %s120 = sphi 0, %s120
      %s122 = sphi 0, %s120
      %s123 = sphi 0, %s122
      %s137 = sphi 0, %s123
      %s141 = sphi 0, %s141
      %s143 = sphi 0, %s141
      %s144 = sphi 0, %s143
      %s158 = sphi 0, %s144
      %s162 = sphi 0, %s162
      %s164 = sphi 0, %s162
      %s165 = sphi 0, %s164
      %s179 = sphi 0, %s165
    $region4: #{lstm_head_forward.1} parent=1 // loop_header_branch
      %21 = sbr.rel (%p19) target = $region8
    $region5: #{lstm_head_forward.1} parent=1 // loop_body
      %s23 = ssub.s32 %s18, 1
      %s24 = ssub.s32 %s18, 2
      %s25 = sadd.s32 %s18, 1
      %s26 = ssub.s32 %s18, %s25
      %p27 = scmp.eq.s32.totalorder %s26, 0
      %s29 = sadd.s32 %s28, 1
      %s30 = scalar_select %p27, %s28, %s29
      %p33 = pneg %p27
      %p34 = scmp.eq.s32.totalorder %s18, 1
      %p35 = por %p33, %p34
      %p36 = scmp.ne.s32.totalorder %s28, %s31
      %p37 = scmp.eq.s32.totalorder %s18, 0
      %p38 = por %p36, %p37
      %p39 = scmp.ne.s32.totalorder %s28, %s31
      %p40 = scmp.eq.s32.totalorder %s23, 1
      %p41 = por %p39, %p40
      %p42 = scmp.ne.s32.totalorder %s31, %s32
      %p43 = scmp.eq.s32.totalorder %s23, 0
      %p44 = por %p42, %p43
      %p45 = scmp.ne.s32.totalorder %s31, %s32
      %p46 = scmp.eq.s32.totalorder %s24, 1
      %p47 = por %p45, %p46
      %p49 = scmp.ne.s32.totalorder %s32, %s48
      %p50 = scmp.eq.s32.totalorder %s24, 0
      %p51 = por %p49, %p50
      %s52 = ssub.s32 %s18, %s25
      %p53 = scmp.eq.s32.totalorder %s52, 0
      %s55 = sadd.s32 %s54, 1
      %s56 = scalar_select %p53, %s54, %s55
      %p59 = pneg %p53
      %p60 = scmp.eq.s32.totalorder %s18, 1
      %p61 = por %p59, %p60
      %p62 = scmp.ne.s32.totalorder %s54, %s57
      %p63 = scmp.eq.s32.totalorder %s18, 0
      %p64 = por %p62, %p63
      %p65 = scmp.ne.s32.totalorder %s54, %s57
      %p66 = scmp.eq.s32.totalorder %s23, 1
      %p67 = por %p65, %p66
      %p68 = scmp.ne.s32.totalorder %s57, %s58
      %p69 = scmp.eq.s32.totalorder %s23, 0
      %p70 = por %p68, %p69
      %p71 = scmp.ne.s32.totalorder %s57, %s58
      %p72 = scmp.eq.s32.totalorder %s24, 1
      %p73 = por %p71, %p72
      %p75 = scmp.ne.s32.totalorder %s58, %s74
      %p76 = scmp.eq.s32.totalorder %s24, 0
      %p77 = por %p75, %p76
      %s79 = sadd.s32 %s78, 1
      %p82 = scmp.eq.s32.totalorder %s18, 1
      %p83 = scmp.ne.s32.totalorder %s78, %s80
      %p84 = scmp.eq.s32.totalorder %s18, 0
      %p85 = por %p83, %p84
      %p86 = scmp.ne.s32.totalorder %s78, %s80
      %p87 = scmp.eq.s32.totalorder %s23, 1
      %p88 = por %p86, %p87
      %p89 = scmp.ne.s32.totalorder %s80, %s81
      %p90 = scmp.eq.s32.totalorder %s23, 0
      %p91 = por %p89, %p90
      %p92 = scmp.ne.s32.totalorder %s80, %s81
      %p93 = scmp.eq.s32.totalorder %s24, 1
      %p94 = por %p92, %p93
      %p96 = scmp.ne.s32.totalorder %s81, %s95
      %p97 = scmp.eq.s32.totalorder %s24, 0
      %p98 = por %p96, %p97
      %s100 = sadd.s32 %s99, 1
      %p103 = scmp.eq.s32.totalorder %s18, 1
      %p104 = scmp.ne.s32.totalorder %s99, %s101
      %p105 = scmp.eq.s32.totalorder %s18, 0
      %p106 = por %p104, %p105
      %p107 = scmp.ne.s32.totalorder %s99, %s101
      %p108 = scmp.eq.s32.totalorder %s23, 1
      %p109 = por %p107, %p108
      %p110 = scmp.ne.s32.totalorder %s101, %s102
      %p111 = scmp.eq.s32.totalorder %s23, 0
      %p112 = por %p110, %p111
      %p113 = scmp.ne.s32.totalorder %s101, %s102
      %p114 = scmp.eq.s32.totalorder %s24, 1
      %p115 = por %p113, %p114
      %p117 = scmp.ne.s32.totalorder %s102, %s116
      %p118 = scmp.eq.s32.totalorder %s24, 0
      %p119 = por %p117, %p118
      %s121 = sadd.s32 %s120, 1
      %p124 = scmp.eq.s32.totalorder %s18, 1
      %p125 = scmp.ne.s32.totalorder %s120, %s122
      %p126 = scmp.eq.s32.totalorder %s18, 0
      %p127 = por %p125, %p126
      %p128 = scmp.ne.s32.totalorder %s120, %s122
      %p129 = scmp.eq.s32.totalorder %s23, 1
      %p130 = por %p128, %p129
      %p131 = scmp.ne.s32.totalorder %s122, %s123
      %p132 = scmp.eq.s32.totalorder %s23, 0
      %p133 = por %p131, %p132
      %p134 = scmp.ne.s32.totalorder %s122, %s123
      %p135 = scmp.eq.s32.totalorder %s24, 1
      %p136 = por %p134, %p135
      %p138 = scmp.ne.s32.totalorder %s123, %s137
      %p139 = scmp.eq.s32.totalorder %s24, 0
      %p140 = por %p138, %p139
      %s142 = sadd.s32 %s141, 1
      %p145 = scmp.eq.s32.totalorder %s18, 1
      %p146 = scmp.ne.s32.totalorder %s141, %s143
      %p147 = scmp.eq.s32.totalorder %s18, 0
      %p148 = por %p146, %p147
      %p149 = scmp.ne.s32.totalorder %s141, %s143
      %p150 = scmp.eq.s32.totalorder %s23, 1
      %p151 = por %p149, %p150
      %p152 = scmp.ne.s32.totalorder %s143, %s144
      %p153 = scmp.eq.s32.totalorder %s23, 0
      %p154 = por %p152, %p153
      %p155 = scmp.ne.s32.totalorder %s143, %s144
      %p156 = scmp.eq.s32.totalorder %s24, 1
      %p157 = por %p155, %p156
      %p159 = scmp.ne.s32.totalorder %s144, %s158
      %p160 = scmp.eq.s32.totalorder %s24, 0
      %p161 = por %p159, %p160
      %s163 = sadd.s32 %s162, 1
      %p166 = scmp.eq.s32.totalorder %s18, 1
      %p167 = scmp.ne.s32.totalorder %s162, %s164
      %p168 = scmp.eq.s32.totalorder %s18, 0
      %p169 = por %p167, %p168
      %p170 = scmp.ne.s32.totalorder %s162, %s164
      %p171 = scmp.eq.s32.totalorder %s23, 1
      %p172 = por %p170, %p171
      %p173 = scmp.ne.s32.totalorder %s164, %s165
      %p174 = scmp.eq.s32.totalorder %s23, 0
      %p175 = por %p173, %p174
      %p176 = scmp.ne.s32.totalorder %s164, %s165
      %p177 = scmp.eq.s32.totalorder %s24, 1
      %p178 = por %p176, %p177
      %p180 = scmp.ne.s32.totalorder %s165, %s179
      %p181 = scmp.eq.s32.totalorder %s24, 0
      %p182 = por %p180, %p181
      %p183 = scmp.le.s32.totalorder 1, %s18
      %p184 = scmp.lt.s32.totalorder %s18, 3
      %p185 = pnand %p183, %p184
      %p186 = pneg %p185
      // Predicated region
      $region9: #{lstm_head_forward.1} parent=5 // pred_check
        _
      $region10: #{lstm_head_forward.1} parent=5 // pred_check_branch
        %188 = sbr.rel (%p185) target = $region12
      $region11: #{lstm_head_forward.1} parent=5 // pred_region
        %s189 = ssub.s32 %s18, 1
        // Predicated region
        $region13: #{lstm_head_forward.1} parent=11 // pred_check
          %p190 = pneg %p91
        $region14: #{lstm_head_forward.1} parent=11 // pred_check_branch
          %192 = sbr.rel (%p190) target = $region16
        $region15: #{lstm_head_forward.1} parent=11 // pred_region
          %s194 = ssub.s32 64, 64
          %195 = vsyncadd [#allocation7], %s194
          %s197 = sshll.u32 [#allocation6], 4
          %s198 = int_to_ptr.vmem [resolvable:$true] %s197
          %200 = dma.hbm_to_vmem [thread:$0]  %s2, 64, %s198, [#allocation7]
        $region16: #{lstm_head_forward.1} parent=11 // pred_fallthru
          _
        // Predicated region
        $region17: #{lstm_head_forward.1} parent=11 // pred_check
          %p201 = pneg %p112
        $region18: #{lstm_head_forward.1} parent=11 // pred_check_branch
          %203 = sbr.rel (%p201) target = $region20
        $region19: #{lstm_head_forward.1} parent=11 // pred_region
          %s205 = ssub.s32 64, 64
          %206 = vsyncadd [#allocation7], %s205
          %s208 = sshll.u32 [#allocation8], 4
          %s209 = int_to_ptr.vmem [resolvable:$true] %s208
          %211 = dma.hbm_to_vmem [thread:$0]  %s3, 64, %s209, [#allocation7]
        $region20: #{lstm_head_forward.1} parent=11 // pred_fallthru
          _
        // Predicated region
        $region21: #{lstm_head_forward.1} parent=11 // pred_check
          %p212 = pneg %p133
        $region22: #{lstm_head_forward.1} parent=11 // pred_check_branch
          %214 = sbr.rel (%p212) target = $region24
        $region23: #{lstm_head_forward.1} parent=11 // pred_region
          _
        $region24: #{lstm_head_forward.1} parent=11 // pred_fallthru
          _
        // Predicated region
        $region25: #{lstm_head_forward.1} parent=11 // pred_check
          %p215 = pneg %p154
        $region26: #{lstm_head_forward.1} parent=11 // pred_check_branch
          %217 = sbr.rel (%p215) target = $region28
        $region27: #{lstm_head_forward.1} parent=11 // pred_region
          %s219 = ssub.s32 16, 16
          %220 = vsyncadd [#allocation10], %s219
          %s222 = sshll.u32 [#allocation9], 4
          %s223 = int_to_ptr.vmem [resolvable:$true] %s222
          %225 = dma.hbm_to_vmem [thread:$0]  %s5, 16, %s223, [#allocation10]
        $region28: #{lstm_head_forward.1} parent=11 // pred_fallthru
          _
      $region12: #{lstm_head_forward.1} parent=5 // pred_fallthru
        _
      %p226 = scmp.lt.s32.totalorder %s18, 2
      // Predicated region
      $region29: #{lstm_head_forward.1} parent=5 // pred_check
        %p227 = pneg %p226
      $region30: #{lstm_head_forward.1} parent=5 // pred_check_branch
        %229 = sbr.rel (%p227) target = $region32
      $region31: #{lstm_head_forward.1} parent=5 // pred_region
        // Predicated region
        $region33: #{lstm_head_forward.1} parent=31 // pred_check
          %p230 = pneg %p38
        $region34: #{lstm_head_forward.1} parent=31 // pred_check_branch
          %232 = sbr.rel (%p230) target = $region36
        $region35: #{lstm_head_forward.1} parent=31 // pred_region
          %s233 = smul.u32 48, %s18
          %p234 = scmp.lt.s32.totalorder %s233, 95
          %s235 = scalar_select %p234, %s233, 95
          %s236 = scalar_lea.vmem %s0, %s235
          %s237 = smul.u32 48, %s18
        $region36: #{lstm_head_forward.1} parent=31 // pred_fallthru
          _
        // Predicated region
        $region37: #{lstm_head_forward.1} parent=31 // pred_check
          %p238 = pneg %p64
        $region38: #{lstm_head_forward.1} parent=31 // pred_check_branch
          %240 = sbr.rel (%p238) target = $region40
        $region39: #{lstm_head_forward.1} parent=31 // pred_region
          %s241 = sand.u32 %s54, 1
          %s242 = scalar_lea.sflag [#allocation4], %s241
          %s243 = sand.u32 %s54, 1
          %s244 = smul.addr %s243, 6144
          %s245 = scalar_lea.vmem [#allocation3], %s244
          %s246 = smul.u32 192, %s18
          %s248 = ssub.s32 98304, 98304
          %249 = vsyncadd %s242, %s248
          %s250 = smul.addr %s246, 4
          %s251 = smul.addr %s250, 128
          %s252 = scalar_lea.hbm %s1, %s251
          %s253 = sshll.u32 %s245, 4
          %s254 = int_to_ptr.vmem [resolvable:$true] %s253
          %259 = dma.hbm_to_vmem [thread:$0]  %s252, 98304, %s254, %s242, 512, 512, 32
        $region40: #{lstm_head_forward.1} parent=31 // pred_fallthru
          _
      $region32: #{lstm_head_forward.1} parent=5 // pred_fallthru
        _
      %p260 = scmp.le.s32.totalorder 1, %s18
      %p261 = scmp.lt.s32.totalorder %s18, 3
      %p262 = pnand %p260, %p261
      %p263 = pneg %p262
      // Predicated region
      $region41: #{lstm_head_forward.1} parent=5 // pred_check
        _
      $region42: #{lstm_head_forward.1} parent=5 // pred_check_branch
        %265 = sbr.rel (%p262) target = $region44
      $region43: #{lstm_head_forward.1} parent=5 // pred_region
        %s266 = ssub.s32 %s18, 1
        %s267 = sand.u32 %s57, 1
        %s268 = scalar_lea.sflag [#allocation4], %s267
        %s269 = sand.u32 %s57, 1
        %s270 = smul.addr %s269, 6144
        %s271 = scalar_lea.vmem [#allocation3], %s270
        // Predicated region
        $region45: #{lstm_head_forward.1} parent=43 // pred_check
          %p272 = pneg %p70
        $region46: #{lstm_head_forward.1} parent=43 // pred_check_branch
          %274 = sbr.rel (%p272) target = $region48
        $region47: #{lstm_head_forward.1} parent=43 // pred_region
          %275 = dma.done %s268, 98304
        $region48: #{lstm_head_forward.1} parent=43 // pred_fallthru
          _
        // Predicated region
        $region49: #{lstm_head_forward.1} parent=43 // pred_check
          %p276 = pneg %p91
        $region50: #{lstm_head_forward.1} parent=43 // pred_check_branch
          %278 = sbr.rel (%p276) target = $region52
        $region51: #{lstm_head_forward.1} parent=43 // pred_region
          %279 = dma.done [#allocation7], 64
        $region52: #{lstm_head_forward.1} parent=43 // pred_fallthru
          _
        // Predicated region
        $region53: #{lstm_head_forward.1} parent=43 // pred_check
          %p280 = pneg %p112
        $region54: #{lstm_head_forward.1} parent=43 // pred_check_branch
          %282 = sbr.rel (%p280) target = $region56
        $region55: #{lstm_head_forward.1} parent=43 // pred_region
          %283 = dma.done [#allocation7], 64
        $region56: #{lstm_head_forward.1} parent=43 // pred_fallthru
          _
        // Predicated region
        $region57: #{lstm_head_forward.1} parent=43 // pred_check
          %p284 = pneg %p154
        $region58: #{lstm_head_forward.1} parent=43 // pred_check_branch
          %286 = sbr.rel (%p284) target = $region60
        $region59: #{lstm_head_forward.1} parent=43 // pred_region
          %287 = dma.done [#allocation10], 16
        $region60: #{lstm_head_forward.1} parent=43 // pred_fallthru
          _
        %s288 = smul.u32 48, %s23
        %p289 = scmp.lt.s32.totalorder %s288, 95
        %s290 = scalar_select %p289, %s288, 95
        %s291 = scalar_lea.vmem %s0, %s290
        %p292 = pneg %p44
        %p293 = pneg %p41
        %s294 = sand.u32 %s57, 1
        %s295 = scalar_lea.sflag [#allocation4], %s294
        %s296 = sand.u32 %s57, 1
        %s297 = smul.addr %s296, 6144
        %s298 = scalar_lea.vmem [#allocation3], %s297
        %p299 = pneg %p70
        %p300 = pneg %p67
        %p301 = pneg %p91
        %p302 = pneg %p88
        %p303 = pneg %p112
        %p304 = pneg %p109
        %p305 = pneg %p133
        %p306 = pneg %p130
        %p307 = pneg %p154
        %p308 = pneg %p151
        %p309 = pneg %p175
        %p310 = pneg %p172
        %s311 = smul.u32 48, %s23
        %p312 = scmp.lt.s32.totalorder %s311, 95
        %s313 = scalar_select %p312, %s311, 95
        %s314 = scalar_lea.vmem %s0, %s313
        %s315 = smul.u32 48, %s23
        %s316 = smul.u32 192, %s23
        %p317 = scmp.eq.s32.totalorder %s23, 0
        // Predicated region
        $region61: #{lstm_head_forward.1} parent=43 // pred_check
          %p318 = pneg %p317
        $region62: #{lstm_head_forward.1} parent=43 // pred_check_branch
          %320 = sbr.rel (%p318) target = $region64
        $region63: #{lstm_head_forward.1} parent=43 // pred_region
          %321 = vst [vmem:[#allocation2] sm:$0xff] 0.0
        $region64: #{lstm_head_forward.1} parent=43 // pred_fallthru
          _
        %v322 = vld [vmem:[%s271] sm:$0xff]
        %v323 = vld [vmem:[%s271 + $0x8] sm:$0xff]
        %v324 = vld [vmem:[%s271 + $0x10] sm:$0xff]
        %v325 = vld [vmem:[%s271 + $0x18] sm:$0xff]
        %v326 = vld [vmem:[%s271 + $0x20] sm:$0xff]
        %v327 = vld [vmem:[%s271 + $0x28] sm:$0xff]
        %v328 = vld [vmem:[%s271 + $0x30] sm:$0xff]
        %v329 = vld [vmem:[%s271 + $0x38] sm:$0xff]
        %v330 = vld [vmem:[%s271 + $0x40] sm:$0xff]
        %v331 = vld [vmem:[%s271 + $0x48] sm:$0xff]
        %v332 = vld [vmem:[%s271 + $0x50] sm:$0xff]
        %v333 = vld [vmem:[%s271 + $0x58] sm:$0xff]
        %v334 = vld [vmem:[%s271 + $0x60] sm:$0xff]
        %v335 = vld [vmem:[%s271 + $0x68] sm:$0xff]
        %v336 = vld [vmem:[%s271 + $0x70] sm:$0xff]
        %v337 = vld [vmem:[%s271 + $0x78] sm:$0xff]
        %v338 = vld [vmem:[%s271 + $0x80] sm:$0xff]
        %v339 = vld [vmem:[%s271 + $0x88] sm:$0xff]
        %v340 = vld [vmem:[%s271 + $0x90] sm:$0xff]
        %v341 = vld [vmem:[%s271 + $0x98] sm:$0xff]
        %v342 = vld [vmem:[%s271 + $0xa0] sm:$0xff]
        %v343 = vld [vmem:[%s271 + $0xa8] sm:$0xff]
        %v344 = vld [vmem:[%s271 + $0xb0] sm:$0xff]
        %v345 = vld [vmem:[%s271 + $0xb8] sm:$0xff]
        %v346 = vld [vmem:[%s271 + $0xc0] sm:$0xff]
        %v347 = vld [vmem:[%s271 + $0xc8] sm:$0xff]
        %v348 = vld [vmem:[%s271 + $0xd0] sm:$0xff]
        %v349 = vld [vmem:[%s271 + $0xd8] sm:$0xff]
        %v350 = vld [vmem:[%s271 + $0xe0] sm:$0xff]
        %v351 = vld [vmem:[%s271 + $0xe8] sm:$0xff]
        %v352 = vld [vmem:[%s271 + $0xf0] sm:$0xff]
        %v353 = vld [vmem:[%s271 + $0xf8] sm:$0xff]
        %v354 = vld [vmem:[%s271 + $0x100] sm:$0xff]
        %v355 = vld [vmem:[%s271 + $0x108] sm:$0xff]
        %v356 = vld [vmem:[%s271 + $0x110] sm:$0xff]
        %v357 = vld [vmem:[%s271 + $0x118] sm:$0xff]
        %v358 = vld [vmem:[%s271 + $0x120] sm:$0xff]
        %v359 = vld [vmem:[%s271 + $0x128] sm:$0xff]
        %v360 = vld [vmem:[%s271 + $0x130] sm:$0xff]
        %v361 = vld [vmem:[%s271 + $0x138] sm:$0xff]
        %v362 = vld [vmem:[%s271 + $0x140] sm:$0xff]
        %v363 = vld [vmem:[%s271 + $0x148] sm:$0xff]
        %v364 = vld [vmem:[%s271 + $0x150] sm:$0xff]
        %v365 = vld [vmem:[%s271 + $0x158] sm:$0xff]
        %v366 = vld [vmem:[%s271 + $0x160] sm:$0xff]
        %v367 = vld [vmem:[%s271 + $0x168] sm:$0xff]
        %v368 = vld [vmem:[%s271 + $0x170] sm:$0xff]
        %v369 = vld [vmem:[%s271 + $0x178] sm:$0xff]
        %v370 = vld [vmem:[%s271 + $0x180] sm:$0xff]
        %v371 = vld [vmem:[%s271 + $0x188] sm:$0xff]
        %v372 = vld [vmem:[%s271 + $0x190] sm:$0xff]
        %v373 = vld [vmem:[%s271 + $0x198] sm:$0xff]
        %v374 = vld [vmem:[%s271 + $0x1a0] sm:$0xff]
        %v375 = vld [vmem:[%s271 + $0x1a8] sm:$0xff]
        %v376 = vld [vmem:[%s271 + $0x1b0] sm:$0xff]
        %v377 = vld [vmem:[%s271 + $0x1b8] sm:$0xff]
        %v378 = vld [vmem:[%s271 + $0x1c0] sm:$0xff]
        %v379 = vld [vmem:[%s271 + $0x1c8] sm:$0xff]
        %v380 = vld [vmem:[%s271 + $0x1d0] sm:$0xff]
        %v381 = vld [vmem:[%s271 + $0x1d8] sm:$0xff]
        %v382 = vld [vmem:[%s271 + $0x1e0] sm:$0xff]
        %v383 = vld [vmem:[%s271 + $0x1e8] sm:$0xff]
        %v384 = vld [vmem:[%s271 + $0x1f0] sm:$0xff]
        %v385 = vld [vmem:[%s271 + $0x1f8] sm:$0xff]
        %v386 = vld [vmem:[%s271 + $0x200] sm:$0xff]
        %v387 = vld [vmem:[%s271 + $0x208] sm:$0xff]
        %v388 = vld [vmem:[%s271 + $0x210] sm:$0xff]
        %v389 = vld [vmem:[%s271 + $0x218] sm:$0xff]
        %v390 = vld [vmem:[%s271 + $0x220] sm:$0xff]
        %v391 = vld [vmem:[%s271 + $0x228] sm:$0xff]
        %v392 = vld [vmem:[%s271 + $0x230] sm:$0xff]
        %v393 = vld [vmem:[%s271 + $0x238] sm:$0xff]
        %v394 = vld [vmem:[%s271 + $0x240] sm:$0xff]
        %v395 = vld [vmem:[%s271 + $0x248] sm:$0xff]
        %v396 = vld [vmem:[%s271 + $0x250] sm:$0xff]
        %v397 = vld [vmem:[%s271 + $0x258] sm:$0xff]
        %v398 = vld [vmem:[%s271 + $0x260] sm:$0xff]
        %v399 = vld [vmem:[%s271 + $0x268] sm:$0xff]
        %v400 = vld [vmem:[%s271 + $0x270] sm:$0xff]
        %v401 = vld [vmem:[%s271 + $0x278] sm:$0xff]
        %v402 = vld [vmem:[%s271 + $0x280] sm:$0xff]
        %v403 = vld [vmem:[%s271 + $0x288] sm:$0xff]
        %v404 = vld [vmem:[%s271 + $0x290] sm:$0xff]
        %v405 = vld [vmem:[%s271 + $0x298] sm:$0xff]
        %v406 = vld [vmem:[%s271 + $0x2a0] sm:$0xff]
        %v407 = vld [vmem:[%s271 + $0x2a8] sm:$0xff]
        %v408 = vld [vmem:[%s271 + $0x2b0] sm:$0xff]
        %v409 = vld [vmem:[%s271 + $0x2b8] sm:$0xff]
        %v410 = vld [vmem:[%s271 + $0x2c0] sm:$0xff]
        %v411 = vld [vmem:[%s271 + $0x2c8] sm:$0xff]
        %v412 = vld [vmem:[%s271 + $0x2d0] sm:$0xff]
        %v413 = vld [vmem:[%s271 + $0x2d8] sm:$0xff]
        %v414 = vld [vmem:[%s271 + $0x2e0] sm:$0xff]
        %v415 = vld [vmem:[%s271 + $0x2e8] sm:$0xff]
        %v416 = vld [vmem:[%s271 + $0x2f0] sm:$0xff]
        %v417 = vld [vmem:[%s271 + $0x2f8] sm:$0xff]
        %v418 = vld [vmem:[%s271 + $0x300] sm:$0xff]
        %v419 = vld [vmem:[%s271 + $0x308] sm:$0xff]
        %v420 = vld [vmem:[%s271 + $0x310] sm:$0xff]
        %v421 = vld [vmem:[%s271 + $0x318] sm:$0xff]
        %v422 = vld [vmem:[%s271 + $0x320] sm:$0xff]
        %v423 = vld [vmem:[%s271 + $0x328] sm:$0xff]
        %v424 = vld [vmem:[%s271 + $0x330] sm:$0xff]
        %v425 = vld [vmem:[%s271 + $0x338] sm:$0xff]
        %v426 = vld [vmem:[%s271 + $0x340] sm:$0xff]
        %v427 = vld [vmem:[%s271 + $0x348] sm:$0xff]
        %v428 = vld [vmem:[%s271 + $0x350] sm:$0xff]
        %v429 = vld [vmem:[%s271 + $0x358] sm:$0xff]
        %v430 = vld [vmem:[%s271 + $0x360] sm:$0xff]
        %v431 = vld [vmem:[%s271 + $0x368] sm:$0xff]
        %v432 = vld [vmem:[%s271 + $0x370] sm:$0xff]
        %v433 = vld [vmem:[%s271 + $0x378] sm:$0xff]
        %v434 = vld [vmem:[%s271 + $0x380] sm:$0xff]
        %v435 = vld [vmem:[%s271 + $0x388] sm:$0xff]
        %v436 = vld [vmem:[%s271 + $0x390] sm:$0xff]
        %v437 = vld [vmem:[%s271 + $0x398] sm:$0xff]
        %v438 = vld [vmem:[%s271 + $0x3a0] sm:$0xff]
        %v439 = vld [vmem:[%s271 + $0x3a8] sm:$0xff]
        %v440 = vld [vmem:[%s271 + $0x3b0] sm:$0xff]
        %v441 = vld [vmem:[%s271 + $0x3b8] sm:$0xff]
        %v442 = vld [vmem:[%s271 + $0x3c0] sm:$0xff]
        %v443 = vld [vmem:[%s271 + $0x3c8] sm:$0xff]
        %v444 = vld [vmem:[%s271 + $0x3d0] sm:$0xff]
        %v445 = vld [vmem:[%s271 + $0x3d8] sm:$0xff]
        %v446 = vld [vmem:[%s271 + $0x3e0] sm:$0xff]
        %v447 = vld [vmem:[%s271 + $0x3e8] sm:$0xff]
        %v448 = vld [vmem:[%s271 + $0x3f0] sm:$0xff]
        %v449 = vld [vmem:[%s271 + $0x3f8] sm:$0xff]
        %v450 = vld [vmem:[%s271 + $0x400] sm:$0xff]
        %v451 = vld [vmem:[%s271 + $0x408] sm:$0xff]
        %v452 = vld [vmem:[%s271 + $0x410] sm:$0xff]
        %v453 = vld [vmem:[%s271 + $0x418] sm:$0xff]
        %v454 = vld [vmem:[%s271 + $0x420] sm:$0xff]
        %v455 = vld [vmem:[%s271 + $0x428] sm:$0xff]
        %v456 = vld [vmem:[%s271 + $0x430] sm:$0xff]
        %v457 = vld [vmem:[%s271 + $0x438] sm:$0xff]
        %v458 = vld [vmem:[%s271 + $0x440] sm:$0xff]
        %v459 = vld [vmem:[%s271 + $0x448] sm:$0xff]
        %v460 = vld [vmem:[%s271 + $0x450] sm:$0xff]
        %v461 = vld [vmem:[%s271 + $0x458] sm:$0xff]
        %v462 = vld [vmem:[%s271 + $0x460] sm:$0xff]
        %v463 = vld [vmem:[%s271 + $0x468] sm:$0xff]
        %v464 = vld [vmem:[%s271 + $0x470] sm:$0xff]
        %v465 = vld [vmem:[%s271 + $0x478] sm:$0xff]
        %v466 = vld [vmem:[%s271 + $0x480] sm:$0xff]
        %v467 = vld [vmem:[%s271 + $0x488] sm:$0xff]
        %v468 = vld [vmem:[%s271 + $0x490] sm:$0xff]
        %v469 = vld [vmem:[%s271 + $0x498] sm:$0xff]
        %v470 = vld [vmem:[%s271 + $0x4a0] sm:$0xff]
        %v471 = vld [vmem:[%s271 + $0x4a8] sm:$0xff]
        %v472 = vld [vmem:[%s271 + $0x4b0] sm:$0xff]
        %v473 = vld [vmem:[%s271 + $0x4b8] sm:$0xff]
        %v474 = vld [vmem:[%s271 + $0x4c0] sm:$0xff]
        %v475 = vld [vmem:[%s271 + $0x4c8] sm:$0xff]
        %v476 = vld [vmem:[%s271 + $0x4d0] sm:$0xff]
        %v477 = vld [vmem:[%s271 + $0x4d8] sm:$0xff]
        %v478 = vld [vmem:[%s271 + $0x4e0] sm:$0xff]
        %v479 = vld [vmem:[%s271 + $0x4e8] sm:$0xff]
        %v480 = vld [vmem:[%s271 + $0x4f0] sm:$0xff]
        %v481 = vld [vmem:[%s271 + $0x4f8] sm:$0xff]
        %v482 = vld [vmem:[%s271 + $0x500] sm:$0xff]
        %v483 = vld [vmem:[%s271 + $0x508] sm:$0xff]
        %v484 = vld [vmem:[%s271 + $0x510] sm:$0xff]
        %v485 = vld [vmem:[%s271 + $0x518] sm:$0xff]
        %v486 = vld [vmem:[%s271 + $0x520] sm:$0xff]
        %v487 = vld [vmem:[%s271 + $0x528] sm:$0xff]
        %v488 = vld [vmem:[%s271 + $0x530] sm:$0xff]
        %v489 = vld [vmem:[%s271 + $0x538] sm:$0xff]
        %v490 = vld [vmem:[%s271 + $0x540] sm:$0xff]
        %v491 = vld [vmem:[%s271 + $0x548] sm:$0xff]
        %v492 = vld [vmem:[%s271 + $0x550] sm:$0xff]
        %v493 = vld [vmem:[%s271 + $0x558] sm:$0xff]
        %v494 = vld [vmem:[%s271 + $0x560] sm:$0xff]
        %v495 = vld [vmem:[%s271 + $0x568] sm:$0xff]
        %v496 = vld [vmem:[%s271 + $0x570] sm:$0xff]
        %v497 = vld [vmem:[%s271 + $0x578] sm:$0xff]
        %v498 = vld [vmem:[%s271 + $0x580] sm:$0xff]
        %v499 = vld [vmem:[%s271 + $0x588] sm:$0xff]
        %v500 = vld [vmem:[%s271 + $0x590] sm:$0xff]
        %v501 = vld [vmem:[%s271 + $0x598] sm:$0xff]
        %v502 = vld [vmem:[%s271 + $0x5a0] sm:$0xff]
        %v503 = vld [vmem:[%s271 + $0x5a8] sm:$0xff]
        %v504 = vld [vmem:[%s271 + $0x5b0] sm:$0xff]
        %v505 = vld [vmem:[%s271 + $0x5b8] sm:$0xff]
        %v506 = vld [vmem:[%s271 + $0x5c0] sm:$0xff]
        %v507 = vld [vmem:[%s271 + $0x5c8] sm:$0xff]
        %v508 = vld [vmem:[%s271 + $0x5d0] sm:$0xff]
        %v509 = vld [vmem:[%s271 + $0x5d8] sm:$0xff]
        %v510 = vld [vmem:[%s271 + $0x5e0] sm:$0xff]
        %v511 = vld [vmem:[%s271 + $0x5e8] sm:$0xff]
        %v512 = vld [vmem:[%s271 + $0x5f0] sm:$0xff]
        %v513 = vld [vmem:[%s271 + $0x5f8] sm:$0xff]
        %v514 = vld [vmem:[%s271 + $0x600] sm:$0xff]
        %v515 = vld [vmem:[%s271 + $0x608] sm:$0xff]
        %v516 = vld [vmem:[%s271 + $0x610] sm:$0xff]
        %v517 = vld [vmem:[%s271 + $0x618] sm:$0xff]
        %v518 = vld [vmem:[%s271 + $0x620] sm:$0xff]
        %v519 = vld [vmem:[%s271 + $0x628] sm:$0xff]
        %v520 = vld [vmem:[%s271 + $0x630] sm:$0xff]
        %v521 = vld [vmem:[%s271 + $0x638] sm:$0xff]
        %v522 = vld [vmem:[%s271 + $0x640] sm:$0xff]
        %v523 = vld [vmem:[%s271 + $0x648] sm:$0xff]
        %v524 = vld [vmem:[%s271 + $0x650] sm:$0xff]
        %v525 = vld [vmem:[%s271 + $0x658] sm:$0xff]
        %v526 = vld [vmem:[%s271 + $0x660] sm:$0xff]
        %v527 = vld [vmem:[%s271 + $0x668] sm:$0xff]
        %v528 = vld [vmem:[%s271 + $0x670] sm:$0xff]
        %v529 = vld [vmem:[%s271 + $0x678] sm:$0xff]
        %v530 = vld [vmem:[%s271 + $0x680] sm:$0xff]
        %v531 = vld [vmem:[%s271 + $0x688] sm:$0xff]
        %v532 = vld [vmem:[%s271 + $0x690] sm:$0xff]
        %v533 = vld [vmem:[%s271 + $0x698] sm:$0xff]
        %v534 = vld [vmem:[%s271 + $0x6a0] sm:$0xff]
        %v535 = vld [vmem:[%s271 + $0x6a8] sm:$0xff]
        %v536 = vld [vmem:[%s271 + $0x6b0] sm:$0xff]
        %v537 = vld [vmem:[%s271 + $0x6b8] sm:$0xff]
        %v538 = vld [vmem:[%s271 + $0x6c0] sm:$0xff]
        %v539 = vld [vmem:[%s271 + $0x6c8] sm:$0xff]
        %v540 = vld [vmem:[%s271 + $0x6d0] sm:$0xff]
        %v541 = vld [vmem:[%s271 + $0x6d8] sm:$0xff]
        %v542 = vld [vmem:[%s271 + $0x6e0] sm:$0xff]
        %v543 = vld [vmem:[%s271 + $0x6e8] sm:$0xff]
        %v544 = vld [vmem:[%s271 + $0x6f0] sm:$0xff]
        %v545 = vld [vmem:[%s271 + $0x6f8] sm:$0xff]
        %v546 = vld [vmem:[%s271 + $0x700] sm:$0xff]
        %v547 = vld [vmem:[%s271 + $0x708] sm:$0xff]
        %v548 = vld [vmem:[%s271 + $0x710] sm:$0xff]
        %v549 = vld [vmem:[%s271 + $0x718] sm:$0xff]
        %v550 = vld [vmem:[%s271 + $0x720] sm:$0xff]
        %v551 = vld [vmem:[%s271 + $0x728] sm:$0xff]
        %v552 = vld [vmem:[%s271 + $0x730] sm:$0xff]
        %v553 = vld [vmem:[%s271 + $0x738] sm:$0xff]
        %v554 = vld [vmem:[%s271 + $0x740] sm:$0xff]
        %v555 = vld [vmem:[%s271 + $0x748] sm:$0xff]
        %v556 = vld [vmem:[%s271 + $0x750] sm:$0xff]
        %v557 = vld [vmem:[%s271 + $0x758] sm:$0xff]
        %v558 = vld [vmem:[%s271 + $0x760] sm:$0xff]
        %v559 = vld [vmem:[%s271 + $0x768] sm:$0xff]
        %v560 = vld [vmem:[%s271 + $0x770] sm:$0xff]
        %v561 = vld [vmem:[%s271 + $0x778] sm:$0xff]
        %v562 = vld [vmem:[%s271 + $0x780] sm:$0xff]
        %v563 = vld [vmem:[%s271 + $0x788] sm:$0xff]
        %v564 = vld [vmem:[%s271 + $0x790] sm:$0xff]
        %v565 = vld [vmem:[%s271 + $0x798] sm:$0xff]
        %v566 = vld [vmem:[%s271 + $0x7a0] sm:$0xff]
        %v567 = vld [vmem:[%s271 + $0x7a8] sm:$0xff]
        %v568 = vld [vmem:[%s271 + $0x7b0] sm:$0xff]
        %v569 = vld [vmem:[%s271 + $0x7b8] sm:$0xff]
        %v570 = vld [vmem:[%s271 + $0x7c0] sm:$0xff]
        %v571 = vld [vmem:[%s271 + $0x7c8] sm:$0xff]
        %v572 = vld [vmem:[%s271 + $0x7d0] sm:$0xff]
        %v573 = vld [vmem:[%s271 + $0x7d8] sm:$0xff]
        %v574 = vld [vmem:[%s271 + $0x7e0] sm:$0xff]
        %v575 = vld [vmem:[%s271 + $0x7e8] sm:$0xff]
        %v576 = vld [vmem:[%s271 + $0x7f0] sm:$0xff]
        %v577 = vld [vmem:[%s271 + $0x7f8] sm:$0xff]
        %v578 = vld [vmem:[%s271 + $0x800] sm:$0xff]
        %v579 = vld [vmem:[%s271 + $0x808] sm:$0xff]
        %v580 = vld [vmem:[%s271 + $0x810] sm:$0xff]
        %v581 = vld [vmem:[%s271 + $0x818] sm:$0xff]
        %v582 = vld [vmem:[%s271 + $0x820] sm:$0xff]
        %v583 = vld [vmem:[%s271 + $0x828] sm:$0xff]
        %v584 = vld [vmem:[%s271 + $0x830] sm:$0xff]
        %v585 = vld [vmem:[%s271 + $0x838] sm:$0xff]
        %v586 = vld [vmem:[%s271 + $0x840] sm:$0xff]
        %v587 = vld [vmem:[%s271 + $0x848] sm:$0xff]
        %v588 = vld [vmem:[%s271 + $0x850] sm:$0xff]
        %v589 = vld [vmem:[%s271 + $0x858] sm:$0xff]
        %v590 = vld [vmem:[%s271 + $0x860] sm:$0xff]
        %v591 = vld [vmem:[%s271 + $0x868] sm:$0xff]
        %v592 = vld [vmem:[%s271 + $0x870] sm:$0xff]
        %v593 = vld [vmem:[%s271 + $0x878] sm:$0xff]
        %v594 = vld [vmem:[%s271 + $0x880] sm:$0xff]
        %v595 = vld [vmem:[%s271 + $0x888] sm:$0xff]
        %v596 = vld [vmem:[%s271 + $0x890] sm:$0xff]
        %v597 = vld [vmem:[%s271 + $0x898] sm:$0xff]
        %v598 = vld [vmem:[%s271 + $0x8a0] sm:$0xff]
        %v599 = vld [vmem:[%s271 + $0x8a8] sm:$0xff]
        %v600 = vld [vmem:[%s271 + $0x8b0] sm:$0xff]
        %v601 = vld [vmem:[%s271 + $0x8b8] sm:$0xff]
        %v602 = vld [vmem:[%s271 + $0x8c0] sm:$0xff]
        %v603 = vld [vmem:[%s271 + $0x8c8] sm:$0xff]
        %v604 = vld [vmem:[%s271 + $0x8d0] sm:$0xff]
        %v605 = vld [vmem:[%s271 + $0x8d8] sm:$0xff]
        %v606 = vld [vmem:[%s271 + $0x8e0] sm:$0xff]
        %v607 = vld [vmem:[%s271 + $0x8e8] sm:$0xff]
        %v608 = vld [vmem:[%s271 + $0x8f0] sm:$0xff]
        %v609 = vld [vmem:[%s271 + $0x8f8] sm:$0xff]
        %v610 = vld [vmem:[%s271 + $0x900] sm:$0xff]
        %v611 = vld [vmem:[%s271 + $0x908] sm:$0xff]
        %v612 = vld [vmem:[%s271 + $0x910] sm:$0xff]
        %v613 = vld [vmem:[%s271 + $0x918] sm:$0xff]
        %v614 = vld [vmem:[%s271 + $0x920] sm:$0xff]
        %v615 = vld [vmem:[%s271 + $0x928] sm:$0xff]
        %v616 = vld [vmem:[%s271 + $0x930] sm:$0xff]
        %v617 = vld [vmem:[%s271 + $0x938] sm:$0xff]
        %v618 = vld [vmem:[%s271 + $0x940] sm:$0xff]
        %v619 = vld [vmem:[%s271 + $0x948] sm:$0xff]
        %v620 = vld [vmem:[%s271 + $0x950] sm:$0xff]
        %v621 = vld [vmem:[%s271 + $0x958] sm:$0xff]
        %v622 = vld [vmem:[%s271 + $0x960] sm:$0xff]
        %v623 = vld [vmem:[%s271 + $0x968] sm:$0xff]
        %v624 = vld [vmem:[%s271 + $0x970] sm:$0xff]
        %v625 = vld [vmem:[%s271 + $0x978] sm:$0xff]
        %v626 = vld [vmem:[%s271 + $0x980] sm:$0xff]
        %v627 = vld [vmem:[%s271 + $0x988] sm:$0xff]
        %v628 = vld [vmem:[%s271 + $0x990] sm:$0xff]
        %v629 = vld [vmem:[%s271 + $0x998] sm:$0xff]
        %v630 = vld [vmem:[%s271 + $0x9a0] sm:$0xff]
        %v631 = vld [vmem:[%s271 + $0x9a8] sm:$0xff]
        %v632 = vld [vmem:[%s271 + $0x9b0] sm:$0xff]
        %v633 = vld [vmem:[%s271 + $0x9b8] sm:$0xff]
        %v634 = vld [vmem:[%s271 + $0x9c0] sm:$0xff]
        %v635 = vld [vmem:[%s271 + $0x9c8] sm:$0xff]
        %v636 = vld [vmem:[%s271 + $0x9d0] sm:$0xff]
        %v637 = vld [vmem:[%s271 + $0x9d8] sm:$0xff]
        %v638 = vld [vmem:[%s271 + $0x9e0] sm:$0xff]
        %v639 = vld [vmem:[%s271 + $0x9e8] sm:$0xff]
        %v640 = vld [vmem:[%s271 + $0x9f0] sm:$0xff]
        %v641 = vld [vmem:[%s271 + $0x9f8] sm:$0xff]
        %v642 = vld [vmem:[%s271 + $0xa00] sm:$0xff]
        %v643 = vld [vmem:[%s271 + $0xa08] sm:$0xff]
        %v644 = vld [vmem:[%s271 + $0xa10] sm:$0xff]
        %v645 = vld [vmem:[%s271 + $0xa18] sm:$0xff]
        %v646 = vld [vmem:[%s271 + $0xa20] sm:$0xff]
        %v647 = vld [vmem:[%s271 + $0xa28] sm:$0xff]
        %v648 = vld [vmem:[%s271 + $0xa30] sm:$0xff]
        %v649 = vld [vmem:[%s271 + $0xa38] sm:$0xff]
        %v650 = vld [vmem:[%s271 + $0xa40] sm:$0xff]
        %v651 = vld [vmem:[%s271 + $0xa48] sm:$0xff]
        %v652 = vld [vmem:[%s271 + $0xa50] sm:$0xff]
        %v653 = vld [vmem:[%s271 + $0xa58] sm:$0xff]
        %v654 = vld [vmem:[%s271 + $0xa60] sm:$0xff]
        %v655 = vld [vmem:[%s271 + $0xa68] sm:$0xff]
        %v656 = vld [vmem:[%s271 + $0xa70] sm:$0xff]
        %v657 = vld [vmem:[%s271 + $0xa78] sm:$0xff]
        %v658 = vld [vmem:[%s271 + $0xa80] sm:$0xff]
        %v659 = vld [vmem:[%s271 + $0xa88] sm:$0xff]
        %v660 = vld [vmem:[%s271 + $0xa90] sm:$0xff]
        %v661 = vld [vmem:[%s271 + $0xa98] sm:$0xff]
        %v662 = vld [vmem:[%s271 + $0xaa0] sm:$0xff]
        %v663 = vld [vmem:[%s271 + $0xaa8] sm:$0xff]
        %v664 = vld [vmem:[%s271 + $0xab0] sm:$0xff]
        %v665 = vld [vmem:[%s271 + $0xab8] sm:$0xff]
        %v666 = vld [vmem:[%s271 + $0xac0] sm:$0xff]
        %v667 = vld [vmem:[%s271 + $0xac8] sm:$0xff]
        %v668 = vld [vmem:[%s271 + $0xad0] sm:$0xff]
        %v669 = vld [vmem:[%s271 + $0xad8] sm:$0xff]
        %v670 = vld [vmem:[%s271 + $0xae0] sm:$0xff]
        %v671 = vld [vmem:[%s271 + $0xae8] sm:$0xff]
        %v672 = vld [vmem:[%s271 + $0xaf0] sm:$0xff]
        %v673 = vld [vmem:[%s271 + $0xaf8] sm:$0xff]
        %v674 = vld [vmem:[%s271 + $0xb00] sm:$0xff]
        %v675 = vld [vmem:[%s271 + $0xb08] sm:$0xff]
        %v676 = vld [vmem:[%s271 + $0xb10] sm:$0xff]
        %v677 = vld [vmem:[%s271 + $0xb18] sm:$0xff]
        %v678 = vld [vmem:[%s271 + $0xb20] sm:$0xff]
        %v679 = vld [vmem:[%s271 + $0xb28] sm:$0xff]
        %v680 = vld [vmem:[%s271 + $0xb30] sm:$0xff]
        %v681 = vld [vmem:[%s271 + $0xb38] sm:$0xff]
        %v682 = vld [vmem:[%s271 + $0xb40] sm:$0xff]
        %v683 = vld [vmem:[%s271 + $0xb48] sm:$0xff]
        %v684 = vld [vmem:[%s271 + $0xb50] sm:$0xff]
        %v685 = vld [vmem:[%s271 + $0xb58] sm:$0xff]
        %v686 = vld [vmem:[%s271 + $0xb60] sm:$0xff]
        %v687 = vld [vmem:[%s271 + $0xb68] sm:$0xff]
        %v688 = vld [vmem:[%s271 + $0xb70] sm:$0xff]
        %v689 = vld [vmem:[%s271 + $0xb78] sm:$0xff]
        %v690 = vld [vmem:[%s271 + $0xb80] sm:$0xff]
        %v691 = vld [vmem:[%s271 + $0xb88] sm:$0xff]
        %v692 = vld [vmem:[%s271 + $0xb90] sm:$0xff]
        %v693 = vld [vmem:[%s271 + $0xb98] sm:$0xff]
        %v694 = vld [vmem:[%s271 + $0xba0] sm:$0xff]
        %v695 = vld [vmem:[%s271 + $0xba8] sm:$0xff]
        %v696 = vld [vmem:[%s271 + $0xbb0] sm:$0xff]
        %v697 = vld [vmem:[%s271 + $0xbb8] sm:$0xff]
        %v698 = vld [vmem:[%s271 + $0xbc0] sm:$0xff]
        %v699 = vld [vmem:[%s271 + $0xbc8] sm:$0xff]
        %v700 = vld [vmem:[%s271 + $0xbd0] sm:$0xff]
        %v701 = vld [vmem:[%s271 + $0xbd8] sm:$0xff]
        %v702 = vld [vmem:[%s271 + $0xbe0] sm:$0xff]
        %v703 = vld [vmem:[%s271 + $0xbe8] sm:$0xff]
        %v704 = vld [vmem:[%s271 + $0xbf0] sm:$0xff]
        %v705 = vld [vmem:[%s271 + $0xbf8] sm:$0xff]
        %v706 = vld [vmem:[%s271 + $0xc00] sm:$0xff]
        %v707 = vld [vmem:[%s271 + $0xc08] sm:$0xff]
        %v708 = vld [vmem:[%s271 + $0xc10] sm:$0xff]
        %v709 = vld [vmem:[%s271 + $0xc18] sm:$0xff]
        %v710 = vld [vmem:[%s271 + $0xc20] sm:$0xff]
        %v711 = vld [vmem:[%s271 + $0xc28] sm:$0xff]
        %v712 = vld [vmem:[%s271 + $0xc30] sm:$0xff]
        %v713 = vld [vmem:[%s271 + $0xc38] sm:$0xff]
        %v714 = vld [vmem:[%s271 + $0xc40] sm:$0xff]
        %v715 = vld [vmem:[%s271 + $0xc48] sm:$0xff]
        %v716 = vld [vmem:[%s271 + $0xc50] sm:$0xff]
        %v717 = vld [vmem:[%s271 + $0xc58] sm:$0xff]
        %v718 = vld [vmem:[%s271 + $0xc60] sm:$0xff]
        %v719 = vld [vmem:[%s271 + $0xc68] sm:$0xff]
        %v720 = vld [vmem:[%s271 + $0xc70] sm:$0xff]
        %v721 = vld [vmem:[%s271 + $0xc78] sm:$0xff]
        %v722 = vld [vmem:[%s271 + $0xc80] sm:$0xff]
        %v723 = vld [vmem:[%s271 + $0xc88] sm:$0xff]
        %v724 = vld [vmem:[%s271 + $0xc90] sm:$0xff]
        %v725 = vld [vmem:[%s271 + $0xc98] sm:$0xff]
        %v726 = vld [vmem:[%s271 + $0xca0] sm:$0xff]
        %v727 = vld [vmem:[%s271 + $0xca8] sm:$0xff]
        %v728 = vld [vmem:[%s271 + $0xcb0] sm:$0xff]
        %v729 = vld [vmem:[%s271 + $0xcb8] sm:$0xff]
        %v730 = vld [vmem:[%s271 + $0xcc0] sm:$0xff]
        %v731 = vld [vmem:[%s271 + $0xcc8] sm:$0xff]
        %v732 = vld [vmem:[%s271 + $0xcd0] sm:$0xff]
        %v733 = vld [vmem:[%s271 + $0xcd8] sm:$0xff]
        %v734 = vld [vmem:[%s271 + $0xce0] sm:$0xff]
        %v735 = vld [vmem:[%s271 + $0xce8] sm:$0xff]
        %v736 = vld [vmem:[%s271 + $0xcf0] sm:$0xff]
        %v737 = vld [vmem:[%s271 + $0xcf8] sm:$0xff]
        %v738 = vld [vmem:[%s271 + $0xd00] sm:$0xff]
        %v739 = vld [vmem:[%s271 + $0xd08] sm:$0xff]
        %v740 = vld [vmem:[%s271 + $0xd10] sm:$0xff]
        %v741 = vld [vmem:[%s271 + $0xd18] sm:$0xff]
        %v742 = vld [vmem:[%s271 + $0xd20] sm:$0xff]
        %v743 = vld [vmem:[%s271 + $0xd28] sm:$0xff]
        %v744 = vld [vmem:[%s271 + $0xd30] sm:$0xff]
        %v745 = vld [vmem:[%s271 + $0xd38] sm:$0xff]
        %v746 = vld [vmem:[%s271 + $0xd40] sm:$0xff]
        %v747 = vld [vmem:[%s271 + $0xd48] sm:$0xff]
        %v748 = vld [vmem:[%s271 + $0xd50] sm:$0xff]
        %v749 = vld [vmem:[%s271 + $0xd58] sm:$0xff]
        %v750 = vld [vmem:[%s271 + $0xd60] sm:$0xff]
        %v751 = vld [vmem:[%s271 + $0xd68] sm:$0xff]
        %v752 = vld [vmem:[%s271 + $0xd70] sm:$0xff]
        %v753 = vld [vmem:[%s271 + $0xd78] sm:$0xff]
        %v754 = vld [vmem:[%s271 + $0xd80] sm:$0xff]
        %v755 = vld [vmem:[%s271 + $0xd88] sm:$0xff]
        %v756 = vld [vmem:[%s271 + $0xd90] sm:$0xff]
        %v757 = vld [vmem:[%s271 + $0xd98] sm:$0xff]
        %v758 = vld [vmem:[%s271 + $0xda0] sm:$0xff]
        %v759 = vld [vmem:[%s271 + $0xda8] sm:$0xff]
        %v760 = vld [vmem:[%s271 + $0xdb0] sm:$0xff]
        %v761 = vld [vmem:[%s271 + $0xdb8] sm:$0xff]
        %v762 = vld [vmem:[%s271 + $0xdc0] sm:$0xff]
        %v763 = vld [vmem:[%s271 + $0xdc8] sm:$0xff]
        %v764 = vld [vmem:[%s271 + $0xdd0] sm:$0xff]
        %v765 = vld [vmem:[%s271 + $0xdd8] sm:$0xff]
        %v766 = vld [vmem:[%s271 + $0xde0] sm:$0xff]
        %v767 = vld [vmem:[%s271 + $0xde8] sm:$0xff]
        %v768 = vld [vmem:[%s271 + $0xdf0] sm:$0xff]
        %v769 = vld [vmem:[%s271 + $0xdf8] sm:$0xff]
        %v770 = vld [vmem:[%s271 + $0xe00] sm:$0xff]
        %v771 = vld [vmem:[%s271 + $0xe08] sm:$0xff]
        %v772 = vld [vmem:[%s271 + $0xe10] sm:$0xff]
        %v773 = vld [vmem:[%s271 + $0xe18] sm:$0xff]
        %v774 = vld [vmem:[%s271 + $0xe20] sm:$0xff]
        %v775 = vld [vmem:[%s271 + $0xe28] sm:$0xff]
        %v776 = vld [vmem:[%s271 + $0xe30] sm:$0xff]
        %v777 = vld [vmem:[%s271 + $0xe38] sm:$0xff]
        %v778 = vld [vmem:[%s271 + $0xe40] sm:$0xff]
        %v779 = vld [vmem:[%s271 + $0xe48] sm:$0xff]
        %v780 = vld [vmem:[%s271 + $0xe50] sm:$0xff]
        %v781 = vld [vmem:[%s271 + $0xe58] sm:$0xff]
        %v782 = vld [vmem:[%s271 + $0xe60] sm:$0xff]
        %v783 = vld [vmem:[%s271 + $0xe68] sm:$0xff]
        %v784 = vld [vmem:[%s271 + $0xe70] sm:$0xff]
        %v785 = vld [vmem:[%s271 + $0xe78] sm:$0xff]
        %v786 = vld [vmem:[%s271 + $0xe80] sm:$0xff]
        %v787 = vld [vmem:[%s271 + $0xe88] sm:$0xff]
        %v788 = vld [vmem:[%s271 + $0xe90] sm:$0xff]
        %v789 = vld [vmem:[%s271 + $0xe98] sm:$0xff]
        %v790 = vld [vmem:[%s271 + $0xea0] sm:$0xff]
        %v791 = vld [vmem:[%s271 + $0xea8] sm:$0xff]
        %v792 = vld [vmem:[%s271 + $0xeb0] sm:$0xff]
        %v793 = vld [vmem:[%s271 + $0xeb8] sm:$0xff]
        %v794 = vld [vmem:[%s271 + $0xec0] sm:$0xff]
        %v795 = vld [vmem:[%s271 + $0xec8] sm:$0xff]
        %v796 = vld [vmem:[%s271 + $0xed0] sm:$0xff]
        %v797 = vld [vmem:[%s271 + $0xed8] sm:$0xff]
        %v798 = vld [vmem:[%s271 + $0xee0] sm:$0xff]
        %v799 = vld [vmem:[%s271 + $0xee8] sm:$0xff]
        %v800 = vld [vmem:[%s271 + $0xef0] sm:$0xff]
        %v801 = vld [vmem:[%s271 + $0xef8] sm:$0xff]
        %v802 = vld [vmem:[%s271 + $0xf00] sm:$0xff]
        %v803 = vld [vmem:[%s271 + $0xf08] sm:$0xff]
        %v804 = vld [vmem:[%s271 + $0xf10] sm:$0xff]
        %v805 = vld [vmem:[%s271 + $0xf18] sm:$0xff]
        %v806 = vld [vmem:[%s271 + $0xf20] sm:$0xff]
        %v807 = vld [vmem:[%s271 + $0xf28] sm:$0xff]
        %v808 = vld [vmem:[%s271 + $0xf30] sm:$0xff]
        %v809 = vld [vmem:[%s271 + $0xf38] sm:$0xff]
        %v810 = vld [vmem:[%s271 + $0xf40] sm:$0xff]
        %v811 = vld [vmem:[%s271 + $0xf48] sm:$0xff]
        %v812 = vld [vmem:[%s271 + $0xf50] sm:$0xff]
        %v813 = vld [vmem:[%s271 + $0xf58] sm:$0xff]
        %v814 = vld [vmem:[%s271 + $0xf60] sm:$0xff]
        %v815 = vld [vmem:[%s271 + $0xf68] sm:$0xff]
        %v816 = vld [vmem:[%s271 + $0xf70] sm:$0xff]
        %v817 = vld [vmem:[%s271 + $0xf78] sm:$0xff]
        %v818 = vld [vmem:[%s271 + $0xf80] sm:$0xff]
        %v819 = vld [vmem:[%s271 + $0xf88] sm:$0xff]
        %v820 = vld [vmem:[%s271 + $0xf90] sm:$0xff]
        %v821 = vld [vmem:[%s271 + $0xf98] sm:$0xff]
        %v822 = vld [vmem:[%s271 + $0xfa0] sm:$0xff]
        %v823 = vld [vmem:[%s271 + $0xfa8] sm:$0xff]
        %v824 = vld [vmem:[%s271 + $0xfb0] sm:$0xff]
        %v825 = vld [vmem:[%s271 + $0xfb8] sm:$0xff]
        %v826 = vld [vmem:[%s271 + $0xfc0] sm:$0xff]
        %v827 = vld [vmem:[%s271 + $0xfc8] sm:$0xff]
        %v828 = vld [vmem:[%s271 + $0xfd0] sm:$0xff]
        %v829 = vld [vmem:[%s271 + $0xfd8] sm:$0xff]
        %v830 = vld [vmem:[%s271 + $0xfe0] sm:$0xff]
        %v831 = vld [vmem:[%s271 + $0xfe8] sm:$0xff]
        %v832 = vld [vmem:[%s271 + $0xff0] sm:$0xff]
        %v833 = vld [vmem:[%s271 + $0xff8] sm:$0xff]
        %v834 = vld [vmem:[%s271 + $0x1000] sm:$0xff]
        %v835 = vld [vmem:[%s271 + $0x1008] sm:$0xff]
        %v836 = vld [vmem:[%s271 + $0x1010] sm:$0xff]
        %v837 = vld [vmem:[%s271 + $0x1018] sm:$0xff]
        %v838 = vld [vmem:[%s271 + $0x1020] sm:$0xff]
        %v839 = vld [vmem:[%s271 + $0x1028] sm:$0xff]
        %v840 = vld [vmem:[%s271 + $0x1030] sm:$0xff]
        %v841 = vld [vmem:[%s271 + $0x1038] sm:$0xff]
        %v842 = vld [vmem:[%s271 + $0x1040] sm:$0xff]
        %v843 = vld [vmem:[%s271 + $0x1048] sm:$0xff]
        %v844 = vld [vmem:[%s271 + $0x1050] sm:$0xff]
        %v845 = vld [vmem:[%s271 + $0x1058] sm:$0xff]
        %v846 = vld [vmem:[%s271 + $0x1060] sm:$0xff]
        %v847 = vld [vmem:[%s271 + $0x1068] sm:$0xff]
        %v848 = vld [vmem:[%s271 + $0x1070] sm:$0xff]
        %v849 = vld [vmem:[%s271 + $0x1078] sm:$0xff]
        %v850 = vld [vmem:[%s271 + $0x1080] sm:$0xff]
        %v851 = vld [vmem:[%s271 + $0x1088] sm:$0xff]
        %v852 = vld [vmem:[%s271 + $0x1090] sm:$0xff]
        %v853 = vld [vmem:[%s271 + $0x1098] sm:$0xff]
        %v854 = vld [vmem:[%s271 + $0x10a0] sm:$0xff]
        %v855 = vld [vmem:[%s271 + $0x10a8] sm:$0xff]
        %v856 = vld [vmem:[%s271 + $0x10b0] sm:$0xff]
        %v857 = vld [vmem:[%s271 + $0x10b8] sm:$0xff]
        %v858 = vld [vmem:[%s271 + $0x10c0] sm:$0xff]
        %v859 = vld [vmem:[%s271 + $0x10c8] sm:$0xff]
        %v860 = vld [vmem:[%s271 + $0x10d0] sm:$0xff]
        %v861 = vld [vmem:[%s271 + $0x10d8] sm:$0xff]
        %v862 = vld [vmem:[%s271 + $0x10e0] sm:$0xff]
        %v863 = vld [vmem:[%s271 + $0x10e8] sm:$0xff]
        %v864 = vld [vmem:[%s271 + $0x10f0] sm:$0xff]
        %v865 = vld [vmem:[%s271 + $0x10f8] sm:$0xff]
        %v866 = vld [vmem:[%s271 + $0x1100] sm:$0xff]
        %v867 = vld [vmem:[%s271 + $0x1108] sm:$0xff]
        %v868 = vld [vmem:[%s271 + $0x1110] sm:$0xff]
        %v869 = vld [vmem:[%s271 + $0x1118] sm:$0xff]
        %v870 = vld [vmem:[%s271 + $0x1120] sm:$0xff]
        %v871 = vld [vmem:[%s271 + $0x1128] sm:$0xff]
        %v872 = vld [vmem:[%s271 + $0x1130] sm:$0xff]
        %v873 = vld [vmem:[%s271 + $0x1138] sm:$0xff]
        %v874 = vld [vmem:[%s271 + $0x1140] sm:$0xff]
        %v875 = vld [vmem:[%s271 + $0x1148] sm:$0xff]
        %v876 = vld [vmem:[%s271 + $0x1150] sm:$0xff]
        %v877 = vld [vmem:[%s271 + $0x1158] sm:$0xff]
        %v878 = vld [vmem:[%s271 + $0x1160] sm:$0xff]
        %v879 = vld [vmem:[%s271 + $0x1168] sm:$0xff]
        %v880 = vld [vmem:[%s271 + $0x1170] sm:$0xff]
        %v881 = vld [vmem:[%s271 + $0x1178] sm:$0xff]
        %v882 = vld [vmem:[%s271 + $0x1180] sm:$0xff]
        %v883 = vld [vmem:[%s271 + $0x1188] sm:$0xff]
        %v884 = vld [vmem:[%s271 + $0x1190] sm:$0xff]
        %v885 = vld [vmem:[%s271 + $0x1198] sm:$0xff]
        %v886 = vld [vmem:[%s271 + $0x11a0] sm:$0xff]
        %v887 = vld [vmem:[%s271 + $0x11a8] sm:$0xff]
        %v888 = vld [vmem:[%s271 + $0x11b0] sm:$0xff]
        %v889 = vld [vmem:[%s271 + $0x11b8] sm:$0xff]
        %v890 = vld [vmem:[%s271 + $0x11c0] sm:$0xff]
        %v891 = vld [vmem:[%s271 + $0x11c8] sm:$0xff]
        %v892 = vld [vmem:[%s271 + $0x11d0] sm:$0xff]
        %v893 = vld [vmem:[%s271 + $0x11d8] sm:$0xff]
        %v894 = vld [vmem:[%s271 + $0x11e0] sm:$0xff]
        %v895 = vld [vmem:[%s271 + $0x11e8] sm:$0xff]
        %v896 = vld [vmem:[%s271 + $0x11f0] sm:$0xff]
        %v897 = vld [vmem:[%s271 + $0x11f8] sm:$0xff]
        %v898 = vld [vmem:[%s271 + $0x1200] sm:$0xff]
        %v899 = vld [vmem:[%s271 + $0x1208] sm:$0xff]
        %v900 = vld [vmem:[%s271 + $0x1210] sm:$0xff]
        %v901 = vld [vmem:[%s271 + $0x1218] sm:$0xff]
        %v902 = vld [vmem:[%s271 + $0x1220] sm:$0xff]
        %v903 = vld [vmem:[%s271 + $0x1228] sm:$0xff]
        %v904 = vld [vmem:[%s271 + $0x1230] sm:$0xff]
        %v905 = vld [vmem:[%s271 + $0x1238] sm:$0xff]
        %v906 = vld [vmem:[%s271 + $0x1240] sm:$0xff]
        %v907 = vld [vmem:[%s271 + $0x1248] sm:$0xff]
        %v908 = vld [vmem:[%s271 + $0x1250] sm:$0xff]
        %v909 = vld [vmem:[%s271 + $0x1258] sm:$0xff]
        %v910 = vld [vmem:[%s271 + $0x1260] sm:$0xff]
        %v911 = vld [vmem:[%s271 + $0x1268] sm:$0xff]
        %v912 = vld [vmem:[%s271 + $0x1270] sm:$0xff]
        %v913 = vld [vmem:[%s271 + $0x1278] sm:$0xff]
        %v914 = vld [vmem:[%s271 + $0x1280] sm:$0xff]
        %v915 = vld [vmem:[%s271 + $0x1288] sm:$0xff]
        %v916 = vld [vmem:[%s271 + $0x1290] sm:$0xff]
        %v917 = vld [vmem:[%s271 + $0x1298] sm:$0xff]
        %v918 = vld [vmem:[%s271 + $0x12a0] sm:$0xff]
        %v919 = vld [vmem:[%s271 + $0x12a8] sm:$0xff]
        %v920 = vld [vmem:[%s271 + $0x12b0] sm:$0xff]
        %v921 = vld [vmem:[%s271 + $0x12b8] sm:$0xff]
        %v922 = vld [vmem:[%s271 + $0x12c0] sm:$0xff]
        %v923 = vld [vmem:[%s271 + $0x12c8] sm:$0xff]
        %v924 = vld [vmem:[%s271 + $0x12d0] sm:$0xff]
        %v925 = vld [vmem:[%s271 + $0x12d8] sm:$0xff]
        %v926 = vld [vmem:[%s271 + $0x12e0] sm:$0xff]
        %v927 = vld [vmem:[%s271 + $0x12e8] sm:$0xff]
        %v928 = vld [vmem:[%s271 + $0x12f0] sm:$0xff]
        %v929 = vld [vmem:[%s271 + $0x12f8] sm:$0xff]
        %v930 = vld [vmem:[%s271 + $0x1300] sm:$0xff]
        %v931 = vld [vmem:[%s271 + $0x1308] sm:$0xff]
        %v932 = vld [vmem:[%s271 + $0x1310] sm:$0xff]
        %v933 = vld [vmem:[%s271 + $0x1318] sm:$0xff]
        %v934 = vld [vmem:[%s271 + $0x1320] sm:$0xff]
        %v935 = vld [vmem:[%s271 + $0x1328] sm:$0xff]
        %v936 = vld [vmem:[%s271 + $0x1330] sm:$0xff]
        %v937 = vld [vmem:[%s271 + $0x1338] sm:$0xff]
        %v938 = vld [vmem:[%s271 + $0x1340] sm:$0xff]
        %v939 = vld [vmem:[%s271 + $0x1348] sm:$0xff]
        %v940 = vld [vmem:[%s271 + $0x1350] sm:$0xff]
        %v941 = vld [vmem:[%s271 + $0x1358] sm:$0xff]
        %v942 = vld [vmem:[%s271 + $0x1360] sm:$0xff]
        %v943 = vld [vmem:[%s271 + $0x1368] sm:$0xff]
        %v944 = vld [vmem:[%s271 + $0x1370] sm:$0xff]
        %v945 = vld [vmem:[%s271 + $0x1378] sm:$0xff]
        %v946 = vld [vmem:[%s271 + $0x1380] sm:$0xff]
        %v947 = vld [vmem:[%s271 + $0x1388] sm:$0xff]
        %v948 = vld [vmem:[%s271 + $0x1390] sm:$0xff]
        %v949 = vld [vmem:[%s271 + $0x1398] sm:$0xff]
        %v950 = vld [vmem:[%s271 + $0x13a0] sm:$0xff]
        %v951 = vld [vmem:[%s271 + $0x13a8] sm:$0xff]
        %v952 = vld [vmem:[%s271 + $0x13b0] sm:$0xff]
        %v953 = vld [vmem:[%s271 + $0x13b8] sm:$0xff]
        %v954 = vld [vmem:[%s271 + $0x13c0] sm:$0xff]
        %v955 = vld [vmem:[%s271 + $0x13c8] sm:$0xff]
        %v956 = vld [vmem:[%s271 + $0x13d0] sm:$0xff]
        %v957 = vld [vmem:[%s271 + $0x13d8] sm:$0xff]
        %v958 = vld [vmem:[%s271 + $0x13e0] sm:$0xff]
        %v959 = vld [vmem:[%s271 + $0x13e8] sm:$0xff]
        %v960 = vld [vmem:[%s271 + $0x13f0] sm:$0xff]
        %v961 = vld [vmem:[%s271 + $0x13f8] sm:$0xff]
        %v962 = vld [vmem:[%s271 + $0x1400] sm:$0xff]
        %v963 = vld [vmem:[%s271 + $0x1408] sm:$0xff]
        %v964 = vld [vmem:[%s271 + $0x1410] sm:$0xff]
        %v965 = vld [vmem:[%s271 + $0x1418] sm:$0xff]
        %v966 = vld [vmem:[%s271 + $0x1420] sm:$0xff]
        %v967 = vld [vmem:[%s271 + $0x1428] sm:$0xff]
        %v968 = vld [vmem:[%s271 + $0x1430] sm:$0xff]
        %v969 = vld [vmem:[%s271 + $0x1438] sm:$0xff]
        %v970 = vld [vmem:[%s271 + $0x1440] sm:$0xff]
        %v971 = vld [vmem:[%s271 + $0x1448] sm:$0xff]
        %v972 = vld [vmem:[%s271 + $0x1450] sm:$0xff]
        %v973 = vld [vmem:[%s271 + $0x1458] sm:$0xff]
        %v974 = vld [vmem:[%s271 + $0x1460] sm:$0xff]
        %v975 = vld [vmem:[%s271 + $0x1468] sm:$0xff]
        %v976 = vld [vmem:[%s271 + $0x1470] sm:$0xff]
        %v977 = vld [vmem:[%s271 + $0x1478] sm:$0xff]
        %v978 = vld [vmem:[%s271 + $0x1480] sm:$0xff]
        %v979 = vld [vmem:[%s271 + $0x1488] sm:$0xff]
        %v980 = vld [vmem:[%s271 + $0x1490] sm:$0xff]
        %v981 = vld [vmem:[%s271 + $0x1498] sm:$0xff]
        %v982 = vld [vmem:[%s271 + $0x14a0] sm:$0xff]
        %v983 = vld [vmem:[%s271 + $0x14a8] sm:$0xff]
        %v984 = vld [vmem:[%s271 + $0x14b0] sm:$0xff]
        %v985 = vld [vmem:[%s271 + $0x14b8] sm:$0xff]
        %v986 = vld [vmem:[%s271 + $0x14c0] sm:$0xff]
        %v987 = vld [vmem:[%s271 + $0x14c8] sm:$0xff]
        %v988 = vld [vmem:[%s271 + $0x14d0] sm:$0xff]
        %v989 = vld [vmem:[%s271 + $0x14d8] sm:$0xff]
        %v990 = vld [vmem:[%s271 + $0x14e0] sm:$0xff]
        %v991 = vld [vmem:[%s271 + $0x14e8] sm:$0xff]
        %v992 = vld [vmem:[%s271 + $0x14f0] sm:$0xff]
        %v993 = vld [vmem:[%s271 + $0x14f8] sm:$0xff]
        %v994 = vld [vmem:[%s271 + $0x1500] sm:$0xff]
        %v995 = vld [vmem:[%s271 + $0x1508] sm:$0xff]
        %v996 = vld [vmem:[%s271 + $0x1510] sm:$0xff]
        %v997 = vld [vmem:[%s271 + $0x1518] sm:$0xff]
        %v998 = vld [vmem:[%s271 + $0x1520] sm:$0xff]
        %v999 = vld [vmem:[%s271 + $0x1528] sm:$0xff]
        %v1000 = vld [vmem:[%s271 + $0x1530] sm:$0xff]
        %v1001 = vld [vmem:[%s271 + $0x1538] sm:$0xff]
        %v1002 = vld [vmem:[%s271 + $0x1540] sm:$0xff]
        %v1003 = vld [vmem:[%s271 + $0x1548] sm:$0xff]
        %v1004 = vld [vmem:[%s271 + $0x1550] sm:$0xff]
        %v1005 = vld [vmem:[%s271 + $0x1558] sm:$0xff]
        %v1006 = vld [vmem:[%s271 + $0x1560] sm:$0xff]
        %v1007 = vld [vmem:[%s271 + $0x1568] sm:$0xff]
        %v1008 = vld [vmem:[%s271 + $0x1570] sm:$0xff]
        %v1009 = vld [vmem:[%s271 + $0x1578] sm:$0xff]
        %v1010 = vld [vmem:[%s271 + $0x1580] sm:$0xff]
        %v1011 = vld [vmem:[%s271 + $0x1588] sm:$0xff]
        %v1012 = vld [vmem:[%s271 + $0x1590] sm:$0xff]
        %v1013 = vld [vmem:[%s271 + $0x1598] sm:$0xff]
        %v1014 = vld [vmem:[%s271 + $0x15a0] sm:$0xff]
        %v1015 = vld [vmem:[%s271 + $0x15a8] sm:$0xff]
        %v1016 = vld [vmem:[%s271 + $0x15b0] sm:$0xff]
        %v1017 = vld [vmem:[%s271 + $0x15b8] sm:$0xff]
        %v1018 = vld [vmem:[%s271 + $0x15c0] sm:$0xff]
        %v1019 = vld [vmem:[%s271 + $0x15c8] sm:$0xff]
        %v1020 = vld [vmem:[%s271 + $0x15d0] sm:$0xff]
        %v1021 = vld [vmem:[%s271 + $0x15d8] sm:$0xff]
        %v1022 = vld [vmem:[%s271 + $0x15e0] sm:$0xff]
        %v1023 = vld [vmem:[%s271 + $0x15e8] sm:$0xff]
        %v1024 = vld [vmem:[%s271 + $0x15f0] sm:$0xff]
        %v1025 = vld [vmem:[%s271 + $0x15f8] sm:$0xff]
        %v1026 = vld [vmem:[%s271 + $0x1600] sm:$0xff]
        %v1027 = vld [vmem:[%s271 + $0x1608] sm:$0xff]
        %v1028 = vld [vmem:[%s271 + $0x1610] sm:$0xff]
        %v1029 = vld [vmem:[%s271 + $0x1618] sm:$0xff]
        %v1030 = vld [vmem:[%s271 + $0x1620] sm:$0xff]
        %v1031 = vld [vmem:[%s271 + $0x1628] sm:$0xff]
        %v1032 = vld [vmem:[%s271 + $0x1630] sm:$0xff]
        %v1033 = vld [vmem:[%s271 + $0x1638] sm:$0xff]
        %v1034 = vld [vmem:[%s271 + $0x1640] sm:$0xff]
        %v1035 = vld [vmem:[%s271 + $0x1648] sm:$0xff]
        %v1036 = vld [vmem:[%s271 + $0x1650] sm:$0xff]
        %v1037 = vld [vmem:[%s271 + $0x1658] sm:$0xff]
        %v1038 = vld [vmem:[%s271 + $0x1660] sm:$0xff]
        %v1039 = vld [vmem:[%s271 + $0x1668] sm:$0xff]
        %v1040 = vld [vmem:[%s271 + $0x1670] sm:$0xff]
        %v1041 = vld [vmem:[%s271 + $0x1678] sm:$0xff]
        %v1042 = vld [vmem:[%s271 + $0x1680] sm:$0xff]
        %v1043 = vld [vmem:[%s271 + $0x1688] sm:$0xff]
        %v1044 = vld [vmem:[%s271 + $0x1690] sm:$0xff]
        %v1045 = vld [vmem:[%s271 + $0x1698] sm:$0xff]
        %v1046 = vld [vmem:[%s271 + $0x16a0] sm:$0xff]
        %v1047 = vld [vmem:[%s271 + $0x16a8] sm:$0xff]
        %v1048 = vld [vmem:[%s271 + $0x16b0] sm:$0xff]
        %v1049 = vld [vmem:[%s271 + $0x16b8] sm:$0xff]
        %v1050 = vld [vmem:[%s271 + $0x16c0] sm:$0xff]
        %v1051 = vld [vmem:[%s271 + $0x16c8] sm:$0xff]
        %v1052 = vld [vmem:[%s271 + $0x16d0] sm:$0xff]
        %v1053 = vld [vmem:[%s271 + $0x16d8] sm:$0xff]
        %v1054 = vld [vmem:[%s271 + $0x16e0] sm:$0xff]
        %v1055 = vld [vmem:[%s271 + $0x16e8] sm:$0xff]
        %v1056 = vld [vmem:[%s271 + $0x16f0] sm:$0xff]
        %v1057 = vld [vmem:[%s271 + $0x16f8] sm:$0xff]
        %v1058 = vld [vmem:[%s271 + $0x1700] sm:$0xff]
        %v1059 = vld [vmem:[%s271 + $0x1708] sm:$0xff]
        %v1060 = vld [vmem:[%s271 + $0x1710] sm:$0xff]
        %v1061 = vld [vmem:[%s271 + $0x1718] sm:$0xff]
        %v1062 = vld [vmem:[%s271 + $0x1720] sm:$0xff]
        %v1063 = vld [vmem:[%s271 + $0x1728] sm:$0xff]
        %v1064 = vld [vmem:[%s271 + $0x1730] sm:$0xff]
        %v1065 = vld [vmem:[%s271 + $0x1738] sm:$0xff]
        %v1066 = vld [vmem:[%s271 + $0x1740] sm:$0xff]
        %v1067 = vld [vmem:[%s271 + $0x1748] sm:$0xff]
        %v1068 = vld [vmem:[%s271 + $0x1750] sm:$0xff]
        %v1069 = vld [vmem:[%s271 + $0x1758] sm:$0xff]
        %v1070 = vld [vmem:[%s271 + $0x1760] sm:$0xff]
        %v1071 = vld [vmem:[%s271 + $0x1768] sm:$0xff]
        %v1072 = vld [vmem:[%s271 + $0x1770] sm:$0xff]
        %v1073 = vld [vmem:[%s271 + $0x1778] sm:$0xff]
        %v1074 = vld [vmem:[%s271 + $0x1780] sm:$0xff]
        %v1075 = vld [vmem:[%s271 + $0x1788] sm:$0xff]
        %v1076 = vld [vmem:[%s271 + $0x1790] sm:$0xff]
        %v1077 = vld [vmem:[%s271 + $0x1798] sm:$0xff]
        %v1078 = vld [vmem:[%s271 + $0x17a0] sm:$0xff]
        %v1079 = vld [vmem:[%s271 + $0x17a8] sm:$0xff]
        %v1080 = vld [vmem:[%s271 + $0x17b0] sm:$0xff]
        %v1081 = vld [vmem:[%s271 + $0x17b8] sm:$0xff]
        %v1082 = vld [vmem:[%s271 + $0x17c0] sm:$0xff]
        %v1083 = vld [vmem:[%s271 + $0x17c8] sm:$0xff]
        %v1084 = vld [vmem:[%s271 + $0x17d0] sm:$0xff]
        %v1085 = vld [vmem:[%s271 + $0x17d8] sm:$0xff]
        %v1086 = vld [vmem:[%s271 + $0x17e0] sm:$0xff]
        %v1087 = vld [vmem:[%s271 + $0x17e8] sm:$0xff]
        %v1088 = vld [vmem:[%s271 + $0x17f0] sm:$0xff]
        %v1089 = vld [vmem:[%s271 + $0x17f8] sm:$0xff]
        %v1090 = vunpack.c.l.s8.bf16 %v322
        %v1091 = vunpack.c.l.s8.bf16 %v323
        %v1092 = vunpack.c.l.s8.bf16 %v324
        %v1093 = vunpack.c.l.s8.bf16 %v325
        %v1094 = vunpack.c.h.s8.bf16 %v322
        %v1095 = vunpack.c.h.s8.bf16 %v323
        %v1096 = vunpack.c.h.s8.bf16 %v324
        %v1097 = vunpack.c.h.s8.bf16 %v325
        %v1098 = vunpack.c.l.s8.bf16 %v326
        %v1099 = vunpack.c.l.s8.bf16 %v327
        %v1100 = vunpack.c.l.s8.bf16 %v328
        %v1101 = vunpack.c.l.s8.bf16 %v329
        %v1102 = vunpack.c.h.s8.bf16 %v326
        %v1103 = vunpack.c.h.s8.bf16 %v327
        %v1104 = vunpack.c.h.s8.bf16 %v328
        %v1105 = vunpack.c.h.s8.bf16 %v329
        %v1106 = vunpack.c.l.s8.bf16 %v330
        %v1107 = vunpack.c.l.s8.bf16 %v331
        %v1108 = vunpack.c.l.s8.bf16 %v332
        %v1109 = vunpack.c.l.s8.bf16 %v333
        %v1110 = vunpack.c.h.s8.bf16 %v330
        %v1111 = vunpack.c.h.s8.bf16 %v331
        %v1112 = vunpack.c.h.s8.bf16 %v332
        %v1113 = vunpack.c.h.s8.bf16 %v333
        %v1114 = vunpack.c.l.s8.bf16 %v334
        %v1115 = vunpack.c.l.s8.bf16 %v335
        %v1116 = vunpack.c.l.s8.bf16 %v336
        %v1117 = vunpack.c.l.s8.bf16 %v337
        %v1118 = vunpack.c.h.s8.bf16 %v334
        %v1119 = vunpack.c.h.s8.bf16 %v335
        %v1120 = vunpack.c.h.s8.bf16 %v336
        %v1121 = vunpack.c.h.s8.bf16 %v337
        %v1122 = vunpack.c.l.s8.bf16 %v338
        %v1123 = vunpack.c.l.s8.bf16 %v339
        %v1124 = vunpack.c.l.s8.bf16 %v340
        %v1125 = vunpack.c.l.s8.bf16 %v341
        %v1126 = vunpack.c.h.s8.bf16 %v338
        %v1127 = vunpack.c.h.s8.bf16 %v339
        %v1128 = vunpack.c.h.s8.bf16 %v340
        %v1129 = vunpack.c.h.s8.bf16 %v341
        %v1130 = vunpack.c.l.s8.bf16 %v342
        %v1131 = vunpack.c.l.s8.bf16 %v343
        %v1132 = vunpack.c.l.s8.bf16 %v344
        %v1133 = vunpack.c.l.s8.bf16 %v345
        %v1134 = vunpack.c.h.s8.bf16 %v342
        %v1135 = vunpack.c.h.s8.bf16 %v343
        %v1136 = vunpack.c.h.s8.bf16 %v344
        %v1137 = vunpack.c.h.s8.bf16 %v345
        %v1138 = vunpack.c.l.s8.bf16 %v346
        %v1139 = vunpack.c.l.s8.bf16 %v347
        %v1140 = vunpack.c.l.s8.bf16 %v348
        %v1141 = vunpack.c.l.s8.bf16 %v349
        %v1142 = vunpack.c.h.s8.bf16 %v346
        %v1143 = vunpack.c.h.s8.bf16 %v347
        %v1144 = vunpack.c.h.s8.bf16 %v348
        %v1145 = vunpack.c.h.s8.bf16 %v349
        %v1146 = vunpack.c.l.s8.bf16 %v350
        %v1147 = vunpack.c.l.s8.bf16 %v351
        %v1148 = vunpack.c.l.s8.bf16 %v352
        %v1149 = vunpack.c.l.s8.bf16 %v353
        %v1150 = vunpack.c.h.s8.bf16 %v350
        %v1151 = vunpack.c.h.s8.bf16 %v351
        %v1152 = vunpack.c.h.s8.bf16 %v352
        %v1153 = vunpack.c.h.s8.bf16 %v353
        %v1154 = vunpack.c.l.s8.bf16 %v354
        %v1155 = vunpack.c.l.s8.bf16 %v355
        %v1156 = vunpack.c.l.s8.bf16 %v356
        %v1157 = vunpack.c.l.s8.bf16 %v357
        %v1158 = vunpack.c.h.s8.bf16 %v354
        %v1159 = vunpack.c.h.s8.bf16 %v355
        %v1160 = vunpack.c.h.s8.bf16 %v356
        %v1161 = vunpack.c.h.s8.bf16 %v357
        %v1162 = vunpack.c.l.s8.bf16 %v358
        %v1163 = vunpack.c.l.s8.bf16 %v359
        %v1164 = vunpack.c.l.s8.bf16 %v360
        %v1165 = vunpack.c.l.s8.bf16 %v361
        %v1166 = vunpack.c.h.s8.bf16 %v358
        %v1167 = vunpack.c.h.s8.bf16 %v359
        %v1168 = vunpack.c.h.s8.bf16 %v360
        %v1169 = vunpack.c.h.s8.bf16 %v361
        %v1170 = vunpack.c.l.s8.bf16 %v362
        %v1171 = vunpack.c.l.s8.bf16 %v363
        %v1172 = vunpack.c.l.s8.bf16 %v364
        %v1173 = vunpack.c.l.s8.bf16 %v365
        %v1174 = vunpack.c.h.s8.bf16 %v362
        %v1175 = vunpack.c.h.s8.bf16 %v363
        %v1176 = vunpack.c.h.s8.bf16 %v364
        %v1177 = vunpack.c.h.s8.bf16 %v365
        %v1178 = vunpack.c.l.s8.bf16 %v366
        %v1179 = vunpack.c.l.s8.bf16 %v367
        %v1180 = vunpack.c.l.s8.bf16 %v368
        %v1181 = vunpack.c.l.s8.bf16 %v369
        %v1182 = vunpack.c.h.s8.bf16 %v366
        %v1183 = vunpack.c.h.s8.bf16 %v367
        %v1184 = vunpack.c.h.s8.bf16 %v368
        %v1185 = vunpack.c.h.s8.bf16 %v369
        %v1186 = vunpack.c.l.s8.bf16 %v370
        %v1187 = vunpack.c.l.s8.bf16 %v371
        %v1188 = vunpack.c.l.s8.bf16 %v372
        %v1189 = vunpack.c.l.s8.bf16 %v373
        %v1190 = vunpack.c.h.s8.bf16 %v370
        %v1191 = vunpack.c.h.s8.bf16 %v371
        %v1192 = vunpack.c.h.s8.bf16 %v372
        %v1193 = vunpack.c.h.s8.bf16 %v373
        %v1194 = vunpack.c.l.s8.bf16 %v374
        %v1195 = vunpack.c.l.s8.bf16 %v375
        %v1196 = vunpack.c.l.s8.bf16 %v376
        %v1197 = vunpack.c.l.s8.bf16 %v377
        %v1198 = vunpack.c.h.s8.bf16 %v374
        %v1199 = vunpack.c.h.s8.bf16 %v375
        %v1200 = vunpack.c.h.s8.bf16 %v376
        %v1201 = vunpack.c.h.s8.bf16 %v377
        %v1202 = vunpack.c.l.s8.bf16 %v378
        %v1203 = vunpack.c.l.s8.bf16 %v379
        %v1204 = vunpack.c.l.s8.bf16 %v380
        %v1205 = vunpack.c.l.s8.bf16 %v381
        %v1206 = vunpack.c.h.s8.bf16 %v378
        %v1207 = vunpack.c.h.s8.bf16 %v379
        %v1208 = vunpack.c.h.s8.bf16 %v380
        %v1209 = vunpack.c.h.s8.bf16 %v381
        %v1210 = vunpack.c.l.s8.bf16 %v382
        %v1211 = vunpack.c.l.s8.bf16 %v383
        %v1212 = vunpack.c.l.s8.bf16 %v384
        %v1213 = vunpack.c.l.s8.bf16 %v385
        %v1214 = vunpack.c.h.s8.bf16 %v382
        %v1215 = vunpack.c.h.s8.bf16 %v383
        %v1216 = vunpack.c.h.s8.bf16 %v384
        %v1217 = vunpack.c.h.s8.bf16 %v385
        %v1218 = vunpack.c.l.s8.bf16 %v386
        %v1219 = vunpack.c.l.s8.bf16 %v387
        %v1220 = vunpack.c.l.s8.bf16 %v388
        %v1221 = vunpack.c.l.s8.bf16 %v389
        %v1222 = vunpack.c.h.s8.bf16 %v386
        %v1223 = vunpack.c.h.s8.bf16 %v387
        %v1224 = vunpack.c.h.s8.bf16 %v388
        %v1225 = vunpack.c.h.s8.bf16 %v389
        %v1226 = vunpack.c.l.s8.bf16 %v390
        %v1227 = vunpack.c.l.s8.bf16 %v391
        %v1228 = vunpack.c.l.s8.bf16 %v392
        %v1229 = vunpack.c.l.s8.bf16 %v393
        %v1230 = vunpack.c.h.s8.bf16 %v390
        %v1231 = vunpack.c.h.s8.bf16 %v391
        %v1232 = vunpack.c.h.s8.bf16 %v392
        %v1233 = vunpack.c.h.s8.bf16 %v393
        %v1234 = vunpack.c.l.s8.bf16 %v394
        %v1235 = vunpack.c.l.s8.bf16 %v395
        %v1236 = vunpack.c.l.s8.bf16 %v396
        %v1237 = vunpack.c.l.s8.bf16 %v397
        %v1238 = vunpack.c.h.s8.bf16 %v394
        %v1239 = vunpack.c.h.s8.bf16 %v395
        %v1240 = vunpack.c.h.s8.bf16 %v396
        %v1241 = vunpack.c.h.s8.bf16 %v397
        %v1242 = vunpack.c.l.s8.bf16 %v398
        %v1243 = vunpack.c.l.s8.bf16 %v399
        %v1244 = vunpack.c.l.s8.bf16 %v400
        %v1245 = vunpack.c.l.s8.bf16 %v401
        %v1246 = vunpack.c.h.s8.bf16 %v398
        %v1247 = vunpack.c.h.s8.bf16 %v399
        %v1248 = vunpack.c.h.s8.bf16 %v400
        %v1249 = vunpack.c.h.s8.bf16 %v401
        %v1250 = vunpack.c.l.s8.bf16 %v402
        %v1251 = vunpack.c.l.s8.bf16 %v403
        %v1252 = vunpack.c.l.s8.bf16 %v404
        %v1253 = vunpack.c.l.s8.bf16 %v405
        %v1254 = vunpack.c.h.s8.bf16 %v402
        %v1255 = vunpack.c.h.s8.bf16 %v403
        %v1256 = vunpack.c.h.s8.bf16 %v404
        %v1257 = vunpack.c.h.s8.bf16 %v405
        %v1258 = vunpack.c.l.s8.bf16 %v406
        %v1259 = vunpack.c.l.s8.bf16 %v407
        %v1260 = vunpack.c.l.s8.bf16 %v408
        %v1261 = vunpack.c.l.s8.bf16 %v409
        %v1262 = vunpack.c.h.s8.bf16 %v406
        %v1263 = vunpack.c.h.s8.bf16 %v407
        %v1264 = vunpack.c.h.s8.bf16 %v408
        %v1265 = vunpack.c.h.s8.bf16 %v409
        %v1266 = vunpack.c.l.s8.bf16 %v410
        %v1267 = vunpack.c.l.s8.bf16 %v411
        %v1268 = vunpack.c.l.s8.bf16 %v412
        %v1269 = vunpack.c.l.s8.bf16 %v413
        %v1270 = vunpack.c.h.s8.bf16 %v410
        %v1271 = vunpack.c.h.s8.bf16 %v411
        %v1272 = vunpack.c.h.s8.bf16 %v412
        %v1273 = vunpack.c.h.s8.bf16 %v413
        %v1274 = vunpack.c.l.s8.bf16 %v414
        %v1275 = vunpack.c.l.s8.bf16 %v415
        %v1276 = vunpack.c.l.s8.bf16 %v416
        %v1277 = vunpack.c.l.s8.bf16 %v417
        %v1278 = vunpack.c.h.s8.bf16 %v414
        %v1279 = vunpack.c.h.s8.bf16 %v415
        %v1280 = vunpack.c.h.s8.bf16 %v416
        %v1281 = vunpack.c.h.s8.bf16 %v417
        %v1282 = vunpack.c.l.s8.bf16 %v418
        %v1283 = vunpack.c.l.s8.bf16 %v419
        %v1284 = vunpack.c.l.s8.bf16 %v420
        %v1285 = vunpack.c.l.s8.bf16 %v421
        %v1286 = vunpack.c.h.s8.bf16 %v418
        %v1287 = vunpack.c.h.s8.bf16 %v419
        %v1288 = vunpack.c.h.s8.bf16 %v420
        %v1289 = vunpack.c.h.s8.bf16 %v421
        %v1290 = vunpack.c.l.s8.bf16 %v422
        %v1291 = vunpack.c.l.s8.bf16 %v423
        %v1292 = vunpack.c.l.s8.bf16 %v424
        %v1293 = vunpack.c.l.s8.bf16 %v425
        %v1294 = vunpack.c.h.s8.bf16 %v422
        %v1295 = vunpack.c.h.s8.bf16 %v423
        %v1296 = vunpack.c.h.s8.bf16 %v424
        %v1297 = vunpack.c.h.s8.bf16 %v425
        %v1298 = vunpack.c.l.s8.bf16 %v426
        %v1299 = vunpack.c.l.s8.bf16 %v427
        %v1300 = vunpack.c.l.s8.bf16 %v428
        %v1301 = vunpack.c.l.s8.bf16 %v429
        %v1302 = vunpack.c.h.s8.bf16 %v426
        %v1303 = vunpack.c.h.s8.bf16 %v427
        %v1304 = vunpack.c.h.s8.bf16 %v428
        %v1305 = vunpack.c.h.s8.bf16 %v429
        %v1306 = vunpack.c.l.s8.bf16 %v430
        %v1307 = vunpack.c.l.s8.bf16 %v431
        %v1308 = vunpack.c.l.s8.bf16 %v432
        %v1309 = vunpack.c.l.s8.bf16 %v433
        %v1310 = vunpack.c.h.s8.bf16 %v430
        %v1311 = vunpack.c.h.s8.bf16 %v431
        %v1312 = vunpack.c.h.s8.bf16 %v432
        %v1313 = vunpack.c.h.s8.bf16 %v433
        %v1314 = vunpack.c.l.s8.bf16 %v434
        %v1315 = vunpack.c.l.s8.bf16 %v435
        %v1316 = vunpack.c.l.s8.bf16 %v436
        %v1317 = vunpack.c.l.s8.bf16 %v437
        %v1318 = vunpack.c.h.s8.bf16 %v434
        %v1319 = vunpack.c.h.s8.bf16 %v435
        %v1320 = vunpack.c.h.s8.bf16 %v436
        %v1321 = vunpack.c.h.s8.bf16 %v437
        %v1322 = vunpack.c.l.s8.bf16 %v438
        %v1323 = vunpack.c.l.s8.bf16 %v439
        %v1324 = vunpack.c.l.s8.bf16 %v440
        %v1325 = vunpack.c.l.s8.bf16 %v441
        %v1326 = vunpack.c.h.s8.bf16 %v438
        %v1327 = vunpack.c.h.s8.bf16 %v439
        %v1328 = vunpack.c.h.s8.bf16 %v440
        %v1329 = vunpack.c.h.s8.bf16 %v441
        %v1330 = vunpack.c.l.s8.bf16 %v442
        %v1331 = vunpack.c.l.s8.bf16 %v443
        %v1332 = vunpack.c.l.s8.bf16 %v444
        %v1333 = vunpack.c.l.s8.bf16 %v445
        %v1334 = vunpack.c.h.s8.bf16 %v442
        %v1335 = vunpack.c.h.s8.bf16 %v443
        %v1336 = vunpack.c.h.s8.bf16 %v444
        %v1337 = vunpack.c.h.s8.bf16 %v445
        %v1338 = vunpack.c.l.s8.bf16 %v446
        %v1339 = vunpack.c.l.s8.bf16 %v447
        %v1340 = vunpack.c.l.s8.bf16 %v448
        %v1341 = vunpack.c.l.s8.bf16 %v449
        %v1342 = vunpack.c.h.s8.bf16 %v446
        %v1343 = vunpack.c.h.s8.bf16 %v447
        %v1344 = vunpack.c.h.s8.bf16 %v448
        %v1345 = vunpack.c.h.s8.bf16 %v449
        %v1346 = vunpack.c.l.s8.bf16 %v450
        %v1347 = vunpack.c.l.s8.bf16 %v451
        %v1348 = vunpack.c.l.s8.bf16 %v452
        %v1349 = vunpack.c.l.s8.bf16 %v453
        %v1350 = vunpack.c.h.s8.bf16 %v450
        %v1351 = vunpack.c.h.s8.bf16 %v451
        %v1352 = vunpack.c.h.s8.bf16 %v452
        %v1353 = vunpack.c.h.s8.bf16 %v453
        %v1354 = vunpack.c.l.s8.bf16 %v454
        %v1355 = vunpack.c.l.s8.bf16 %v455
        %v1356 = vunpack.c.l.s8.bf16 %v456
        %v1357 = vunpack.c.l.s8.bf16 %v457
        %v1358 = vunpack.c.h.s8.bf16 %v454
        %v1359 = vunpack.c.h.s8.bf16 %v455
        %v1360 = vunpack.c.h.s8.bf16 %v456
        %v1361 = vunpack.c.h.s8.bf16 %v457
        %v1362 = vunpack.c.l.s8.bf16 %v458
        %v1363 = vunpack.c.l.s8.bf16 %v459
        %v1364 = vunpack.c.l.s8.bf16 %v460
        %v1365 = vunpack.c.l.s8.bf16 %v461
        %v1366 = vunpack.c.h.s8.bf16 %v458
        %v1367 = vunpack.c.h.s8.bf16 %v459
        %v1368 = vunpack.c.h.s8.bf16 %v460
        %v1369 = vunpack.c.h.s8.bf16 %v461
        %v1370 = vunpack.c.l.s8.bf16 %v462
        %v1371 = vunpack.c.l.s8.bf16 %v463
        %v1372 = vunpack.c.l.s8.bf16 %v464
        %v1373 = vunpack.c.l.s8.bf16 %v465
        %v1374 = vunpack.c.h.s8.bf16 %v462
        %v1375 = vunpack.c.h.s8.bf16 %v463
        %v1376 = vunpack.c.h.s8.bf16 %v464
        %v1377 = vunpack.c.h.s8.bf16 %v465
        %v1378 = vunpack.c.l.s8.bf16 %v466
        %v1379 = vunpack.c.l.s8.bf16 %v467
        %v1380 = vunpack.c.l.s8.bf16 %v468
        %v1381 = vunpack.c.l.s8.bf16 %v469
        %v1382 = vunpack.c.h.s8.bf16 %v466
        %v1383 = vunpack.c.h.s8.bf16 %v467
        %v1384 = vunpack.c.h.s8.bf16 %v468
        %v1385 = vunpack.c.h.s8.bf16 %v469
        %v1386 = vunpack.c.l.s8.bf16 %v470
        %v1387 = vunpack.c.l.s8.bf16 %v471
        %v1388 = vunpack.c.l.s8.bf16 %v472
        %v1389 = vunpack.c.l.s8.bf16 %v473
        %v1390 = vunpack.c.h.s8.bf16 %v470
        %v1391 = vunpack.c.h.s8.bf16 %v471
        %v1392 = vunpack.c.h.s8.bf16 %v472
        %v1393 = vunpack.c.h.s8.bf16 %v473
        %v1394 = vunpack.c.l.s8.bf16 %v474
        %v1395 = vunpack.c.l.s8.bf16 %v475
        %v1396 = vunpack.c.l.s8.bf16 %v476
        %v1397 = vunpack.c.l.s8.bf16 %v477
        %v1398 = vunpack.c.h.s8.bf16 %v474
        %v1399 = vunpack.c.h.s8.bf16 %v475
        %v1400 = vunpack.c.h.s8.bf16 %v476
        %v1401 = vunpack.c.h.s8.bf16 %v477
        %v1402 = vunpack.c.l.s8.bf16 %v478
        %v1403 = vunpack.c.l.s8.bf16 %v479
        %v1404 = vunpack.c.l.s8.bf16 %v480
        %v1405 = vunpack.c.l.s8.bf16 %v481
        %v1406 = vunpack.c.h.s8.bf16 %v478
        %v1407 = vunpack.c.h.s8.bf16 %v479
        %v1408 = vunpack.c.h.s8.bf16 %v480
        %v1409 = vunpack.c.h.s8.bf16 %v481
        %v1410 = vunpack.c.l.s8.bf16 %v482
        %v1411 = vunpack.c.l.s8.bf16 %v483
        %v1412 = vunpack.c.l.s8.bf16 %v484
        %v1413 = vunpack.c.l.s8.bf16 %v485
        %v1414 = vunpack.c.h.s8.bf16 %v482
        %v1415 = vunpack.c.h.s8.bf16 %v483
        %v1416 = vunpack.c.h.s8.bf16 %v484
        %v1417 = vunpack.c.h.s8.bf16 %v485
        %v1418 = vunpack.c.l.s8.bf16 %v486
        %v1419 = vunpack.c.l.s8.bf16 %v487
        %v1420 = vunpack.c.l.s8.bf16 %v488
        %v1421 = vunpack.c.l.s8.bf16 %v489
        %v1422 = vunpack.c.h.s8.bf16 %v486
        %v1423 = vunpack.c.h.s8.bf16 %v487
        %v1424 = vunpack.c.h.s8.bf16 %v488
        %v1425 = vunpack.c.h.s8.bf16 %v489
        %v1426 = vunpack.c.l.s8.bf16 %v490
        %v1427 = vunpack.c.l.s8.bf16 %v491
        %v1428 = vunpack.c.l.s8.bf16 %v492
        %v1429 = vunpack.c.l.s8.bf16 %v493
        %v1430 = vunpack.c.h.s8.bf16 %v490
        %v1431 = vunpack.c.h.s8.bf16 %v491
        %v1432 = vunpack.c.h.s8.bf16 %v492
        %v1433 = vunpack.c.h.s8.bf16 %v493
        %v1434 = vunpack.c.l.s8.bf16 %v494
        %v1435 = vunpack.c.l.s8.bf16 %v495
        %v1436 = vunpack.c.l.s8.bf16 %v496
        %v1437 = vunpack.c.l.s8.bf16 %v497
        %v1438 = vunpack.c.h.s8.bf16 %v494
        %v1439 = vunpack.c.h.s8.bf16 %v495
        %v1440 = vunpack.c.h.s8.bf16 %v496
        %v1441 = vunpack.c.h.s8.bf16 %v497
        %v1442 = vunpack.c.l.s8.bf16 %v498
        %v1443 = vunpack.c.l.s8.bf16 %v499
        %v1444 = vunpack.c.l.s8.bf16 %v500
        %v1445 = vunpack.c.l.s8.bf16 %v501
        %v1446 = vunpack.c.h.s8.bf16 %v498
        %v1447 = vunpack.c.h.s8.bf16 %v499
        %v1448 = vunpack.c.h.s8.bf16 %v500
        %v1449 = vunpack.c.h.s8.bf16 %v501
        %v1450 = vunpack.c.l.s8.bf16 %v502
        %v1451 = vunpack.c.l.s8.bf16 %v503
        %v1452 = vunpack.c.l.s8.bf16 %v504
        %v1453 = vunpack.c.l.s8.bf16 %v505
        %v1454 = vunpack.c.h.s8.bf16 %v502
        %v1455 = vunpack.c.h.s8.bf16 %v503
        %v1456 = vunpack.c.h.s8.bf16 %v504
        %v1457 = vunpack.c.h.s8.bf16 %v505
        %v1458 = vunpack.c.l.s8.bf16 %v506
        %v1459 = vunpack.c.l.s8.bf16 %v507
        %v1460 = vunpack.c.l.s8.bf16 %v508
        %v1461 = vunpack.c.l.s8.bf16 %v509
        %v1462 = vunpack.c.h.s8.bf16 %v506
        %v1463 = vunpack.c.h.s8.bf16 %v507
        %v1464 = vunpack.c.h.s8.bf16 %v508
        %v1465 = vunpack.c.h.s8.bf16 %v509
        %v1466 = vunpack.c.l.s8.bf16 %v510
        %v1467 = vunpack.c.l.s8.bf16 %v511
        %v1468 = vunpack.c.l.s8.bf16 %v512
        %v1469 = vunpack.c.l.s8.bf16 %v513
        %v1470 = vunpack.c.h.s8.bf16 %v510
        %v1471 = vunpack.c.h.s8.bf16 %v511
        %v1472 = vunpack.c.h.s8.bf16 %v512
        %v1473 = vunpack.c.h.s8.bf16 %v513
        %v1474 = vunpack.c.l.s8.bf16 %v514
        %v1475 = vunpack.c.l.s8.bf16 %v515
        %v1476 = vunpack.c.l.s8.bf16 %v516
        %v1477 = vunpack.c.l.s8.bf16 %v517
        %v1478 = vunpack.c.h.s8.bf16 %v514
        %v1479 = vunpack.c.h.s8.bf16 %v515
        %v1480 = vunpack.c.h.s8.bf16 %v516
        %v1481 = vunpack.c.h.s8.bf16 %v517
        %v1482 = vunpack.c.l.s8.bf16 %v518
        %v1483 = vunpack.c.l.s8.bf16 %v519
        %v1484 = vunpack.c.l.s8.bf16 %v520
        %v1485 = vunpack.c.l.s8.bf16 %v521
        %v1486 = vunpack.c.h.s8.bf16 %v518
        %v1487 = vunpack.c.h.s8.bf16 %v519
        %v1488 = vunpack.c.h.s8.bf16 %v520
        %v1489 = vunpack.c.h.s8.bf16 %v521
        %v1490 = vunpack.c.l.s8.bf16 %v522
        %v1491 = vunpack.c.l.s8.bf16 %v523
        %v1492 = vunpack.c.l.s8.bf16 %v524
        %v1493 = vunpack.c.l.s8.bf16 %v525
        %v1494 = vunpack.c.h.s8.bf16 %v522
        %v1495 = vunpack.c.h.s8.bf16 %v523
        %v1496 = vunpack.c.h.s8.bf16 %v524
        %v1497 = vunpack.c.h.s8.bf16 %v525
        %v1498 = vunpack.c.l.s8.bf16 %v526
        %v1499 = vunpack.c.l.s8.bf16 %v527
        %v1500 = vunpack.c.l.s8.bf16 %v528
        %v1501 = vunpack.c.l.s8.bf16 %v529
        %v1502 = vunpack.c.h.s8.bf16 %v526
        %v1503 = vunpack.c.h.s8.bf16 %v527
        %v1504 = vunpack.c.h.s8.bf16 %v528
        %v1505 = vunpack.c.h.s8.bf16 %v529
        %v1506 = vunpack.c.l.s8.bf16 %v530
        %v1507 = vunpack.c.l.s8.bf16 %v531
        %v1508 = vunpack.c.l.s8.bf16 %v532
        %v1509 = vunpack.c.l.s8.bf16 %v533
        %v1510 = vunpack.c.h.s8.bf16 %v530
        %v1511 = vunpack.c.h.s8.bf16 %v531
        %v1512 = vunpack.c.h.s8.bf16 %v532
        %v1513 = vunpack.c.h.s8.bf16 %v533
        %v1514 = vunpack.c.l.s8.bf16 %v534
        %v1515 = vunpack.c.l.s8.bf16 %v535
        %v1516 = vunpack.c.l.s8.bf16 %v536
        %v1517 = vunpack.c.l.s8.bf16 %v537
        %v1518 = vunpack.c.h.s8.bf16 %v534
        %v1519 = vunpack.c.h.s8.bf16 %v535
        %v1520 = vunpack.c.h.s8.bf16 %v536
        %v1521 = vunpack.c.h.s8.bf16 %v537
        %v1522 = vunpack.c.l.s8.bf16 %v538
        %v1523 = vunpack.c.l.s8.bf16 %v539
        %v1524 = vunpack.c.l.s8.bf16 %v540
        %v1525 = vunpack.c.l.s8.bf16 %v541
        %v1526 = vunpack.c.h.s8.bf16 %v538
        %v1527 = vunpack.c.h.s8.bf16 %v539
        %v1528 = vunpack.c.h.s8.bf16 %v540
        %v1529 = vunpack.c.h.s8.bf16 %v541
        %v1530 = vunpack.c.l.s8.bf16 %v542
        %v1531 = vunpack.c.l.s8.bf16 %v543
        %v1532 = vunpack.c.l.s8.bf16 %v544
        %v1533 = vunpack.c.l.s8.bf16 %v545
        %v1534 = vunpack.c.h.s8.bf16 %v542
        %v1535 = vunpack.c.h.s8.bf16 %v543
        %v1536 = vunpack.c.h.s8.bf16 %v544
        %v1537 = vunpack.c.h.s8.bf16 %v545
        %v1538 = vunpack.c.l.s8.bf16 %v546
        %v1539 = vunpack.c.l.s8.bf16 %v547
        %v1540 = vunpack.c.l.s8.bf16 %v548
        %v1541 = vunpack.c.l.s8.bf16 %v549
        %v1542 = vunpack.c.h.s8.bf16 %v546
        %v1543 = vunpack.c.h.s8.bf16 %v547
        %v1544 = vunpack.c.h.s8.bf16 %v548
        %v1545 = vunpack.c.h.s8.bf16 %v549
        %v1546 = vunpack.c.l.s8.bf16 %v550
        %v1547 = vunpack.c.l.s8.bf16 %v551
        %v1548 = vunpack.c.l.s8.bf16 %v552
        %v1549 = vunpack.c.l.s8.bf16 %v553
        %v1550 = vunpack.c.h.s8.bf16 %v550
        %v1551 = vunpack.c.h.s8.bf16 %v551
        %v1552 = vunpack.c.h.s8.bf16 %v552
        %v1553 = vunpack.c.h.s8.bf16 %v553
        %v1554 = vunpack.c.l.s8.bf16 %v554
        %v1555 = vunpack.c.l.s8.bf16 %v555
        %v1556 = vunpack.c.l.s8.bf16 %v556
        %v1557 = vunpack.c.l.s8.bf16 %v557
        %v1558 = vunpack.c.h.s8.bf16 %v554
        %v1559 = vunpack.c.h.s8.bf16 %v555
        %v1560 = vunpack.c.h.s8.bf16 %v556
        %v1561 = vunpack.c.h.s8.bf16 %v557
        %v1562 = vunpack.c.l.s8.bf16 %v558
        %v1563 = vunpack.c.l.s8.bf16 %v559
        %v1564 = vunpack.c.l.s8.bf16 %v560
        %v1565 = vunpack.c.l.s8.bf16 %v561
        %v1566 = vunpack.c.h.s8.bf16 %v558
        %v1567 = vunpack.c.h.s8.bf16 %v559
        %v1568 = vunpack.c.h.s8.bf16 %v560
        %v1569 = vunpack.c.h.s8.bf16 %v561
        %v1570 = vunpack.c.l.s8.bf16 %v562
        %v1571 = vunpack.c.l.s8.bf16 %v563
        %v1572 = vunpack.c.l.s8.bf16 %v564
        %v1573 = vunpack.c.l.s8.bf16 %v565
        %v1574 = vunpack.c.h.s8.bf16 %v562
        %v1575 = vunpack.c.h.s8.bf16 %v563
        %v1576 = vunpack.c.h.s8.bf16 %v564
        %v1577 = vunpack.c.h.s8.bf16 %v565
        %v1578 = vunpack.c.l.s8.bf16 %v566
        %v1579 = vunpack.c.l.s8.bf16 %v567
        %v1580 = vunpack.c.l.s8.bf16 %v568
        %v1581 = vunpack.c.l.s8.bf16 %v569
        %v1582 = vunpack.c.h.s8.bf16 %v566
        %v1583 = vunpack.c.h.s8.bf16 %v567
        %v1584 = vunpack.c.h.s8.bf16 %v568
        %v1585 = vunpack.c.h.s8.bf16 %v569
        %v1586 = vunpack.c.l.s8.bf16 %v570
        %v1587 = vunpack.c.l.s8.bf16 %v571
        %v1588 = vunpack.c.l.s8.bf16 %v572
        %v1589 = vunpack.c.l.s8.bf16 %v573
        %v1590 = vunpack.c.h.s8.bf16 %v570
        %v1591 = vunpack.c.h.s8.bf16 %v571
        %v1592 = vunpack.c.h.s8.bf16 %v572
        %v1593 = vunpack.c.h.s8.bf16 %v573
        %v1594 = vunpack.c.l.s8.bf16 %v574
        %v1595 = vunpack.c.l.s8.bf16 %v575
        %v1596 = vunpack.c.l.s8.bf16 %v576
        %v1597 = vunpack.c.l.s8.bf16 %v577
        %v1598 = vunpack.c.h.s8.bf16 %v574
        %v1599 = vunpack.c.h.s8.bf16 %v575
        %v1600 = vunpack.c.h.s8.bf16 %v576
        %v1601 = vunpack.c.h.s8.bf16 %v577
        %v1602 = vunpack.c.l.s8.bf16 %v578
        %v1603 = vunpack.c.l.s8.bf16 %v579
        %v1604 = vunpack.c.l.s8.bf16 %v580
        %v1605 = vunpack.c.l.s8.bf16 %v581
        %v1606 = vunpack.c.h.s8.bf16 %v578
        %v1607 = vunpack.c.h.s8.bf16 %v579
        %v1608 = vunpack.c.h.s8.bf16 %v580
        %v1609 = vunpack.c.h.s8.bf16 %v581
        %v1610 = vunpack.c.l.s8.bf16 %v582
        %v1611 = vunpack.c.l.s8.bf16 %v583
        %v1612 = vunpack.c.l.s8.bf16 %v584
        %v1613 = vunpack.c.l.s8.bf16 %v585
        %v1614 = vunpack.c.h.s8.bf16 %v582
        %v1615 = vunpack.c.h.s8.bf16 %v583
        %v1616 = vunpack.c.h.s8.bf16 %v584
        %v1617 = vunpack.c.h.s8.bf16 %v585
        %v1618 = vunpack.c.l.s8.bf16 %v586
        %v1619 = vunpack.c.l.s8.bf16 %v587
        %v1620 = vunpack.c.l.s8.bf16 %v588
        %v1621 = vunpack.c.l.s8.bf16 %v589
        %v1622 = vunpack.c.h.s8.bf16 %v586
        %v1623 = vunpack.c.h.s8.bf16 %v587
        %v1624 = vunpack.c.h.s8.bf16 %v588
        %v1625 = vunpack.c.h.s8.bf16 %v589
        %v1626 = vunpack.c.l.s8.bf16 %v590
        %v1627 = vunpack.c.l.s8.bf16 %v591
        %v1628 = vunpack.c.l.s8.bf16 %v592
        %v1629 = vunpack.c.l.s8.bf16 %v593
        %v1630 = vunpack.c.h.s8.bf16 %v590
        %v1631 = vunpack.c.h.s8.bf16 %v591
        %v1632 = vunpack.c.h.s8.bf16 %v592
        %v1633 = vunpack.c.h.s8.bf16 %v593
        %v1634 = vunpack.c.l.s8.bf16 %v594
        %v1635 = vunpack.c.l.s8.bf16 %v595
        %v1636 = vunpack.c.l.s8.bf16 %v596
        %v1637 = vunpack.c.l.s8.bf16 %v597
        %v1638 = vunpack.c.h.s8.bf16 %v594
        %v1639 = vunpack.c.h.s8.bf16 %v595
        %v1640 = vunpack.c.h.s8.bf16 %v596
        %v1641 = vunpack.c.h.s8.bf16 %v597
        %v1642 = vunpack.c.l.s8.bf16 %v598
        %v1643 = vunpack.c.l.s8.bf16 %v599
        %v1644 = vunpack.c.l.s8.bf16 %v600
        %v1645 = vunpack.c.l.s8.bf16 %v601
        %v1646 = vunpack.c.h.s8.bf16 %v598
        %v1647 = vunpack.c.h.s8.bf16 %v599
        %v1648 = vunpack.c.h.s8.bf16 %v600
        %v1649 = vunpack.c.h.s8.bf16 %v601
        %v1650 = vunpack.c.l.s8.bf16 %v602
        %v1651 = vunpack.c.l.s8.bf16 %v603
        %v1652 = vunpack.c.l.s8.bf16 %v604
        %v1653 = vunpack.c.l.s8.bf16 %v605
        %v1654 = vunpack.c.h.s8.bf16 %v602
        %v1655 = vunpack.c.h.s8.bf16 %v603
        %v1656 = vunpack.c.h.s8.bf16 %v604
        %v1657 = vunpack.c.h.s8.bf16 %v605
        %v1658 = vunpack.c.l.s8.bf16 %v606
        %v1659 = vunpack.c.l.s8.bf16 %v607
        %v1660 = vunpack.c.l.s8.bf16 %v608
        %v1661 = vunpack.c.l.s8.bf16 %v609
        %v1662 = vunpack.c.h.s8.bf16 %v606
        %v1663 = vunpack.c.h.s8.bf16 %v607
        %v1664 = vunpack.c.h.s8.bf16 %v608
        %v1665 = vunpack.c.h.s8.bf16 %v609
        %v1666 = vunpack.c.l.s8.bf16 %v610
        %v1667 = vunpack.c.l.s8.bf16 %v611
        %v1668 = vunpack.c.l.s8.bf16 %v612
        %v1669 = vunpack.c.l.s8.bf16 %v613
        %v1670 = vunpack.c.h.s8.bf16 %v610
        %v1671 = vunpack.c.h.s8.bf16 %v611
        %v1672 = vunpack.c.h.s8.bf16 %v612
        %v1673 = vunpack.c.h.s8.bf16 %v613
        %v1674 = vunpack.c.l.s8.bf16 %v614
        %v1675 = vunpack.c.l.s8.bf16 %v615
        %v1676 = vunpack.c.l.s8.bf16 %v616
        %v1677 = vunpack.c.l.s8.bf16 %v617
        %v1678 = vunpack.c.h.s8.bf16 %v614
        %v1679 = vunpack.c.h.s8.bf16 %v615
        %v1680 = vunpack.c.h.s8.bf16 %v616
        %v1681 = vunpack.c.h.s8.bf16 %v617
        %v1682 = vunpack.c.l.s8.bf16 %v618
        %v1683 = vunpack.c.l.s8.bf16 %v619
        %v1684 = vunpack.c.l.s8.bf16 %v620
        %v1685 = vunpack.c.l.s8.bf16 %v621
        %v1686 = vunpack.c.h.s8.bf16 %v618
        %v1687 = vunpack.c.h.s8.bf16 %v619
        %v1688 = vunpack.c.h.s8.bf16 %v620
        %v1689 = vunpack.c.h.s8.bf16 %v621
        %v1690 = vunpack.c.l.s8.bf16 %v622
        %v1691 = vunpack.c.l.s8.bf16 %v623
        %v1692 = vunpack.c.l.s8.bf16 %v624
        %v1693 = vunpack.c.l.s8.bf16 %v625
        %v1694 = vunpack.c.h.s8.bf16 %v622
        %v1695 = vunpack.c.h.s8.bf16 %v623
        %v1696 = vunpack.c.h.s8.bf16 %v624
        %v1697 = vunpack.c.h.s8.bf16 %v625
        %v1698 = vunpack.c.l.s8.bf16 %v626
        %v1699 = vunpack.c.l.s8.bf16 %v627
        %v1700 = vunpack.c.l.s8.bf16 %v628
        %v1701 = vunpack.c.l.s8.bf16 %v629
        %v1702 = vunpack.c.h.s8.bf16 %v626
        %v1703 = vunpack.c.h.s8.bf16 %v627
        %v1704 = vunpack.c.h.s8.bf16 %v628
        %v1705 = vunpack.c.h.s8.bf16 %v629
        %v1706 = vunpack.c.l.s8.bf16 %v630
        %v1707 = vunpack.c.l.s8.bf16 %v631
        %v1708 = vunpack.c.l.s8.bf16 %v632
        %v1709 = vunpack.c.l.s8.bf16 %v633
        %v1710 = vunpack.c.h.s8.bf16 %v630
        %v1711 = vunpack.c.h.s8.bf16 %v631
        %v1712 = vunpack.c.h.s8.bf16 %v632
        %v1713 = vunpack.c.h.s8.bf16 %v633
        %v1714 = vunpack.c.l.s8.bf16 %v634
        %v1715 = vunpack.c.l.s8.bf16 %v635
        %v1716 = vunpack.c.l.s8.bf16 %v636
        %v1717 = vunpack.c.l.s8.bf16 %v637
        %v1718 = vunpack.c.h.s8.bf16 %v634
        %v1719 = vunpack.c.h.s8.bf16 %v635
        %v1720 = vunpack.c.h.s8.bf16 %v636
        %v1721 = vunpack.c.h.s8.bf16 %v637
        %v1722 = vunpack.c.l.s8.bf16 %v638
        %v1723 = vunpack.c.l.s8.bf16 %v639
        %v1724 = vunpack.c.l.s8.bf16 %v640
        %v1725 = vunpack.c.l.s8.bf16 %v641
        %v1726 = vunpack.c.h.s8.bf16 %v638
        %v1727 = vunpack.c.h.s8.bf16 %v639
        %v1728 = vunpack.c.h.s8.bf16 %v640
        %v1729 = vunpack.c.h.s8.bf16 %v641
        %v1730 = vunpack.c.l.s8.bf16 %v642
        %v1731 = vunpack.c.l.s8.bf16 %v643
        %v1732 = vunpack.c.l.s8.bf16 %v644
        %v1733 = vunpack.c.l.s8.bf16 %v645
        %v1734 = vunpack.c.h.s8.bf16 %v642
        %v1735 = vunpack.c.h.s8.bf16 %v643
        %v1736 = vunpack.c.h.s8.bf16 %v644
        %v1737 = vunpack.c.h.s8.bf16 %v645
        %v1738 = vunpack.c.l.s8.bf16 %v646
        %v1739 = vunpack.c.l.s8.bf16 %v647
        %v1740 = vunpack.c.l.s8.bf16 %v648
        %v1741 = vunpack.c.l.s8.bf16 %v649
        %v1742 = vunpack.c.h.s8.bf16 %v646
        %v1743 = vunpack.c.h.s8.bf16 %v647
        %v1744 = vunpack.c.h.s8.bf16 %v648
        %v1745 = vunpack.c.h.s8.bf16 %v649
        %v1746 = vunpack.c.l.s8.bf16 %v650
        %v1747 = vunpack.c.l.s8.bf16 %v651
        %v1748 = vunpack.c.l.s8.bf16 %v652
        %v1749 = vunpack.c.l.s8.bf16 %v653
        %v1750 = vunpack.c.h.s8.bf16 %v650
        %v1751 = vunpack.c.h.s8.bf16 %v651
        %v1752 = vunpack.c.h.s8.bf16 %v652
        %v1753 = vunpack.c.h.s8.bf16 %v653
        %v1754 = vunpack.c.l.s8.bf16 %v654
        %v1755 = vunpack.c.l.s8.bf16 %v655
        %v1756 = vunpack.c.l.s8.bf16 %v656
        %v1757 = vunpack.c.l.s8.bf16 %v657
        %v1758 = vunpack.c.h.s8.bf16 %v654
        %v1759 = vunpack.c.h.s8.bf16 %v655
        %v1760 = vunpack.c.h.s8.bf16 %v656
        %v1761 = vunpack.c.h.s8.bf16 %v657
        %v1762 = vunpack.c.l.s8.bf16 %v658
        %v1763 = vunpack.c.l.s8.bf16 %v659
        %v1764 = vunpack.c.l.s8.bf16 %v660
        %v1765 = vunpack.c.l.s8.bf16 %v661
        %v1766 = vunpack.c.h.s8.bf16 %v658
        %v1767 = vunpack.c.h.s8.bf16 %v659
        %v1768 = vunpack.c.h.s8.bf16 %v660
        %v1769 = vunpack.c.h.s8.bf16 %v661
        %v1770 = vunpack.c.l.s8.bf16 %v662
        %v1771 = vunpack.c.l.s8.bf16 %v663
        %v1772 = vunpack.c.l.s8.bf16 %v664
        %v1773 = vunpack.c.l.s8.bf16 %v665
        %v1774 = vunpack.c.h.s8.bf16 %v662
        %v1775 = vunpack.c.h.s8.bf16 %v663
        %v1776 = vunpack.c.h.s8.bf16 %v664
        %v1777 = vunpack.c.h.s8.bf16 %v665
        %v1778 = vunpack.c.l.s8.bf16 %v666
        %v1779 = vunpack.c.l.s8.bf16 %v667
        %v1780 = vunpack.c.l.s8.bf16 %v668
        %v1781 = vunpack.c.l.s8.bf16 %v669
        %v1782 = vunpack.c.h.s8.bf16 %v666
        %v1783 = vunpack.c.h.s8.bf16 %v667
        %v1784 = vunpack.c.h.s8.bf16 %v668
        %v1785 = vunpack.c.h.s8.bf16 %v669
        %v1786 = vunpack.c.l.s8.bf16 %v670
        %v1787 = vunpack.c.l.s8.bf16 %v671
        %v1788 = vunpack.c.l.s8.bf16 %v672
        %v1789 = vunpack.c.l.s8.bf16 %v673
        %v1790 = vunpack.c.h.s8.bf16 %v670
        %v1791 = vunpack.c.h.s8.bf16 %v671
        %v1792 = vunpack.c.h.s8.bf16 %v672
        %v1793 = vunpack.c.h.s8.bf16 %v673
        %v1794 = vunpack.c.l.s8.bf16 %v674
        %v1795 = vunpack.c.l.s8.bf16 %v675
        %v1796 = vunpack.c.l.s8.bf16 %v676
        %v1797 = vunpack.c.l.s8.bf16 %v677
        %v1798 = vunpack.c.h.s8.bf16 %v674
        %v1799 = vunpack.c.h.s8.bf16 %v675
        %v1800 = vunpack.c.h.s8.bf16 %v676
        %v1801 = vunpack.c.h.s8.bf16 %v677
        %v1802 = vunpack.c.l.s8.bf16 %v678
        %v1803 = vunpack.c.l.s8.bf16 %v679
        %v1804 = vunpack.c.l.s8.bf16 %v680
        %v1805 = vunpack.c.l.s8.bf16 %v681
        %v1806 = vunpack.c.h.s8.bf16 %v678
        %v1807 = vunpack.c.h.s8.bf16 %v679
        %v1808 = vunpack.c.h.s8.bf16 %v680
        %v1809 = vunpack.c.h.s8.bf16 %v681
        %v1810 = vunpack.c.l.s8.bf16 %v682
        %v1811 = vunpack.c.l.s8.bf16 %v683
        %v1812 = vunpack.c.l.s8.bf16 %v684
        %v1813 = vunpack.c.l.s8.bf16 %v685
        %v1814 = vunpack.c.h.s8.bf16 %v682
        %v1815 = vunpack.c.h.s8.bf16 %v683
        %v1816 = vunpack.c.h.s8.bf16 %v684
        %v1817 = vunpack.c.h.s8.bf16 %v685
        %v1818 = vunpack.c.l.s8.bf16 %v686
        %v1819 = vunpack.c.l.s8.bf16 %v687
        %v1820 = vunpack.c.l.s8.bf16 %v688
        %v1821 = vunpack.c.l.s8.bf16 %v689
        %v1822 = vunpack.c.h.s8.bf16 %v686
        %v1823 = vunpack.c.h.s8.bf16 %v687
        %v1824 = vunpack.c.h.s8.bf16 %v688
        %v1825 = vunpack.c.h.s8.bf16 %v689
        %v1826 = vunpack.c.l.s8.bf16 %v690
        %v1827 = vunpack.c.l.s8.bf16 %v691
        %v1828 = vunpack.c.l.s8.bf16 %v692
        %v1829 = vunpack.c.l.s8.bf16 %v693
        %v1830 = vunpack.c.h.s8.bf16 %v690
        %v1831 = vunpack.c.h.s8.bf16 %v691
        %v1832 = vunpack.c.h.s8.bf16 %v692
        %v1833 = vunpack.c.h.s8.bf16 %v693
        %v1834 = vunpack.c.l.s8.bf16 %v694
        %v1835 = vunpack.c.l.s8.bf16 %v695
        %v1836 = vunpack.c.l.s8.bf16 %v696
        %v1837 = vunpack.c.l.s8.bf16 %v697
        %v1838 = vunpack.c.h.s8.bf16 %v694
        %v1839 = vunpack.c.h.s8.bf16 %v695
        %v1840 = vunpack.c.h.s8.bf16 %v696
        %v1841 = vunpack.c.h.s8.bf16 %v697
        %v1842 = vunpack.c.l.s8.bf16 %v698
        %v1843 = vunpack.c.l.s8.bf16 %v699
        %v1844 = vunpack.c.l.s8.bf16 %v700
        %v1845 = vunpack.c.l.s8.bf16 %v701
        %v1846 = vunpack.c.h.s8.bf16 %v698
        %v1847 = vunpack.c.h.s8.bf16 %v699
        %v1848 = vunpack.c.h.s8.bf16 %v700
        %v1849 = vunpack.c.h.s8.bf16 %v701
        %v1850 = vunpack.c.l.s8.bf16 %v702
        %v1851 = vunpack.c.l.s8.bf16 %v703
        %v1852 = vunpack.c.l.s8.bf16 %v704
        %v1853 = vunpack.c.l.s8.bf16 %v705
        %v1854 = vunpack.c.h.s8.bf16 %v702
        %v1855 = vunpack.c.h.s8.bf16 %v703
        %v1856 = vunpack.c.h.s8.bf16 %v704
        %v1857 = vunpack.c.h.s8.bf16 %v705
        %v1858 = vunpack.c.l.s8.bf16 %v706
        %v1859 = vunpack.c.l.s8.bf16 %v707
        %v1860 = vunpack.c.l.s8.bf16 %v708
        %v1861 = vunpack.c.l.s8.bf16 %v709
        %v1862 = vunpack.c.h.s8.bf16 %v706
        %v1863 = vunpack.c.h.s8.bf16 %v707
        %v1864 = vunpack.c.h.s8.bf16 %v708
        %v1865 = vunpack.c.h.s8.bf16 %v709
        %v1866 = vunpack.c.l.s8.bf16 %v710
        %v1867 = vunpack.c.l.s8.bf16 %v711
        %v1868 = vunpack.c.l.s8.bf16 %v712
        %v1869 = vunpack.c.l.s8.bf16 %v713
        %v1870 = vunpack.c.h.s8.bf16 %v710
        %v1871 = vunpack.c.h.s8.bf16 %v711
        %v1872 = vunpack.c.h.s8.bf16 %v712
        %v1873 = vunpack.c.h.s8.bf16 %v713
        %v1874 = vunpack.c.l.s8.bf16 %v714
        %v1875 = vunpack.c.l.s8.bf16 %v715
        %v1876 = vunpack.c.l.s8.bf16 %v716
        %v1877 = vunpack.c.l.s8.bf16 %v717
        %v1878 = vunpack.c.h.s8.bf16 %v714
        %v1879 = vunpack.c.h.s8.bf16 %v715
        %v1880 = vunpack.c.h.s8.bf16 %v716
        %v1881 = vunpack.c.h.s8.bf16 %v717
        %v1882 = vunpack.c.l.s8.bf16 %v718
        %v1883 = vunpack.c.l.s8.bf16 %v719
        %v1884 = vunpack.c.l.s8.bf16 %v720
        %v1885 = vunpack.c.l.s8.bf16 %v721
        %v1886 = vunpack.c.h.s8.bf16 %v718
        %v1887 = vunpack.c.h.s8.bf16 %v719
        %v1888 = vunpack.c.h.s8.bf16 %v720
        %v1889 = vunpack.c.h.s8.bf16 %v721
        %v1890 = vunpack.c.l.s8.bf16 %v722
        %v1891 = vunpack.c.l.s8.bf16 %v723
        %v1892 = vunpack.c.l.s8.bf16 %v724
        %v1893 = vunpack.c.l.s8.bf16 %v725
        %v1894 = vunpack.c.h.s8.bf16 %v722
        %v1895 = vunpack.c.h.s8.bf16 %v723
        %v1896 = vunpack.c.h.s8.bf16 %v724
        %v1897 = vunpack.c.h.s8.bf16 %v725
        %v1898 = vunpack.c.l.s8.bf16 %v726
        %v1899 = vunpack.c.l.s8.bf16 %v727
        %v1900 = vunpack.c.l.s8.bf16 %v728
        %v1901 = vunpack.c.l.s8.bf16 %v729
        %v1902 = vunpack.c.h.s8.bf16 %v726
        %v1903 = vunpack.c.h.s8.bf16 %v727
        %v1904 = vunpack.c.h.s8.bf16 %v728
        %v1905 = vunpack.c.h.s8.bf16 %v729
        %v1906 = vunpack.c.l.s8.bf16 %v730
        %v1907 = vunpack.c.l.s8.bf16 %v731
        %v1908 = vunpack.c.l.s8.bf16 %v732
        %v1909 = vunpack.c.l.s8.bf16 %v733
        %v1910 = vunpack.c.h.s8.bf16 %v730
        %v1911 = vunpack.c.h.s8.bf16 %v731
        %v1912 = vunpack.c.h.s8.bf16 %v732
        %v1913 = vunpack.c.h.s8.bf16 %v733
        %v1914 = vunpack.c.l.s8.bf16 %v734
        %v1915 = vunpack.c.l.s8.bf16 %v735
        %v1916 = vunpack.c.l.s8.bf16 %v736
        %v1917 = vunpack.c.l.s8.bf16 %v737
        %v1918 = vunpack.c.h.s8.bf16 %v734
        %v1919 = vunpack.c.h.s8.bf16 %v735
        %v1920 = vunpack.c.h.s8.bf16 %v736
        %v1921 = vunpack.c.h.s8.bf16 %v737
        %v1922 = vunpack.c.l.s8.bf16 %v738
        %v1923 = vunpack.c.l.s8.bf16 %v739
        %v1924 = vunpack.c.l.s8.bf16 %v740
        %v1925 = vunpack.c.l.s8.bf16 %v741
        %v1926 = vunpack.c.h.s8.bf16 %v738
        %v1927 = vunpack.c.h.s8.bf16 %v739
        %v1928 = vunpack.c.h.s8.bf16 %v740
        %v1929 = vunpack.c.h.s8.bf16 %v741
        %v1930 = vunpack.c.l.s8.bf16 %v742
        %v1931 = vunpack.c.l.s8.bf16 %v743
        %v1932 = vunpack.c.l.s8.bf16 %v744
        %v1933 = vunpack.c.l.s8.bf16 %v745
        %v1934 = vunpack.c.h.s8.bf16 %v742
        %v1935 = vunpack.c.h.s8.bf16 %v743
        %v1936 = vunpack.c.h.s8.bf16 %v744
        %v1937 = vunpack.c.h.s8.bf16 %v745
        %v1938 = vunpack.c.l.s8.bf16 %v746
        %v1939 = vunpack.c.l.s8.bf16 %v747
        %v1940 = vunpack.c.l.s8.bf16 %v748
        %v1941 = vunpack.c.l.s8.bf16 %v749
        %v1942 = vunpack.c.h.s8.bf16 %v746
        %v1943 = vunpack.c.h.s8.bf16 %v747
        %v1944 = vunpack.c.h.s8.bf16 %v748
        %v1945 = vunpack.c.h.s8.bf16 %v749
        %v1946 = vunpack.c.l.s8.bf16 %v750
        %v1947 = vunpack.c.l.s8.bf16 %v751
        %v1948 = vunpack.c.l.s8.bf16 %v752
        %v1949 = vunpack.c.l.s8.bf16 %v753
        %v1950 = vunpack.c.h.s8.bf16 %v750
        %v1951 = vunpack.c.h.s8.bf16 %v751
        %v1952 = vunpack.c.h.s8.bf16 %v752
        %v1953 = vunpack.c.h.s8.bf16 %v753
        %v1954 = vunpack.c.l.s8.bf16 %v754
        %v1955 = vunpack.c.l.s8.bf16 %v755
        %v1956 = vunpack.c.l.s8.bf16 %v756
        %v1957 = vunpack.c.l.s8.bf16 %v757
        %v1958 = vunpack.c.h.s8.bf16 %v754
        %v1959 = vunpack.c.h.s8.bf16 %v755
        %v1960 = vunpack.c.h.s8.bf16 %v756
        %v1961 = vunpack.c.h.s8.bf16 %v757
        %v1962 = vunpack.c.l.s8.bf16 %v758
        %v1963 = vunpack.c.l.s8.bf16 %v759
        %v1964 = vunpack.c.l.s8.bf16 %v760
        %v1965 = vunpack.c.l.s8.bf16 %v761
        %v1966 = vunpack.c.h.s8.bf16 %v758
        %v1967 = vunpack.c.h.s8.bf16 %v759
        %v1968 = vunpack.c.h.s8.bf16 %v760
        %v1969 = vunpack.c.h.s8.bf16 %v761
        %v1970 = vunpack.c.l.s8.bf16 %v762
        %v1971 = vunpack.c.l.s8.bf16 %v763
        %v1972 = vunpack.c.l.s8.bf16 %v764
        %v1973 = vunpack.c.l.s8.bf16 %v765
        %v1974 = vunpack.c.h.s8.bf16 %v762
        %v1975 = vunpack.c.h.s8.bf16 %v763
        %v1976 = vunpack.c.h.s8.bf16 %v764
        %v1977 = vunpack.c.h.s8.bf16 %v765
        %v1978 = vunpack.c.l.s8.bf16 %v766
        %v1979 = vunpack.c.l.s8.bf16 %v767
        %v1980 = vunpack.c.l.s8.bf16 %v768
        %v1981 = vunpack.c.l.s8.bf16 %v769
        %v1982 = vunpack.c.h.s8.bf16 %v766
        %v1983 = vunpack.c.h.s8.bf16 %v767
        %v1984 = vunpack.c.h.s8.bf16 %v768
        %v1985 = vunpack.c.h.s8.bf16 %v769
        %v1986 = vunpack.c.l.s8.bf16 %v770
        %v1987 = vunpack.c.l.s8.bf16 %v771
        %v1988 = vunpack.c.l.s8.bf16 %v772
        %v1989 = vunpack.c.l.s8.bf16 %v773
        %v1990 = vunpack.c.h.s8.bf16 %v770
        %v1991 = vunpack.c.h.s8.bf16 %v771
        %v1992 = vunpack.c.h.s8.bf16 %v772
        %v1993 = vunpack.c.h.s8.bf16 %v773
        %v1994 = vunpack.c.l.s8.bf16 %v774
        %v1995 = vunpack.c.l.s8.bf16 %v775
        %v1996 = vunpack.c.l.s8.bf16 %v776
        %v1997 = vunpack.c.l.s8.bf16 %v777
        %v1998 = vunpack.c.h.s8.bf16 %v774
        %v1999 = vunpack.c.h.s8.bf16 %v775
        %v2000 = vunpack.c.h.s8.bf16 %v776
        %v2001 = vunpack.c.h.s8.bf16 %v777
        %v2002 = vunpack.c.l.s8.bf16 %v778
        %v2003 = vunpack.c.l.s8.bf16 %v779
        %v2004 = vunpack.c.l.s8.bf16 %v780
        %v2005 = vunpack.c.l.s8.bf16 %v781
        %v2006 = vunpack.c.h.s8.bf16 %v778
        %v2007 = vunpack.c.h.s8.bf16 %v779
        %v2008 = vunpack.c.h.s8.bf16 %v780
        %v2009 = vunpack.c.h.s8.bf16 %v781
        %v2010 = vunpack.c.l.s8.bf16 %v782
        %v2011 = vunpack.c.l.s8.bf16 %v783
        %v2012 = vunpack.c.l.s8.bf16 %v784
        %v2013 = vunpack.c.l.s8.bf16 %v785
        %v2014 = vunpack.c.h.s8.bf16 %v782
        %v2015 = vunpack.c.h.s8.bf16 %v783
        %v2016 = vunpack.c.h.s8.bf16 %v784
        %v2017 = vunpack.c.h.s8.bf16 %v785
        %v2018 = vunpack.c.l.s8.bf16 %v786
        %v2019 = vunpack.c.l.s8.bf16 %v787
        %v2020 = vunpack.c.l.s8.bf16 %v788
        %v2021 = vunpack.c.l.s8.bf16 %v789
        %v2022 = vunpack.c.h.s8.bf16 %v786
        %v2023 = vunpack.c.h.s8.bf16 %v787
        %v2024 = vunpack.c.h.s8.bf16 %v788
        %v2025 = vunpack.c.h.s8.bf16 %v789
        %v2026 = vunpack.c.l.s8.bf16 %v790
        %v2027 = vunpack.c.l.s8.bf16 %v791
        %v2028 = vunpack.c.l.s8.bf16 %v792
        %v2029 = vunpack.c.l.s8.bf16 %v793
        %v2030 = vunpack.c.h.s8.bf16 %v790
        %v2031 = vunpack.c.h.s8.bf16 %v791
        %v2032 = vunpack.c.h.s8.bf16 %v792
        %v2033 = vunpack.c.h.s8.bf16 %v793
        %v2034 = vunpack.c.l.s8.bf16 %v794
        %v2035 = vunpack.c.l.s8.bf16 %v795
        %v2036 = vunpack.c.l.s8.bf16 %v796
        %v2037 = vunpack.c.l.s8.bf16 %v797
        %v2038 = vunpack.c.h.s8.bf16 %v794
        %v2039 = vunpack.c.h.s8.bf16 %v795
        %v2040 = vunpack.c.h.s8.bf16 %v796
        %v2041 = vunpack.c.h.s8.bf16 %v797
        %v2042 = vunpack.c.l.s8.bf16 %v798
        %v2043 = vunpack.c.l.s8.bf16 %v799
        %v2044 = vunpack.c.l.s8.bf16 %v800
        %v2045 = vunpack.c.l.s8.bf16 %v801
        %v2046 = vunpack.c.h.s8.bf16 %v798
        %v2047 = vunpack.c.h.s8.bf16 %v799
        %v2048 = vunpack.c.h.s8.bf16 %v800
        %v2049 = vunpack.c.h.s8.bf16 %v801
        %v2050 = vunpack.c.l.s8.bf16 %v802
        %v2051 = vunpack.c.l.s8.bf16 %v803
        %v2052 = vunpack.c.l.s8.bf16 %v804
        %v2053 = vunpack.c.l.s8.bf16 %v805
        %v2054 = vunpack.c.h.s8.bf16 %v802
        %v2055 = vunpack.c.h.s8.bf16 %v803
        %v2056 = vunpack.c.h.s8.bf16 %v804
        %v2057 = vunpack.c.h.s8.bf16 %v805
        %v2058 = vunpack.c.l.s8.bf16 %v806
        %v2059 = vunpack.c.l.s8.bf16 %v807
        %v2060 = vunpack.c.l.s8.bf16 %v808
        %v2061 = vunpack.c.l.s8.bf16 %v809
        %v2062 = vunpack.c.h.s8.bf16 %v806
        %v2063 = vunpack.c.h.s8.bf16 %v807
        %v2064 = vunpack.c.h.s8.bf16 %v808
        %v2065 = vunpack.c.h.s8.bf16 %v809
        %v2066 = vunpack.c.l.s8.bf16 %v810
        %v2067 = vunpack.c.l.s8.bf16 %v811
        %v2068 = vunpack.c.l.s8.bf16 %v812
        %v2069 = vunpack.c.l.s8.bf16 %v813
        %v2070 = vunpack.c.h.s8.bf16 %v810
        %v2071 = vunpack.c.h.s8.bf16 %v811
        %v2072 = vunpack.c.h.s8.bf16 %v812
        %v2073 = vunpack.c.h.s8.bf16 %v813
        %v2074 = vunpack.c.l.s8.bf16 %v814
        %v2075 = vunpack.c.l.s8.bf16 %v815
        %v2076 = vunpack.c.l.s8.bf16 %v816
        %v2077 = vunpack.c.l.s8.bf16 %v817
        %v2078 = vunpack.c.h.s8.bf16 %v814
        %v2079 = vunpack.c.h.s8.bf16 %v815
        %v2080 = vunpack.c.h.s8.bf16 %v816
        %v2081 = vunpack.c.h.s8.bf16 %v817
        %v2082 = vunpack.c.l.s8.bf16 %v818
        %v2083 = vunpack.c.l.s8.bf16 %v819
        %v2084 = vunpack.c.l.s8.bf16 %v820
        %v2085 = vunpack.c.l.s8.bf16 %v821
        %v2086 = vunpack.c.h.s8.bf16 %v818
        %v2087 = vunpack.c.h.s8.bf16 %v819
        %v2088 = vunpack.c.h.s8.bf16 %v820
        %v2089 = vunpack.c.h.s8.bf16 %v821
        %v2090 = vunpack.c.l.s8.bf16 %v822
        %v2091 = vunpack.c.l.s8.bf16 %v823
        %v2092 = vunpack.c.l.s8.bf16 %v824
        %v2093 = vunpack.c.l.s8.bf16 %v825
        %v2094 = vunpack.c.h.s8.bf16 %v822
        %v2095 = vunpack.c.h.s8.bf16 %v823
        %v2096 = vunpack.c.h.s8.bf16 %v824
        %v2097 = vunpack.c.h.s8.bf16 %v825
        %v2098 = vunpack.c.l.s8.bf16 %v826
        %v2099 = vunpack.c.l.s8.bf16 %v827
        %v2100 = vunpack.c.l.s8.bf16 %v828
        %v2101 = vunpack.c.l.s8.bf16 %v829
        %v2102 = vunpack.c.h.s8.bf16 %v826
        %v2103 = vunpack.c.h.s8.bf16 %v827
        %v2104 = vunpack.c.h.s8.bf16 %v828
        %v2105 = vunpack.c.h.s8.bf16 %v829
        %v2106 = vunpack.c.l.s8.bf16 %v830
        %v2107 = vunpack.c.l.s8.bf16 %v831
        %v2108 = vunpack.c.l.s8.bf16 %v832
        %v2109 = vunpack.c.l.s8.bf16 %v833
        %v2110 = vunpack.c.h.s8.bf16 %v830
        %v2111 = vunpack.c.h.s8.bf16 %v831
        %v2112 = vunpack.c.h.s8.bf16 %v832
        %v2113 = vunpack.c.h.s8.bf16 %v833
        %v2114 = vunpack.c.l.s8.bf16 %v834
        %v2115 = vunpack.c.l.s8.bf16 %v835
        %v2116 = vunpack.c.l.s8.bf16 %v836
        %v2117 = vunpack.c.l.s8.bf16 %v837
        %v2118 = vunpack.c.h.s8.bf16 %v834
        %v2119 = vunpack.c.h.s8.bf16 %v835
        %v2120 = vunpack.c.h.s8.bf16 %v836
        %v2121 = vunpack.c.h.s8.bf16 %v837
        %v2122 = vunpack.c.l.s8.bf16 %v838
        %v2123 = vunpack.c.l.s8.bf16 %v839
        %v2124 = vunpack.c.l.s8.bf16 %v840
        %v2125 = vunpack.c.l.s8.bf16 %v841
        %v2126 = vunpack.c.h.s8.bf16 %v838
        %v2127 = vunpack.c.h.s8.bf16 %v839
        %v2128 = vunpack.c.h.s8.bf16 %v840
        %v2129 = vunpack.c.h.s8.bf16 %v841
        %v2130 = vunpack.c.l.s8.bf16 %v842
        %v2131 = vunpack.c.l.s8.bf16 %v843
        %v2132 = vunpack.c.l.s8.bf16 %v844
        %v2133 = vunpack.c.l.s8.bf16 %v845
        %v2134 = vunpack.c.h.s8.bf16 %v842
        %v2135 = vunpack.c.h.s8.bf16 %v843
        %v2136 = vunpack.c.h.s8.bf16 %v844
        %v2137 = vunpack.c.h.s8.bf16 %v845
        %v2138 = vunpack.c.l.s8.bf16 %v846
        %v2139 = vunpack.c.l.s8.bf16 %v847
        %v2140 = vunpack.c.l.s8.bf16 %v848
        %v2141 = vunpack.c.l.s8.bf16 %v849
        %v2142 = vunpack.c.h.s8.bf16 %v846
        %v2143 = vunpack.c.h.s8.bf16 %v847
        %v2144 = vunpack.c.h.s8.bf16 %v848
        %v2145 = vunpack.c.h.s8.bf16 %v849
        %v2146 = vunpack.c.l.s8.bf16 %v850
        %v2147 = vunpack.c.l.s8.bf16 %v851
        %v2148 = vunpack.c.l.s8.bf16 %v852
        %v2149 = vunpack.c.l.s8.bf16 %v853
        %v2150 = vunpack.c.h.s8.bf16 %v850
        %v2151 = vunpack.c.h.s8.bf16 %v851
        %v2152 = vunpack.c.h.s8.bf16 %v852
        %v2153 = vunpack.c.h.s8.bf16 %v853
        %v2154 = vunpack.c.l.s8.bf16 %v854
        %v2155 = vunpack.c.l.s8.bf16 %v855
        %v2156 = vunpack.c.l.s8.bf16 %v856
        %v2157 = vunpack.c.l.s8.bf16 %v857
        %v2158 = vunpack.c.h.s8.bf16 %v854
        %v2159 = vunpack.c.h.s8.bf16 %v855
        %v2160 = vunpack.c.h.s8.bf16 %v856
        %v2161 = vunpack.c.h.s8.bf16 %v857
        %v2162 = vunpack.c.l.s8.bf16 %v858
        %v2163 = vunpack.c.l.s8.bf16 %v859
        %v2164 = vunpack.c.l.s8.bf16 %v860
        %v2165 = vunpack.c.l.s8.bf16 %v861
        %v2166 = vunpack.c.h.s8.bf16 %v858
        %v2167 = vunpack.c.h.s8.bf16 %v859
        %v2168 = vunpack.c.h.s8.bf16 %v860
        %v2169 = vunpack.c.h.s8.bf16 %v861
        %v2170 = vunpack.c.l.s8.bf16 %v862
        %v2171 = vunpack.c.l.s8.bf16 %v863
        %v2172 = vunpack.c.l.s8.bf16 %v864
        %v2173 = vunpack.c.l.s8.bf16 %v865
        %v2174 = vunpack.c.h.s8.bf16 %v862
        %v2175 = vunpack.c.h.s8.bf16 %v863
        %v2176 = vunpack.c.h.s8.bf16 %v864
        %v2177 = vunpack.c.h.s8.bf16 %v865
        %v2178 = vunpack.c.l.s8.bf16 %v866
        %v2179 = vunpack.c.l.s8.bf16 %v867
        %v2180 = vunpack.c.l.s8.bf16 %v868
        %v2181 = vunpack.c.l.s8.bf16 %v869
        %v2182 = vunpack.c.h.s8.bf16 %v866
        %v2183 = vunpack.c.h.s8.bf16 %v867
        %v2184 = vunpack.c.h.s8.bf16 %v868
        %v2185 = vunpack.c.h.s8.bf16 %v869
        %v2186 = vunpack.c.l.s8.bf16 %v870
        %v2187 = vunpack.c.l.s8.bf16 %v871
        %v2188 = vunpack.c.l.s8.bf16 %v872
        %v2189 = vunpack.c.l.s8.bf16 %v873
        %v2190 = vunpack.c.h.s8.bf16 %v870
        %v2191 = vunpack.c.h.s8.bf16 %v871
        %v2192 = vunpack.c.h.s8.bf16 %v872
        %v2193 = vunpack.c.h.s8.bf16 %v873
        %v2194 = vunpack.c.l.s8.bf16 %v874
        %v2195 = vunpack.c.l.s8.bf16 %v875
        %v2196 = vunpack.c.l.s8.bf16 %v876
        %v2197 = vunpack.c.l.s8.bf16 %v877
        %v2198 = vunpack.c.h.s8.bf16 %v874
        %v2199 = vunpack.c.h.s8.bf16 %v875
        %v2200 = vunpack.c.h.s8.bf16 %v876
        %v2201 = vunpack.c.h.s8.bf16 %v877
        %v2202 = vunpack.c.l.s8.bf16 %v878
        %v2203 = vunpack.c.l.s8.bf16 %v879
        %v2204 = vunpack.c.l.s8.bf16 %v880
        %v2205 = vunpack.c.l.s8.bf16 %v881
        %v2206 = vunpack.c.h.s8.bf16 %v878
        %v2207 = vunpack.c.h.s8.bf16 %v879
        %v2208 = vunpack.c.h.s8.bf16 %v880
        %v2209 = vunpack.c.h.s8.bf16 %v881
        %v2210 = vunpack.c.l.s8.bf16 %v882
        %v2211 = vunpack.c.l.s8.bf16 %v883
        %v2212 = vunpack.c.l.s8.bf16 %v884
        %v2213 = vunpack.c.l.s8.bf16 %v885
        %v2214 = vunpack.c.h.s8.bf16 %v882
        %v2215 = vunpack.c.h.s8.bf16 %v883
        %v2216 = vunpack.c.h.s8.bf16 %v884
        %v2217 = vunpack.c.h.s8.bf16 %v885
        %v2218 = vunpack.c.l.s8.bf16 %v886
        %v2219 = vunpack.c.l.s8.bf16 %v887
        %v2220 = vunpack.c.l.s8.bf16 %v888
        %v2221 = vunpack.c.l.s8.bf16 %v889
        %v2222 = vunpack.c.h.s8.bf16 %v886
        %v2223 = vunpack.c.h.s8.bf16 %v887
        %v2224 = vunpack.c.h.s8.bf16 %v888
        %v2225 = vunpack.c.h.s8.bf16 %v889
        %v2226 = vunpack.c.l.s8.bf16 %v890
        %v2227 = vunpack.c.l.s8.bf16 %v891
        %v2228 = vunpack.c.l.s8.bf16 %v892
        %v2229 = vunpack.c.l.s8.bf16 %v893
        %v2230 = vunpack.c.h.s8.bf16 %v890
        %v2231 = vunpack.c.h.s8.bf16 %v891
        %v2232 = vunpack.c.h.s8.bf16 %v892
        %v2233 = vunpack.c.h.s8.bf16 %v893
        %v2234 = vunpack.c.l.s8.bf16 %v894
        %v2235 = vunpack.c.l.s8.bf16 %v895
        %v2236 = vunpack.c.l.s8.bf16 %v896
        %v2237 = vunpack.c.l.s8.bf16 %v897
        %v2238 = vunpack.c.h.s8.bf16 %v894
        %v2239 = vunpack.c.h.s8.bf16 %v895
        %v2240 = vunpack.c.h.s8.bf16 %v896
        %v2241 = vunpack.c.h.s8.bf16 %v897
        %v2242 = vunpack.c.l.s8.bf16 %v898
        %v2243 = vunpack.c.l.s8.bf16 %v899
        %v2244 = vunpack.c.l.s8.bf16 %v900
        %v2245 = vunpack.c.l.s8.bf16 %v901
        %v2246 = vunpack.c.h.s8.bf16 %v898
        %v2247 = vunpack.c.h.s8.bf16 %v899
        %v2248 = vunpack.c.h.s8.bf16 %v900
        %v2249 = vunpack.c.h.s8.bf16 %v901
        %v2250 = vunpack.c.l.s8.bf16 %v902
        %v2251 = vunpack.c.l.s8.bf16 %v903
        %v2252 = vunpack.c.l.s8.bf16 %v904
        %v2253 = vunpack.c.l.s8.bf16 %v905
        %v2254 = vunpack.c.h.s8.bf16 %v902
        %v2255 = vunpack.c.h.s8.bf16 %v903
        %v2256 = vunpack.c.h.s8.bf16 %v904
        %v2257 = vunpack.c.h.s8.bf16 %v905
        %v2258 = vunpack.c.l.s8.bf16 %v906
        %v2259 = vunpack.c.l.s8.bf16 %v907
        %v2260 = vunpack.c.l.s8.bf16 %v908
        %v2261 = vunpack.c.l.s8.bf16 %v909
        %v2262 = vunpack.c.h.s8.bf16 %v906
        %v2263 = vunpack.c.h.s8.bf16 %v907
        %v2264 = vunpack.c.h.s8.bf16 %v908
        %v2265 = vunpack.c.h.s8.bf16 %v909
        %v2266 = vunpack.c.l.s8.bf16 %v910
        %v2267 = vunpack.c.l.s8.bf16 %v911
        %v2268 = vunpack.c.l.s8.bf16 %v912
        %v2269 = vunpack.c.l.s8.bf16 %v913
        %v2270 = vunpack.c.h.s8.bf16 %v910
        %v2271 = vunpack.c.h.s8.bf16 %v911
        %v2272 = vunpack.c.h.s8.bf16 %v912
        %v2273 = vunpack.c.h.s8.bf16 %v913
        %v2274 = vunpack.c.l.s8.bf16 %v914
        %v2275 = vunpack.c.l.s8.bf16 %v915
        %v2276 = vunpack.c.l.s8.bf16 %v916
        %v2277 = vunpack.c.l.s8.bf16 %v917
        %v2278 = vunpack.c.h.s8.bf16 %v914
        %v2279 = vunpack.c.h.s8.bf16 %v915
        %v2280 = vunpack.c.h.s8.bf16 %v916
        %v2281 = vunpack.c.h.s8.bf16 %v917
        %v2282 = vunpack.c.l.s8.bf16 %v918
        %v2283 = vunpack.c.l.s8.bf16 %v919
        %v2284 = vunpack.c.l.s8.bf16 %v920
        %v2285 = vunpack.c.l.s8.bf16 %v921
        %v2286 = vunpack.c.h.s8.bf16 %v918
        %v2287 = vunpack.c.h.s8.bf16 %v919
        %v2288 = vunpack.c.h.s8.bf16 %v920
        %v2289 = vunpack.c.h.s8.bf16 %v921
        %v2290 = vunpack.c.l.s8.bf16 %v922
        %v2291 = vunpack.c.l.s8.bf16 %v923
        %v2292 = vunpack.c.l.s8.bf16 %v924
        %v2293 = vunpack.c.l.s8.bf16 %v925
        %v2294 = vunpack.c.h.s8.bf16 %v922
        %v2295 = vunpack.c.h.s8.bf16 %v923
        %v2296 = vunpack.c.h.s8.bf16 %v924
        %v2297 = vunpack.c.h.s8.bf16 %v925
        %v2298 = vunpack.c.l.s8.bf16 %v926
        %v2299 = vunpack.c.l.s8.bf16 %v927
        %v2300 = vunpack.c.l.s8.bf16 %v928
        %v2301 = vunpack.c.l.s8.bf16 %v929
        %v2302 = vunpack.c.h.s8.bf16 %v926
        %v2303 = vunpack.c.h.s8.bf16 %v927
        %v2304 = vunpack.c.h.s8.bf16 %v928
        %v2305 = vunpack.c.h.s8.bf16 %v929
        %v2306 = vunpack.c.l.s8.bf16 %v930
        %v2307 = vunpack.c.l.s8.bf16 %v931
        %v2308 = vunpack.c.l.s8.bf16 %v932
        %v2309 = vunpack.c.l.s8.bf16 %v933
        %v2310 = vunpack.c.h.s8.bf16 %v930
        %v2311 = vunpack.c.h.s8.bf16 %v931
        %v2312 = vunpack.c.h.s8.bf16 %v932
        %v2313 = vunpack.c.h.s8.bf16 %v933
        %v2314 = vunpack.c.l.s8.bf16 %v934
        %v2315 = vunpack.c.l.s8.bf16 %v935
        %v2316 = vunpack.c.l.s8.bf16 %v936
        %v2317 = vunpack.c.l.s8.bf16 %v937
        %v2318 = vunpack.c.h.s8.bf16 %v934
        %v2319 = vunpack.c.h.s8.bf16 %v935
        %v2320 = vunpack.c.h.s8.bf16 %v936
        %v2321 = vunpack.c.h.s8.bf16 %v937
        %v2322 = vunpack.c.l.s8.bf16 %v938
        %v2323 = vunpack.c.l.s8.bf16 %v939
        %v2324 = vunpack.c.l.s8.bf16 %v940
        %v2325 = vunpack.c.l.s8.bf16 %v941
        %v2326 = vunpack.c.h.s8.bf16 %v938
        %v2327 = vunpack.c.h.s8.bf16 %v939
        %v2328 = vunpack.c.h.s8.bf16 %v940
        %v2329 = vunpack.c.h.s8.bf16 %v941
        %v2330 = vunpack.c.l.s8.bf16 %v942
        %v2331 = vunpack.c.l.s8.bf16 %v943
        %v2332 = vunpack.c.l.s8.bf16 %v944
        %v2333 = vunpack.c.l.s8.bf16 %v945
        %v2334 = vunpack.c.h.s8.bf16 %v942
        %v2335 = vunpack.c.h.s8.bf16 %v943
        %v2336 = vunpack.c.h.s8.bf16 %v944
        %v2337 = vunpack.c.h.s8.bf16 %v945
        %v2338 = vunpack.c.l.s8.bf16 %v946
        %v2339 = vunpack.c.l.s8.bf16 %v947
        %v2340 = vunpack.c.l.s8.bf16 %v948
        %v2341 = vunpack.c.l.s8.bf16 %v949
        %v2342 = vunpack.c.h.s8.bf16 %v946
        %v2343 = vunpack.c.h.s8.bf16 %v947
        %v2344 = vunpack.c.h.s8.bf16 %v948
        %v2345 = vunpack.c.h.s8.bf16 %v949
        %v2346 = vunpack.c.l.s8.bf16 %v950
        %v2347 = vunpack.c.l.s8.bf16 %v951
        %v2348 = vunpack.c.l.s8.bf16 %v952
        %v2349 = vunpack.c.l.s8.bf16 %v953
        %v2350 = vunpack.c.h.s8.bf16 %v950
        %v2351 = vunpack.c.h.s8.bf16 %v951
        %v2352 = vunpack.c.h.s8.bf16 %v952
        %v2353 = vunpack.c.h.s8.bf16 %v953
        %v2354 = vunpack.c.l.s8.bf16 %v954
        %v2355 = vunpack.c.l.s8.bf16 %v955
        %v2356 = vunpack.c.l.s8.bf16 %v956
        %v2357 = vunpack.c.l.s8.bf16 %v957
        %v2358 = vunpack.c.h.s8.bf16 %v954
        %v2359 = vunpack.c.h.s8.bf16 %v955
        %v2360 = vunpack.c.h.s8.bf16 %v956
        %v2361 = vunpack.c.h.s8.bf16 %v957
        %v2362 = vunpack.c.l.s8.bf16 %v958
        %v2363 = vunpack.c.l.s8.bf16 %v959
        %v2364 = vunpack.c.l.s8.bf16 %v960
        %v2365 = vunpack.c.l.s8.bf16 %v961
        %v2366 = vunpack.c.h.s8.bf16 %v958
        %v2367 = vunpack.c.h.s8.bf16 %v959
        %v2368 = vunpack.c.h.s8.bf16 %v960
        %v2369 = vunpack.c.h.s8.bf16 %v961
        %v2370 = vunpack.c.l.s8.bf16 %v962
        %v2371 = vunpack.c.l.s8.bf16 %v963
        %v2372 = vunpack.c.l.s8.bf16 %v964
        %v2373 = vunpack.c.l.s8.bf16 %v965
        %v2374 = vunpack.c.h.s8.bf16 %v962
        %v2375 = vunpack.c.h.s8.bf16 %v963
        %v2376 = vunpack.c.h.s8.bf16 %v964
        %v2377 = vunpack.c.h.s8.bf16 %v965
        %v2378 = vunpack.c.l.s8.bf16 %v966
        %v2379 = vunpack.c.l.s8.bf16 %v967
        %v2380 = vunpack.c.l.s8.bf16 %v968
        %v2381 = vunpack.c.l.s8.bf16 %v969
        %v2382 = vunpack.c.h.s8.bf16 %v966
        %v2383 = vunpack.c.h.s8.bf16 %v967
        %v2384 = vunpack.c.h.s8.bf16 %v968
        %v2385 = vunpack.c.h.s8.bf16 %v969
        %v2386 = vunpack.c.l.s8.bf16 %v970
        %v2387 = vunpack.c.l.s8.bf16 %v971
        %v2388 = vunpack.c.l.s8.bf16 %v972
        %v2389 = vunpack.c.l.s8.bf16 %v973
        %v2390 = vunpack.c.h.s8.bf16 %v970
        %v2391 = vunpack.c.h.s8.bf16 %v971
        %v2392 = vunpack.c.h.s8.bf16 %v972
        %v2393 = vunpack.c.h.s8.bf16 %v973
        %v2394 = vunpack.c.l.s8.bf16 %v974
        %v2395 = vunpack.c.l.s8.bf16 %v975
        %v2396 = vunpack.c.l.s8.bf16 %v976
        %v2397 = vunpack.c.l.s8.bf16 %v977
        %v2398 = vunpack.c.h.s8.bf16 %v974
        %v2399 = vunpack.c.h.s8.bf16 %v975
        %v2400 = vunpack.c.h.s8.bf16 %v976
        %v2401 = vunpack.c.h.s8.bf16 %v977
        %v2402 = vunpack.c.l.s8.bf16 %v978
        %v2403 = vunpack.c.l.s8.bf16 %v979
        %v2404 = vunpack.c.l.s8.bf16 %v980
        %v2405 = vunpack.c.l.s8.bf16 %v981
        %v2406 = vunpack.c.h.s8.bf16 %v978
        %v2407 = vunpack.c.h.s8.bf16 %v979
        %v2408 = vunpack.c.h.s8.bf16 %v980
        %v2409 = vunpack.c.h.s8.bf16 %v981
        %v2410 = vunpack.c.l.s8.bf16 %v982
        %v2411 = vunpack.c.l.s8.bf16 %v983
        %v2412 = vunpack.c.l.s8.bf16 %v984
        %v2413 = vunpack.c.l.s8.bf16 %v985
        %v2414 = vunpack.c.h.s8.bf16 %v982
        %v2415 = vunpack.c.h.s8.bf16 %v983
        %v2416 = vunpack.c.h.s8.bf16 %v984
        %v2417 = vunpack.c.h.s8.bf16 %v985
        %v2418 = vunpack.c.l.s8.bf16 %v986
        %v2419 = vunpack.c.l.s8.bf16 %v987
        %v2420 = vunpack.c.l.s8.bf16 %v988
        %v2421 = vunpack.c.l.s8.bf16 %v989
        %v2422 = vunpack.c.h.s8.bf16 %v986
        %v2423 = vunpack.c.h.s8.bf16 %v987
        %v2424 = vunpack.c.h.s8.bf16 %v988
        %v2425 = vunpack.c.h.s8.bf16 %v989
        %v2426 = vunpack.c.l.s8.bf16 %v990
        %v2427 = vunpack.c.l.s8.bf16 %v991
        %v2428 = vunpack.c.l.s8.bf16 %v992
        %v2429 = vunpack.c.l.s8.bf16 %v993
        %v2430 = vunpack.c.h.s8.bf16 %v990
        %v2431 = vunpack.c.h.s8.bf16 %v991
        %v2432 = vunpack.c.h.s8.bf16 %v992
        %v2433 = vunpack.c.h.s8.bf16 %v993
        %v2434 = vunpack.c.l.s8.bf16 %v994
        %v2435 = vunpack.c.l.s8.bf16 %v995
        %v2436 = vunpack.c.l.s8.bf16 %v996
        %v2437 = vunpack.c.l.s8.bf16 %v997
        %v2438 = vunpack.c.h.s8.bf16 %v994
        %v2439 = vunpack.c.h.s8.bf16 %v995
        %v2440 = vunpack.c.h.s8.bf16 %v996
        %v2441 = vunpack.c.h.s8.bf16 %v997
        %v2442 = vunpack.c.l.s8.bf16 %v998
        %v2443 = vunpack.c.l.s8.bf16 %v999
        %v2444 = vunpack.c.l.s8.bf16 %v1000
        %v2445 = vunpack.c.l.s8.bf16 %v1001
        %v2446 = vunpack.c.h.s8.bf16 %v998
        %v2447 = vunpack.c.h.s8.bf16 %v999
        %v2448 = vunpack.c.h.s8.bf16 %v1000
        %v2449 = vunpack.c.h.s8.bf16 %v1001
        %v2450 = vunpack.c.l.s8.bf16 %v1002
        %v2451 = vunpack.c.l.s8.bf16 %v1003
        %v2452 = vunpack.c.l.s8.bf16 %v1004
        %v2453 = vunpack.c.l.s8.bf16 %v1005
        %v2454 = vunpack.c.h.s8.bf16 %v1002
        %v2455 = vunpack.c.h.s8.bf16 %v1003
        %v2456 = vunpack.c.h.s8.bf16 %v1004
        %v2457 = vunpack.c.h.s8.bf16 %v1005
        %v2458 = vunpack.c.l.s8.bf16 %v1006
        %v2459 = vunpack.c.l.s8.bf16 %v1007
        %v2460 = vunpack.c.l.s8.bf16 %v1008
        %v2461 = vunpack.c.l.s8.bf16 %v1009
        %v2462 = vunpack.c.h.s8.bf16 %v1006
        %v2463 = vunpack.c.h.s8.bf16 %v1007
        %v2464 = vunpack.c.h.s8.bf16 %v1008
        %v2465 = vunpack.c.h.s8.bf16 %v1009
        %v2466 = vunpack.c.l.s8.bf16 %v1010
        %v2467 = vunpack.c.l.s8.bf16 %v1011
        %v2468 = vunpack.c.l.s8.bf16 %v1012
        %v2469 = vunpack.c.l.s8.bf16 %v1013
        %v2470 = vunpack.c.h.s8.bf16 %v1010
        %v2471 = vunpack.c.h.s8.bf16 %v1011
        %v2472 = vunpack.c.h.s8.bf16 %v1012
        %v2473 = vunpack.c.h.s8.bf16 %v1013
        %v2474 = vunpack.c.l.s8.bf16 %v1014
        %v2475 = vunpack.c.l.s8.bf16 %v1015
        %v2476 = vunpack.c.l.s8.bf16 %v1016
        %v2477 = vunpack.c.l.s8.bf16 %v1017
        %v2478 = vunpack.c.h.s8.bf16 %v1014
        %v2479 = vunpack.c.h.s8.bf16 %v1015
        %v2480 = vunpack.c.h.s8.bf16 %v1016
        %v2481 = vunpack.c.h.s8.bf16 %v1017
        %v2482 = vunpack.c.l.s8.bf16 %v1018
        %v2483 = vunpack.c.l.s8.bf16 %v1019
        %v2484 = vunpack.c.l.s8.bf16 %v1020
        %v2485 = vunpack.c.l.s8.bf16 %v1021
        %v2486 = vunpack.c.h.s8.bf16 %v1018
        %v2487 = vunpack.c.h.s8.bf16 %v1019
        %v2488 = vunpack.c.h.s8.bf16 %v1020
        %v2489 = vunpack.c.h.s8.bf16 %v1021
        %v2490 = vunpack.c.l.s8.bf16 %v1022
        %v2491 = vunpack.c.l.s8.bf16 %v1023
        %v2492 = vunpack.c.l.s8.bf16 %v1024
        %v2493 = vunpack.c.l.s8.bf16 %v1025
        %v2494 = vunpack.c.h.s8.bf16 %v1022
        %v2495 = vunpack.c.h.s8.bf16 %v1023
        %v2496 = vunpack.c.h.s8.bf16 %v1024
        %v2497 = vunpack.c.h.s8.bf16 %v1025
        %v2498 = vunpack.c.l.s8.bf16 %v1026
        %v2499 = vunpack.c.l.s8.bf16 %v1027
        %v2500 = vunpack.c.l.s8.bf16 %v1028
        %v2501 = vunpack.c.l.s8.bf16 %v1029
        %v2502 = vunpack.c.h.s8.bf16 %v1026
        %v2503 = vunpack.c.h.s8.bf16 %v1027
        %v2504 = vunpack.c.h.s8.bf16 %v1028
        %v2505 = vunpack.c.h.s8.bf16 %v1029
        %v2506 = vunpack.c.l.s8.bf16 %v1030
        %v2507 = vunpack.c.l.s8.bf16 %v1031
        %v2508 = vunpack.c.l.s8.bf16 %v1032
        %v2509 = vunpack.c.l.s8.bf16 %v1033
        %v2510 = vunpack.c.h.s8.bf16 %v1030
        %v2511 = vunpack.c.h.s8.bf16 %v1031
        %v2512 = vunpack.c.h.s8.bf16 %v1032
        %v2513 = vunpack.c.h.s8.bf16 %v1033
        %v2514 = vunpack.c.l.s8.bf16 %v1034
        %v2515 = vunpack.c.l.s8.bf16 %v1035
        %v2516 = vunpack.c.l.s8.bf16 %v1036
        %v2517 = vunpack.c.l.s8.bf16 %v1037
        %v2518 = vunpack.c.h.s8.bf16 %v1034
        %v2519 = vunpack.c.h.s8.bf16 %v1035
        %v2520 = vunpack.c.h.s8.bf16 %v1036
        %v2521 = vunpack.c.h.s8.bf16 %v1037
        %v2522 = vunpack.c.l.s8.bf16 %v1038
        %v2523 = vunpack.c.l.s8.bf16 %v1039
        %v2524 = vunpack.c.l.s8.bf16 %v1040
        %v2525 = vunpack.c.l.s8.bf16 %v1041
        %v2526 = vunpack.c.h.s8.bf16 %v1038
        %v2527 = vunpack.c.h.s8.bf16 %v1039
        %v2528 = vunpack.c.h.s8.bf16 %v1040
        %v2529 = vunpack.c.h.s8.bf16 %v1041
        %v2530 = vunpack.c.l.s8.bf16 %v1042
        %v2531 = vunpack.c.l.s8.bf16 %v1043
        %v2532 = vunpack.c.l.s8.bf16 %v1044
        %v2533 = vunpack.c.l.s8.bf16 %v1045
        %v2534 = vunpack.c.h.s8.bf16 %v1042
        %v2535 = vunpack.c.h.s8.bf16 %v1043
        %v2536 = vunpack.c.h.s8.bf16 %v1044
        %v2537 = vunpack.c.h.s8.bf16 %v1045
        %v2538 = vunpack.c.l.s8.bf16 %v1046
        %v2539 = vunpack.c.l.s8.bf16 %v1047
        %v2540 = vunpack.c.l.s8.bf16 %v1048
        %v2541 = vunpack.c.l.s8.bf16 %v1049
        %v2542 = vunpack.c.h.s8.bf16 %v1046
        %v2543 = vunpack.c.h.s8.bf16 %v1047
        %v2544 = vunpack.c.h.s8.bf16 %v1048
        %v2545 = vunpack.c.h.s8.bf16 %v1049
        %v2546 = vunpack.c.l.s8.bf16 %v1050
        %v2547 = vunpack.c.l.s8.bf16 %v1051
        %v2548 = vunpack.c.l.s8.bf16 %v1052
        %v2549 = vunpack.c.l.s8.bf16 %v1053
        %v2550 = vunpack.c.h.s8.bf16 %v1050
        %v2551 = vunpack.c.h.s8.bf16 %v1051
        %v2552 = vunpack.c.h.s8.bf16 %v1052
        %v2553 = vunpack.c.h.s8.bf16 %v1053
        %v2554 = vunpack.c.l.s8.bf16 %v1054
        %v2555 = vunpack.c.l.s8.bf16 %v1055
        %v2556 = vunpack.c.l.s8.bf16 %v1056
        %v2557 = vunpack.c.l.s8.bf16 %v1057
        %v2558 = vunpack.c.h.s8.bf16 %v1054
        %v2559 = vunpack.c.h.s8.bf16 %v1055
        %v2560 = vunpack.c.h.s8.bf16 %v1056
        %v2561 = vunpack.c.h.s8.bf16 %v1057
        %v2562 = vunpack.c.l.s8.bf16 %v1058
        %v2563 = vunpack.c.l.s8.bf16 %v1059
        %v2564 = vunpack.c.l.s8.bf16 %v1060
        %v2565 = vunpack.c.l.s8.bf16 %v1061
        %v2566 = vunpack.c.h.s8.bf16 %v1058
        %v2567 = vunpack.c.h.s8.bf16 %v1059
        %v2568 = vunpack.c.h.s8.bf16 %v1060
        %v2569 = vunpack.c.h.s8.bf16 %v1061
        %v2570 = vunpack.c.l.s8.bf16 %v1062
        %v2571 = vunpack.c.l.s8.bf16 %v1063
        %v2572 = vunpack.c.l.s8.bf16 %v1064
        %v2573 = vunpack.c.l.s8.bf16 %v1065
        %v2574 = vunpack.c.h.s8.bf16 %v1062
        %v2575 = vunpack.c.h.s8.bf16 %v1063
        %v2576 = vunpack.c.h.s8.bf16 %v1064
        %v2577 = vunpack.c.h.s8.bf16 %v1065
        %v2578 = vunpack.c.l.s8.bf16 %v1066
        %v2579 = vunpack.c.l.s8.bf16 %v1067
        %v2580 = vunpack.c.l.s8.bf16 %v1068
        %v2581 = vunpack.c.l.s8.bf16 %v1069
        %v2582 = vunpack.c.h.s8.bf16 %v1066
        %v2583 = vunpack.c.h.s8.bf16 %v1067
        %v2584 = vunpack.c.h.s8.bf16 %v1068
        %v2585 = vunpack.c.h.s8.bf16 %v1069
        %v2586 = vunpack.c.l.s8.bf16 %v1070
        %v2587 = vunpack.c.l.s8.bf16 %v1071
        %v2588 = vunpack.c.l.s8.bf16 %v1072
        %v2589 = vunpack.c.l.s8.bf16 %v1073
        %v2590 = vunpack.c.h.s8.bf16 %v1070
        %v2591 = vunpack.c.h.s8.bf16 %v1071
        %v2592 = vunpack.c.h.s8.bf16 %v1072
        %v2593 = vunpack.c.h.s8.bf16 %v1073
        %v2594 = vunpack.c.l.s8.bf16 %v1074
        %v2595 = vunpack.c.l.s8.bf16 %v1075
        %v2596 = vunpack.c.l.s8.bf16 %v1076
        %v2597 = vunpack.c.l.s8.bf16 %v1077
        %v2598 = vunpack.c.h.s8.bf16 %v1074
        %v2599 = vunpack.c.h.s8.bf16 %v1075
        %v2600 = vunpack.c.h.s8.bf16 %v1076
        %v2601 = vunpack.c.h.s8.bf16 %v1077
        %v2602 = vunpack.c.l.s8.bf16 %v1078
        %v2603 = vunpack.c.l.s8.bf16 %v1079
        %v2604 = vunpack.c.l.s8.bf16 %v1080
        %v2605 = vunpack.c.l.s8.bf16 %v1081
        %v2606 = vunpack.c.h.s8.bf16 %v1078
        %v2607 = vunpack.c.h.s8.bf16 %v1079
        %v2608 = vunpack.c.h.s8.bf16 %v1080
        %v2609 = vunpack.c.h.s8.bf16 %v1081
        %v2610 = vunpack.c.l.s8.bf16 %v1082
        %v2611 = vunpack.c.l.s8.bf16 %v1083
        %v2612 = vunpack.c.l.s8.bf16 %v1084
        %v2613 = vunpack.c.l.s8.bf16 %v1085
        %v2614 = vunpack.c.h.s8.bf16 %v1082
        %v2615 = vunpack.c.h.s8.bf16 %v1083
        %v2616 = vunpack.c.h.s8.bf16 %v1084
        %v2617 = vunpack.c.h.s8.bf16 %v1085
        %v2618 = vunpack.c.l.s8.bf16 %v1086
        %v2619 = vunpack.c.l.s8.bf16 %v1087
        %v2620 = vunpack.c.l.s8.bf16 %v1088
        %v2621 = vunpack.c.l.s8.bf16 %v1089
        %v2622 = vunpack.c.h.s8.bf16 %v1086
        %v2623 = vunpack.c.h.s8.bf16 %v1087
        %v2624 = vunpack.c.h.s8.bf16 %v1088
        %v2625 = vunpack.c.h.s8.bf16 %v1089
        %v2626 = vld [vmem:[#allocation2] sm:$0xff]
        %v2627 = vld [vmem:[%s314] sm:$0xff]
        %v2628 = vld [vmem:[%s314 + $0x8] sm:$0xff]
        %v2629 = vld [vmem:[%s314 + $0x10] sm:$0xff]
        %v2630 = vld [vmem:[%s314 + $0x18] sm:$0xff]
        %v2631 = vld [vmem:[%s314 + $0x20] sm:$0xff]
        %v2632 = vld [vmem:[%s314 + $0x28] sm:$0xff]
        %v2639 = vcombine.high %v2627, %v2627
        %v2641 = vunpack.c.l.s4 1966171168
        %v2642 = vunpack.c.0.s8 %v2641
        %v2643 = vlaneseq
        %v2644 = vshrl.u32 %v2643, 7
        %v2645 = vsub.s32 %v2642, %v2644
        %v2646 = vrot.slane %v2627, %v2645
        %v2648 = vunpack.c.l.s4 1966171168
        %v2649 = vunpack.c.0.s8 %v2648
        %v2650 = vlaneseq
        %v2651 = vshrl.u32 %v2650, 7
        %v2652 = vsub.s32 %v2649, %v2651
        %v2653 = vrot.slane %v2639, %v2652
        %v2654 = vcombine.high %v2646, %v2646
        %v2655 = vcombine.high %v2653, %v2653
        %v2657 = vunpack.c.l.s4 1966171168
        %v2658 = vunpack.c.0.s8 %v2657
        %v2659 = vlaneseq
        %v2660 = vshrl.u32 %v2659, 7
        %v2661 = vsub.s32 %v2658, %v2660
        %v2662 = vrot.slane %v2646, %v2661
        %v2664 = vunpack.c.l.s4 1966171168
        %v2665 = vunpack.c.0.s8 %v2664
        %v2666 = vlaneseq
        %v2667 = vshrl.u32 %v2666, 7
        %v2668 = vsub.s32 %v2665, %v2667
        %v2669 = vrot.slane %v2653, %v2668
        %v2671 = vunpack.c.l.s4 1966171168
        %v2672 = vunpack.c.0.s8 %v2671
        %v2673 = vlaneseq
        %v2674 = vshrl.u32 %v2673, 7
        %v2675 = vsub.s32 %v2672, %v2674
        %v2676 = vrot.slane %v2654, %v2675
        %v2678 = vunpack.c.l.s4 1966171168
        %v2679 = vunpack.c.0.s8 %v2678
        %v2680 = vlaneseq
        %v2681 = vshrl.u32 %v2680, 7
        %v2682 = vsub.s32 %v2679, %v2681
        %v2683 = vrot.slane %v2655, %v2682
        %v2684 = vcombine.high %v2662, %v2662
        %v2685 = vcombine.high %v2669, %v2669
        %v2686 = vcombine.high %v2676, %v2676
        %v2687 = vcombine.high %v2683, %v2683
        %v2688 = vcombine.high %v2628, %v2628
        %v2690 = vunpack.c.l.s4 1966171168
        %v2691 = vunpack.c.0.s8 %v2690
        %v2692 = vlaneseq
        %v2693 = vshrl.u32 %v2692, 7
        %v2694 = vsub.s32 %v2691, %v2693
        %v2695 = vrot.slane %v2628, %v2694
        %v2697 = vunpack.c.l.s4 1966171168
        %v2698 = vunpack.c.0.s8 %v2697
        %v2699 = vlaneseq
        %v2700 = vshrl.u32 %v2699, 7
        %v2701 = vsub.s32 %v2698, %v2700
        %v2702 = vrot.slane %v2688, %v2701
        %v2703 = vcombine.high %v2695, %v2695
        %v2704 = vcombine.high %v2702, %v2702
        %v2706 = vunpack.c.l.s4 1966171168
        %v2707 = vunpack.c.0.s8 %v2706
        %v2708 = vlaneseq
        %v2709 = vshrl.u32 %v2708, 7
        %v2710 = vsub.s32 %v2707, %v2709
        %v2711 = vrot.slane %v2695, %v2710
        %v2713 = vunpack.c.l.s4 1966171168
        %v2714 = vunpack.c.0.s8 %v2713
        %v2715 = vlaneseq
        %v2716 = vshrl.u32 %v2715, 7
        %v2717 = vsub.s32 %v2714, %v2716
        %v2718 = vrot.slane %v2702, %v2717
        %v2720 = vunpack.c.l.s4 1966171168
        %v2721 = vunpack.c.0.s8 %v2720
        %v2722 = vlaneseq
        %v2723 = vshrl.u32 %v2722, 7
        %v2724 = vsub.s32 %v2721, %v2723
        %v2725 = vrot.slane %v2703, %v2724
        %v2727 = vunpack.c.l.s4 1966171168
        %v2728 = vunpack.c.0.s8 %v2727
        %v2729 = vlaneseq
        %v2730 = vshrl.u32 %v2729, 7
        %v2731 = vsub.s32 %v2728, %v2730
        %v2732 = vrot.slane %v2704, %v2731
        %v2733 = vcombine.high %v2711, %v2711
        %v2734 = vcombine.high %v2718, %v2718
        %v2735 = vcombine.high %v2725, %v2725
        %v2736 = vcombine.high %v2732, %v2732
        %v2737 = vcombine.high %v2629, %v2629
        %v2739 = vunpack.c.l.s4 1966171168
        %v2740 = vunpack.c.0.s8 %v2739
        %v2741 = vlaneseq
        %v2742 = vshrl.u32 %v2741, 7
        %v2743 = vsub.s32 %v2740, %v2742
        %v2744 = vrot.slane %v2629, %v2743
        %v2746 = vunpack.c.l.s4 1966171168
        %v2747 = vunpack.c.0.s8 %v2746
        %v2748 = vlaneseq
        %v2749 = vshrl.u32 %v2748, 7
        %v2750 = vsub.s32 %v2747, %v2749
        %v2751 = vrot.slane %v2737, %v2750
        %v2752 = vcombine.high %v2744, %v2744
        %v2753 = vcombine.high %v2751, %v2751
        %v2755 = vunpack.c.l.s4 1966171168
        %v2756 = vunpack.c.0.s8 %v2755
        %v2757 = vlaneseq
        %v2758 = vshrl.u32 %v2757, 7
        %v2759 = vsub.s32 %v2756, %v2758
        %v2760 = vrot.slane %v2744, %v2759
        %v2762 = vunpack.c.l.s4 1966171168
        %v2763 = vunpack.c.0.s8 %v2762
        %v2764 = vlaneseq
        %v2765 = vshrl.u32 %v2764, 7
        %v2766 = vsub.s32 %v2763, %v2765
        %v2767 = vrot.slane %v2751, %v2766
        %v2769 = vunpack.c.l.s4 1966171168
        %v2770 = vunpack.c.0.s8 %v2769
        %v2771 = vlaneseq
        %v2772 = vshrl.u32 %v2771, 7
        %v2773 = vsub.s32 %v2770, %v2772
        %v2774 = vrot.slane %v2752, %v2773
        %v2776 = vunpack.c.l.s4 1966171168
        %v2777 = vunpack.c.0.s8 %v2776
        %v2778 = vlaneseq
        %v2779 = vshrl.u32 %v2778, 7
        %v2780 = vsub.s32 %v2777, %v2779
        %v2781 = vrot.slane %v2753, %v2780
        %v2782 = vcombine.high %v2760, %v2760
        %v2783 = vcombine.high %v2767, %v2767
        %v2784 = vcombine.high %v2774, %v2774
        %v2785 = vcombine.high %v2781, %v2781
        %v2786 = vcombine.high %v2630, %v2630
        %v2788 = vunpack.c.l.s4 1966171168
        %v2789 = vunpack.c.0.s8 %v2788
        %v2790 = vlaneseq
        %v2791 = vshrl.u32 %v2790, 7
        %v2792 = vsub.s32 %v2789, %v2791
        %v2793 = vrot.slane %v2630, %v2792
        %v2795 = vunpack.c.l.s4 1966171168
        %v2796 = vunpack.c.0.s8 %v2795
        %v2797 = vlaneseq
        %v2798 = vshrl.u32 %v2797, 7
        %v2799 = vsub.s32 %v2796, %v2798
        %v2800 = vrot.slane %v2786, %v2799
        %v2801 = vcombine.high %v2793, %v2793
        %v2802 = vcombine.high %v2800, %v2800
        %v2804 = vunpack.c.l.s4 1966171168
        %v2805 = vunpack.c.0.s8 %v2804
        %v2806 = vlaneseq
        %v2807 = vshrl.u32 %v2806, 7
        %v2808 = vsub.s32 %v2805, %v2807
        %v2809 = vrot.slane %v2793, %v2808
        %v2811 = vunpack.c.l.s4 1966171168
        %v2812 = vunpack.c.0.s8 %v2811
        %v2813 = vlaneseq
        %v2814 = vshrl.u32 %v2813, 7
        %v2815 = vsub.s32 %v2812, %v2814
        %v2816 = vrot.slane %v2800, %v2815
        %v2818 = vunpack.c.l.s4 1966171168
        %v2819 = vunpack.c.0.s8 %v2818
        %v2820 = vlaneseq
        %v2821 = vshrl.u32 %v2820, 7
        %v2822 = vsub.s32 %v2819, %v2821
        %v2823 = vrot.slane %v2801, %v2822
        %v2825 = vunpack.c.l.s4 1966171168
        %v2826 = vunpack.c.0.s8 %v2825
        %v2827 = vlaneseq
        %v2828 = vshrl.u32 %v2827, 7
        %v2829 = vsub.s32 %v2826, %v2828
        %v2830 = vrot.slane %v2802, %v2829
        %v2831 = vcombine.high %v2809, %v2809
        %v2832 = vcombine.high %v2816, %v2816
        %v2833 = vcombine.high %v2823, %v2823
        %v2834 = vcombine.high %v2830, %v2830
        %v2835 = vcombine.high %v2631, %v2631
        %v2837 = vunpack.c.l.s4 1966171168
        %v2838 = vunpack.c.0.s8 %v2837
        %v2839 = vlaneseq
        %v2840 = vshrl.u32 %v2839, 7
        %v2841 = vsub.s32 %v2838, %v2840
        %v2842 = vrot.slane %v2631, %v2841
        %v2844 = vunpack.c.l.s4 1966171168
        %v2845 = vunpack.c.0.s8 %v2844
        %v2846 = vlaneseq
        %v2847 = vshrl.u32 %v2846, 7
        %v2848 = vsub.s32 %v2845, %v2847
        %v2849 = vrot.slane %v2835, %v2848
        %v2850 = vcombine.high %v2842, %v2842
        %v2851 = vcombine.high %v2849, %v2849
        %v2853 = vunpack.c.l.s4 1966171168
        %v2854 = vunpack.c.0.s8 %v2853
        %v2855 = vlaneseq
        %v2856 = vshrl.u32 %v2855, 7
        %v2857 = vsub.s32 %v2854, %v2856
        %v2858 = vrot.slane %v2842, %v2857
        %v2860 = vunpack.c.l.s4 1966171168
        %v2861 = vunpack.c.0.s8 %v2860
        %v2862 = vlaneseq
        %v2863 = vshrl.u32 %v2862, 7
        %v2864 = vsub.s32 %v2861, %v2863
        %v2865 = vrot.slane %v2849, %v2864
        %v2867 = vunpack.c.l.s4 1966171168
        %v2868 = vunpack.c.0.s8 %v2867
        %v2869 = vlaneseq
        %v2870 = vshrl.u32 %v2869, 7
        %v2871 = vsub.s32 %v2868, %v2870
        %v2872 = vrot.slane %v2850, %v2871
        %v2874 = vunpack.c.l.s4 1966171168
        %v2875 = vunpack.c.0.s8 %v2874
        %v2876 = vlaneseq
        %v2877 = vshrl.u32 %v2876, 7
        %v2878 = vsub.s32 %v2875, %v2877
        %v2879 = vrot.slane %v2851, %v2878
        %v2880 = vcombine.high %v2858, %v2858
        %v2881 = vcombine.high %v2865, %v2865
        %v2882 = vcombine.high %v2872, %v2872
        %v2883 = vcombine.high %v2879, %v2879
        %v2884 = vcombine.high %v2632, %v2632
        %v2886 = vunpack.c.l.s4 1966171168
        %v2887 = vunpack.c.0.s8 %v2886
        %v2888 = vlaneseq
        %v2889 = vshrl.u32 %v2888, 7
        %v2890 = vsub.s32 %v2887, %v2889
        %v2891 = vrot.slane %v2632, %v2890
        %v2893 = vunpack.c.l.s4 1966171168
        %v2894 = vunpack.c.0.s8 %v2893
        %v2895 = vlaneseq
        %v2896 = vshrl.u32 %v2895, 7
        %v2897 = vsub.s32 %v2894, %v2896
        %v2898 = vrot.slane %v2884, %v2897
        %v2899 = vcombine.high %v2891, %v2891
        %v2900 = vcombine.high %v2898, %v2898
        %v2902 = vunpack.c.l.s4 1966171168
        %v2903 = vunpack.c.0.s8 %v2902
        %v2904 = vlaneseq
        %v2905 = vshrl.u32 %v2904, 7
        %v2906 = vsub.s32 %v2903, %v2905
        %v2907 = vrot.slane %v2891, %v2906
        %v2909 = vunpack.c.l.s4 1966171168
        %v2910 = vunpack.c.0.s8 %v2909
        %v2911 = vlaneseq
        %v2912 = vshrl.u32 %v2911, 7
        %v2913 = vsub.s32 %v2910, %v2912
        %v2914 = vrot.slane %v2898, %v2913
        %v2916 = vunpack.c.l.s4 1966171168
        %v2917 = vunpack.c.0.s8 %v2916
        %v2918 = vlaneseq
        %v2919 = vshrl.u32 %v2918, 7
        %v2920 = vsub.s32 %v2917, %v2919
        %v2921 = vrot.slane %v2899, %v2920
        %v2923 = vunpack.c.l.s4 1966171168
        %v2924 = vunpack.c.0.s8 %v2923
        %v2925 = vlaneseq
        %v2926 = vshrl.u32 %v2925, 7
        %v2927 = vsub.s32 %v2924, %v2926
        %v2928 = vrot.slane %v2900, %v2927
        %v2929 = vcombine.high %v2907, %v2907
        %v2930 = vcombine.high %v2914, %v2914
        %v2931 = vcombine.high %v2921, %v2921
        %v2932 = vcombine.high %v2928, %v2928
        %2981 = vmatprep.subr.bf16.mxu0 %v1091
        %2982 = vmatpush1.bf16.msra.mxu0 %v1090
        %2983 = vmatprep.subr.bf16.mxu0 %v1095
        %2984 = vmatpush1.bf16.msra.mxu0 %v1094
        %2985 = vmatprep.subr.bf16.mxu0 %v1099
        %2986 = vmatpush1.bf16.msra.mxu0 %v1098
        %2987 = vmatprep.subr.bf16.mxu0 %v1103
        %2988 = vmatpush1.bf16.msra.mxu0 %v1102
        %2989 = vmatprep.subr.bf16.mxu0 %v1107
        %2990 = vmatpush1.bf16.msra.mxu0 %v1106
        %2991 = vmatprep.subr.bf16.mxu0 %v1111
        %2992 = vmatpush1.bf16.msra.mxu0 %v1110
        %2993 = vmatprep.subr.bf16.mxu0 %v1115
        %2994 = vmatpush1.bf16.msra.mxu0 %v1114
        %2995 = vmatprep.subr.bf16.mxu0 %v1119
        %2996 = vmatpush1.bf16.msra.mxu0 %v1118
        %2997 = vmatprep.subr.bf16.mxu0 %v1123
        %2998 = vmatpush1.bf16.msra.mxu0 %v1122
        %2999 = vmatprep.subr.bf16.mxu0 %v1127
        %3000 = vmatpush1.bf16.msra.mxu0 %v1126
        %3001 = vmatprep.subr.bf16.mxu0 %v1131
        %3002 = vmatpush1.bf16.msra.mxu0 %v1130
        %3003 = vmatprep.subr.bf16.mxu0 %v1135
        %3004 = vmatpush1.bf16.msra.mxu0 %v1134
        %3005 = vmatprep.subr.bf16.mxu0 %v1139
        %3006 = vmatpush1.bf16.msra.mxu0 %v1138
        %3007 = vmatprep.subr.bf16.mxu0 %v1143
        %3008 = vmatpush1.bf16.msra.mxu0 %v1142
        %3009 = vmatprep.subr.bf16.mxu0 %v1147
        %3010 = vmatpush1.bf16.msra.mxu0 %v1146
        %3011 = vmatprep.subr.bf16.mxu0 %v1151
        %3012 = vmatpush1.bf16.msra.mxu0 %v1150
        %3013 = vmatprep.mubr.bf16.mxu0 %v2676
        %3014 = vmatmul.mubr.bf16.gmra.mrb[0].mxu0 %v2662
        %v3015 = vpop.f32.mrb[0].mxu0
        %v3016 = vadd.f32 0.0, %v3015
        %v3017 = vpop.f32.mrb[0].mxu0
        %v3018 = vadd.f32 0.0, %v3017
        %v3019 = vpop.f32.mrb[0].mxu0
        %v3020 = vpop.f32.mrb[0].mxu0
        %3021 = vdwg.mxu0
        %3022 = vmatprep.subr.bf16.mxu0 %v1155
        %3023 = vmatpush1.bf16.msra.mxu0 %v1154
        %3024 = vmatprep.subr.bf16.mxu0 %v1159
        %3025 = vmatpush1.bf16.msra.mxu0 %v1158
        %3026 = vmatprep.subr.bf16.mxu0 %v1163
        %3027 = vmatpush1.bf16.msra.mxu0 %v1162
        %3028 = vmatprep.subr.bf16.mxu0 %v1167
        %3029 = vmatpush1.bf16.msra.mxu0 %v1166
        %3030 = vmatprep.subr.bf16.mxu0 %v1171
        %3031 = vmatpush1.bf16.msra.mxu0 %v1170
        %3032 = vmatprep.subr.bf16.mxu0 %v1175
        %3033 = vmatpush1.bf16.msra.mxu0 %v1174
        %3034 = vmatprep.subr.bf16.mxu0 %v1179
        %3035 = vmatpush1.bf16.msra.mxu0 %v1178
        %3036 = vmatprep.subr.bf16.mxu0 %v1183
        %3037 = vmatpush1.bf16.msra.mxu0 %v1182
        %3038 = vmatprep.subr.bf16.mxu0 %v1187
        %3039 = vmatpush1.bf16.msra.mxu0 %v1186
        %3040 = vmatprep.subr.bf16.mxu0 %v1191
        %3041 = vmatpush1.bf16.msra.mxu0 %v1190
        %3042 = vmatprep.subr.bf16.mxu0 %v1195
        %3043 = vmatpush1.bf16.msra.mxu0 %v1194
        %3044 = vmatprep.subr.bf16.mxu0 %v1199
        %3045 = vmatpush1.bf16.msra.mxu0 %v1198
        %3046 = vmatprep.subr.bf16.mxu0 %v1203
        %3047 = vmatpush1.bf16.msra.mxu0 %v1202
        %3048 = vmatprep.subr.bf16.mxu0 %v1207
        %3049 = vmatpush1.bf16.msra.mxu0 %v1206
        %3050 = vmatprep.subr.bf16.mxu0 %v1211
        %3051 = vmatpush1.bf16.msra.mxu0 %v1210
        %3052 = vmatprep.subr.bf16.mxu0 %v1215
        %3053 = vmatpush1.bf16.msra.mxu0 %v1214
        %3054 = vmatprep.mubr.bf16.mxu0 %v2686
        %3055 = vmatmul.mubr.bf16.gmra.mrb[0].mxu0 %v2684
        %v3056 = vpop.f32.mrb[0].mxu0
        %v3057 = vadd.f32 %v3016, %v3056
        %v3058 = vpop.f32.mrb[0].mxu0
        %v3059 = vadd.f32 %v3018, %v3058
        %v3060 = vpop.f32.mrb[0].mxu0
        %v3061 = vpop.f32.mrb[0].mxu0
        %3062 = vdwg.mxu0
        %3063 = vmatprep.subr.bf16.mxu0 %v1219
        %3064 = vmatpush1.bf16.msra.mxu0 %v1218
        %3065 = vmatprep.subr.bf16.mxu0 %v1223
        %3066 = vmatpush1.bf16.msra.mxu0 %v1222
        %3067 = vmatprep.subr.bf16.mxu0 %v1227
        %3068 = vmatpush1.bf16.msra.mxu0 %v1226
        %3069 = vmatprep.subr.bf16.mxu0 %v1231
        %3070 = vmatpush1.bf16.msra.mxu0 %v1230
        %3071 = vmatprep.subr.bf16.mxu0 %v1235
        %3072 = vmatpush1.bf16.msra.mxu0 %v1234
        %3073 = vmatprep.subr.bf16.mxu0 %v1239
        %3074 = vmatpush1.bf16.msra.mxu0 %v1238
        %3075 = vmatprep.subr.bf16.mxu0 %v1243
        %3076 = vmatpush1.bf16.msra.mxu0 %v1242
        %3077 = vmatprep.subr.bf16.mxu0 %v1247
        %3078 = vmatpush1.bf16.msra.mxu0 %v1246
        %3079 = vmatprep.subr.bf16.mxu0 %v1251
        %3080 = vmatpush1.bf16.msra.mxu0 %v1250
        %3081 = vmatprep.subr.bf16.mxu0 %v1255
        %3082 = vmatpush1.bf16.msra.mxu0 %v1254
        %3083 = vmatprep.subr.bf16.mxu0 %v1259
        %3084 = vmatpush1.bf16.msra.mxu0 %v1258
        %3085 = vmatprep.subr.bf16.mxu0 %v1263
        %3086 = vmatpush1.bf16.msra.mxu0 %v1262
        %3087 = vmatprep.subr.bf16.mxu0 %v1267
        %3088 = vmatpush1.bf16.msra.mxu0 %v1266
        %3089 = vmatprep.subr.bf16.mxu0 %v1271
        %3090 = vmatpush1.bf16.msra.mxu0 %v1270
        %3091 = vmatprep.subr.bf16.mxu0 %v1275
        %3092 = vmatpush1.bf16.msra.mxu0 %v1274
        %3093 = vmatprep.subr.bf16.mxu0 %v1279
        %3094 = vmatpush1.bf16.msra.mxu0 %v1278
        %3095 = vmatprep.mubr.bf16.mxu0 %v2683
        %3096 = vmatmul.mubr.bf16.gmra.mrb[0].mxu0 %v2669
        %v3097 = vpop.f32.mrb[0].mxu0
        %v3098 = vadd.f32 %v3057, %v3097
        %v3099 = vpop.f32.mrb[0].mxu0
        %v3100 = vadd.f32 %v3059, %v3099
        %v3101 = vpop.f32.mrb[0].mxu0
        %v3102 = vpop.f32.mrb[0].mxu0
        %3103 = vdwg.mxu0
        %3104 = vmatprep.subr.bf16.mxu0 %v1283
        %3105 = vmatpush1.bf16.msra.mxu0 %v1282
        %3106 = vmatprep.subr.bf16.mxu0 %v1287
        %3107 = vmatpush1.bf16.msra.mxu0 %v1286
        %3108 = vmatprep.subr.bf16.mxu0 %v1291
        %3109 = vmatpush1.bf16.msra.mxu0 %v1290
        %3110 = vmatprep.subr.bf16.mxu0 %v1295
        %3111 = vmatpush1.bf16.msra.mxu0 %v1294
        %3112 = vmatprep.subr.bf16.mxu0 %v1299
        %3113 = vmatpush1.bf16.msra.mxu0 %v1298
        %3114 = vmatprep.subr.bf16.mxu0 %v1303
        %3115 = vmatpush1.bf16.msra.mxu0 %v1302
        %3116 = vmatprep.subr.bf16.mxu0 %v1307
        %3117 = vmatpush1.bf16.msra.mxu0 %v1306
        %3118 = vmatprep.subr.bf16.mxu0 %v1311
        %3119 = vmatpush1.bf16.msra.mxu0 %v1310
        %3120 = vmatprep.subr.bf16.mxu0 %v1315
        %3121 = vmatpush1.bf16.msra.mxu0 %v1314
        %3122 = vmatprep.subr.bf16.mxu0 %v1319
        %3123 = vmatpush1.bf16.msra.mxu0 %v1318
        %3124 = vmatprep.subr.bf16.mxu0 %v1323
        %3125 = vmatpush1.bf16.msra.mxu0 %v1322
        %3126 = vmatprep.subr.bf16.mxu0 %v1327
        %3127 = vmatpush1.bf16.msra.mxu0 %v1326
        %3128 = vmatprep.subr.bf16.mxu0 %v1331
        %3129 = vmatpush1.bf16.msra.mxu0 %v1330
        %3130 = vmatprep.subr.bf16.mxu0 %v1335
        %3131 = vmatpush1.bf16.msra.mxu0 %v1334
        %3132 = vmatprep.subr.bf16.mxu0 %v1339
        %3133 = vmatpush1.bf16.msra.mxu0 %v1338
        %3134 = vmatprep.subr.bf16.mxu0 %v1343
        %3135 = vmatpush1.bf16.msra.mxu0 %v1342
        %3136 = vmatprep.mubr.bf16.mxu0 %v2687
        %3137 = vmatmul.mubr.bf16.gmra.mrb[0].mxu0 %v2685
        %v3138 = vpop.f32.mrb[0].mxu0
        %v3139 = vadd.f32 %v3098, %v3138
        %v3140 = vpop.f32.mrb[0].mxu0
        %v3141 = vadd.f32 %v3100, %v3140
        %v3142 = vpop.f32.mrb[0].mxu0
        %v3143 = vpop.f32.mrb[0].mxu0
        %3144 = vdwg.mxu0
        %3145 = vmatprep.subr.bf16.mxu0 %v1347
        %3146 = vmatpush1.bf16.msra.mxu0 %v1346
        %3147 = vmatprep.subr.bf16.mxu0 %v1351
        %3148 = vmatpush1.bf16.msra.mxu0 %v1350
        %3149 = vmatprep.subr.bf16.mxu0 %v1355
        %3150 = vmatpush1.bf16.msra.mxu0 %v1354
        %3151 = vmatprep.subr.bf16.mxu0 %v1359
        %3152 = vmatpush1.bf16.msra.mxu0 %v1358
        %3153 = vmatprep.subr.bf16.mxu0 %v1363
        %3154 = vmatpush1.bf16.msra.mxu0 %v1362
        %3155 = vmatprep.subr.bf16.mxu0 %v1367
        %3156 = vmatpush1.bf16.msra.mxu0 %v1366
        %3157 = vmatprep.subr.bf16.mxu0 %v1371
        %3158 = vmatpush1.bf16.msra.mxu0 %v1370
        %3159 = vmatprep.subr.bf16.mxu0 %v1375
        %3160 = vmatpush1.bf16.msra.mxu0 %v1374
        %3161 = vmatprep.subr.bf16.mxu0 %v1379
        %3162 = vmatpush1.bf16.msra.mxu0 %v1378
        %3163 = vmatprep.subr.bf16.mxu0 %v1383
        %3164 = vmatpush1.bf16.msra.mxu0 %v1382
        %3165 = vmatprep.subr.bf16.mxu0 %v1387
        %3166 = vmatpush1.bf16.msra.mxu0 %v1386
        %3167 = vmatprep.subr.bf16.mxu0 %v1391
        %3168 = vmatpush1.bf16.msra.mxu0 %v1390
        %3169 = vmatprep.subr.bf16.mxu0 %v1395
        %3170 = vmatpush1.bf16.msra.mxu0 %v1394
        %3171 = vmatprep.subr.bf16.mxu0 %v1399
        %3172 = vmatpush1.bf16.msra.mxu0 %v1398
        %3173 = vmatprep.subr.bf16.mxu0 %v1403
        %3174 = vmatpush1.bf16.msra.mxu0 %v1402
        %3175 = vmatprep.subr.bf16.mxu0 %v1407
        %3176 = vmatpush1.bf16.msra.mxu0 %v1406
        %3177 = vmatprep.mubr.bf16.mxu0 %v2725
        %3178 = vmatmul.mubr.bf16.gmra.mrb[0].mxu0 %v2711
        %v3179 = vpop.f32.mrb[0].mxu0
        %v3180 = vadd.f32 %v3139, %v3179
        %v3181 = vpop.f32.mrb[0].mxu0
        %v3182 = vadd.f32 %v3141, %v3181
        %v3183 = vpop.f32.mrb[0].mxu0
        %v3184 = vpop.f32.mrb[0].mxu0
        %3185 = vdwg.mxu0
        %3186 = vmatprep.subr.bf16.mxu0 %v1411
        %3187 = vmatpush1.bf16.msra.mxu0 %v1410
        %3188 = vmatprep.subr.bf16.mxu0 %v1415
        %3189 = vmatpush1.bf16.msra.mxu0 %v1414
        %3190 = vmatprep.subr.bf16.mxu0 %v1419
        %3191 = vmatpush1.bf16.msra.mxu0 %v1418
        %3192 = vmatprep.subr.bf16.mxu0 %v1423
        %3193 = vmatpush1.bf16.msra.mxu0 %v1422
        %3194 = vmatprep.subr.bf16.mxu0 %v1427
        %3195 = vmatpush1.bf16.msra.mxu0 %v1426
        %3196 = vmatprep.subr.bf16.mxu0 %v1431
        %3197 = vmatpush1.bf16.msra.mxu0 %v1430
        %3198 = vmatprep.subr.bf16.mxu0 %v1435
        %3199 = vmatpush1.bf16.msra.mxu0 %v1434
        %3200 = vmatprep.subr.bf16.mxu0 %v1439
        %3201 = vmatpush1.bf16.msra.mxu0 %v1438
        %3202 = vmatprep.subr.bf16.mxu0 %v1443
        %3203 = vmatpush1.bf16.msra.mxu0 %v1442
        %3204 = vmatprep.subr.bf16.mxu0 %v1447
        %3205 = vmatpush1.bf16.msra.mxu0 %v1446
        %3206 = vmatprep.subr.bf16.mxu0 %v1451
        %3207 = vmatpush1.bf16.msra.mxu0 %v1450
        %3208 = vmatprep.subr.bf16.mxu0 %v1455
        %3209 = vmatpush1.bf16.msra.mxu0 %v1454
        %3210 = vmatprep.subr.bf16.mxu0 %v1459
        %3211 = vmatpush1.bf16.msra.mxu0 %v1458
        %3212 = vmatprep.subr.bf16.mxu0 %v1463
        %3213 = vmatpush1.bf16.msra.mxu0 %v1462
        %3214 = vmatprep.subr.bf16.mxu0 %v1467
        %3215 = vmatpush1.bf16.msra.mxu0 %v1466
        %3216 = vmatprep.subr.bf16.mxu0 %v1471
        %3217 = vmatpush1.bf16.msra.mxu0 %v1470
        %3218 = vmatprep.mubr.bf16.mxu0 %v2735
        %3219 = vmatmul.mubr.bf16.gmra.mrb[0].mxu0 %v2733
        %v3220 = vpop.f32.mrb[0].mxu0
        %v3221 = vadd.f32 %v3180, %v3220
        %v3222 = vpop.f32.mrb[0].mxu0
        %v3223 = vadd.f32 %v3182, %v3222
        %v3224 = vpop.f32.mrb[0].mxu0
        %v3225 = vpop.f32.mrb[0].mxu0
        %3226 = vdwg.mxu0
        %3227 = vmatprep.subr.bf16.mxu0 %v1475
        %3228 = vmatpush1.bf16.msra.mxu0 %v1474
        %3229 = vmatprep.subr.bf16.mxu0 %v1479
        %3230 = vmatpush1.bf16.msra.mxu0 %v1478
        %3231 = vmatprep.subr.bf16.mxu0 %v1483
        %3232 = vmatpush1.bf16.msra.mxu0 %v1482
        %3233 = vmatprep.subr.bf16.mxu0 %v1487
        %3234 = vmatpush1.bf16.msra.mxu0 %v1486
        %3235 = vmatprep.subr.bf16.mxu0 %v1491
        %3236 = vmatpush1.bf16.msra.mxu0 %v1490
        %3237 = vmatprep.subr.bf16.mxu0 %v1495
        %3238 = vmatpush1.bf16.msra.mxu0 %v1494
        %3239 = vmatprep.subr.bf16.mxu0 %v1499
        %3240 = vmatpush1.bf16.msra.mxu0 %v1498
        %3241 = vmatprep.subr.bf16.mxu0 %v1503
        %3242 = vmatpush1.bf16.msra.mxu0 %v1502
        %3243 = vmatprep.subr.bf16.mxu0 %v1507
        %3244 = vmatpush1.bf16.msra.mxu0 %v1506
        %3245 = vmatprep.subr.bf16.mxu0 %v1511
        %3246 = vmatpush1.bf16.msra.mxu0 %v1510
        %3247 = vmatprep.subr.bf16.mxu0 %v1515
        %3248 = vmatpush1.bf16.msra.mxu0 %v1514
        %3249 = vmatprep.subr.bf16.mxu0 %v1519
        %3250 = vmatpush1.bf16.msra.mxu0 %v1518
        %3251 = vmatprep.subr.bf16.mxu0 %v1523
        %3252 = vmatpush1.bf16.msra.mxu0 %v1522
        %3253 = vmatprep.subr.bf16.mxu0 %v1527
        %3254 = vmatpush1.bf16.msra.mxu0 %v1526
        %3255 = vmatprep.subr.bf16.mxu0 %v1531
        %3256 = vmatpush1.bf16.msra.mxu0 %v1530
        %3257 = vmatprep.subr.bf16.mxu0 %v1535
        %3258 = vmatpush1.bf16.msra.mxu0 %v1534
        %3259 = vmatprep.mubr.bf16.mxu0 %v2732
        %3260 = vmatmul.mubr.bf16.gmra.mrb[0].mxu0 %v2718
        %v3261 = vpop.f32.mrb[0].mxu0
        %v3262 = vadd.f32 %v3221, %v3261
        %v3263 = vpop.f32.mrb[0].mxu0
        %v3264 = vadd.f32 %v3223, %v3263
        %v3265 = vpop.f32.mrb[0].mxu0
        %v3266 = vpop.f32.mrb[0].mxu0
        %3267 = vdwg.mxu0
        %3268 = vmatprep.subr.bf16.mxu0 %v1539
        %3269 = vmatpush1.bf16.msra.mxu0 %v1538
        %3270 = vmatprep.subr.bf16.mxu0 %v1543
        %3271 = vmatpush1.bf16.msra.mxu0 %v1542
        %3272 = vmatprep.subr.bf16.mxu0 %v1547
        %3273 = vmatpush1.bf16.msra.mxu0 %v1546
        %3274 = vmatprep.subr.bf16.mxu0 %v1551
        %3275 = vmatpush1.bf16.msra.mxu0 %v1550
        %3276 = vmatprep.subr.bf16.mxu0 %v1555
        %3277 = vmatpush1.bf16.msra.mxu0 %v1554
        %3278 = vmatprep.subr.bf16.mxu0 %v1559
        %3279 = vmatpush1.bf16.msra.mxu0 %v1558
        %3280 = vmatprep.subr.bf16.mxu0 %v1563
        %3281 = vmatpush1.bf16.msra.mxu0 %v1562
        %3282 = vmatprep.subr.bf16.mxu0 %v1567
        %3283 = vmatpush1.bf16.msra.mxu0 %v1566
        %3284 = vmatprep.subr.bf16.mxu0 %v1571
        %3285 = vmatpush1.bf16.msra.mxu0 %v1570
        %3286 = vmatprep.subr.bf16.mxu0 %v1575
        %3287 = vmatpush1.bf16.msra.mxu0 %v1574
        %3288 = vmatprep.subr.bf16.mxu0 %v1579
        %3289 = vmatpush1.bf16.msra.mxu0 %v1578
        %3290 = vmatprep.subr.bf16.mxu0 %v1583
        %3291 = vmatpush1.bf16.msra.mxu0 %v1582
        %3292 = vmatprep.subr.bf16.mxu0 %v1587
        %3293 = vmatpush1.bf16.msra.mxu0 %v1586
        %3294 = vmatprep.subr.bf16.mxu0 %v1591
        %3295 = vmatpush1.bf16.msra.mxu0 %v1590
        %3296 = vmatprep.subr.bf16.mxu0 %v1595
        %3297 = vmatpush1.bf16.msra.mxu0 %v1594
        %3298 = vmatprep.subr.bf16.mxu0 %v1599
        %3299 = vmatpush1.bf16.msra.mxu0 %v1598
        %3300 = vmatprep.mubr.bf16.mxu0 %v2736
        %3301 = vmatmul.mubr.bf16.gmra.mrb[0].mxu0 %v2734
        %v3302 = vpop.f32.mrb[0].mxu0
        %v3303 = vadd.f32 %v3262, %v3302
        %v3304 = vpop.f32.mrb[0].mxu0
        %v3305 = vadd.f32 %v3264, %v3304
        %v3306 = vpop.f32.mrb[0].mxu0
        %v3307 = vpop.f32.mrb[0].mxu0
        %3308 = vdwg.mxu0
        %3309 = vmatprep.subr.bf16.mxu0 %v1603
        %3310 = vmatpush1.bf16.msra.mxu0 %v1602
        %3311 = vmatprep.subr.bf16.mxu0 %v1607
        %3312 = vmatpush1.bf16.msra.mxu0 %v1606
        %3313 = vmatprep.subr.bf16.mxu0 %v1611
        %3314 = vmatpush1.bf16.msra.mxu0 %v1610
        %3315 = vmatprep.subr.bf16.mxu0 %v1615
        %3316 = vmatpush1.bf16.msra.mxu0 %v1614
        %3317 = vmatprep.subr.bf16.mxu0 %v1619
        %3318 = vmatpush1.bf16.msra.mxu0 %v1618
        %3319 = vmatprep.subr.bf16.mxu0 %v1623
        %3320 = vmatpush1.bf16.msra.mxu0 %v1622
        %3321 = vmatprep.subr.bf16.mxu0 %v1627
        %3322 = vmatpush1.bf16.msra.mxu0 %v1626
        %3323 = vmatprep.subr.bf16.mxu0 %v1631
        %3324 = vmatpush1.bf16.msra.mxu0 %v1630
        %3325 = vmatprep.subr.bf16.mxu0 %v1635
        %3326 = vmatpush1.bf16.msra.mxu0 %v1634
        %3327 = vmatprep.subr.bf16.mxu0 %v1639
        %3328 = vmatpush1.bf16.msra.mxu0 %v1638
        %3329 = vmatprep.subr.bf16.mxu0 %v1643
        %3330 = vmatpush1.bf16.msra.mxu0 %v1642
        %3331 = vmatprep.subr.bf16.mxu0 %v1647
        %3332 = vmatpush1.bf16.msra.mxu0 %v1646
        %3333 = vmatprep.subr.bf16.mxu0 %v1651
        %3334 = vmatpush1.bf16.msra.mxu0 %v1650
        %3335 = vmatprep.subr.bf16.mxu0 %v1655
        %3336 = vmatpush1.bf16.msra.mxu0 %v1654
        %3337 = vmatprep.subr.bf16.mxu0 %v1659
        %3338 = vmatpush1.bf16.msra.mxu0 %v1658
        %3339 = vmatprep.subr.bf16.mxu0 %v1663
        %3340 = vmatpush1.bf16.msra.mxu0 %v1662
        %3341 = vmatprep.mubr.bf16.mxu0 %v2774
        %3342 = vmatmul.mubr.bf16.gmra.mrb[0].mxu0 %v2760
        %v3343 = vpop.f32.mrb[0].mxu0
        %v3344 = vadd.f32 %v3303, %v3343
        %v3345 = vpop.f32.mrb[0].mxu0
        %v3346 = vadd.f32 %v3305, %v3345
        %v3347 = vpop.f32.mrb[0].mxu0
        %v3348 = vpop.f32.mrb[0].mxu0
        %3349 = vdwg.mxu0
        %3350 = vmatprep.subr.bf16.mxu0 %v1667
        %3351 = vmatpush1.bf16.msra.mxu0 %v1666
        %3352 = vmatprep.subr.bf16.mxu0 %v1671
        %3353 = vmatpush1.bf16.msra.mxu0 %v1670
        %3354 = vmatprep.subr.bf16.mxu0 %v1675
        %3355 = vmatpush1.bf16.msra.mxu0 %v1674
        %3356 = vmatprep.subr.bf16.mxu0 %v1679
        %3357 = vmatpush1.bf16.msra.mxu0 %v1678
        %3358 = vmatprep.subr.bf16.mxu0 %v1683
        %3359 = vmatpush1.bf16.msra.mxu0 %v1682
        %3360 = vmatprep.subr.bf16.mxu0 %v1687
        %3361 = vmatpush1.bf16.msra.mxu0 %v1686
        %3362 = vmatprep.subr.bf16.mxu0 %v1691
        %3363 = vmatpush1.bf16.msra.mxu0 %v1690
        %3364 = vmatprep.subr.bf16.mxu0 %v1695
        %3365 = vmatpush1.bf16.msra.mxu0 %v1694
        %3366 = vmatprep.subr.bf16.mxu0 %v1699
        %3367 = vmatpush1.bf16.msra.mxu0 %v1698
        %3368 = vmatprep.subr.bf16.mxu0 %v1703
        %3369 = vmatpush1.bf16.msra.mxu0 %v1702
        %3370 = vmatprep.subr.bf16.mxu0 %v1707
        %3371 = vmatpush1.bf16.msra.mxu0 %v1706
        %3372 = vmatprep.subr.bf16.mxu0 %v1711
        %3373 = vmatpush1.bf16.msra.mxu0 %v1710
        %3374 = vmatprep.subr.bf16.mxu0 %v1715
        %3375 = vmatpush1.bf16.msra.mxu0 %v1714
        %3376 = vmatprep.subr.bf16.mxu0 %v1719
        %3377 = vmatpush1.bf16.msra.mxu0 %v1718
        %3378 = vmatprep.subr.bf16.mxu0 %v1723
        %3379 = vmatpush1.bf16.msra.mxu0 %v1722
        %3380 = vmatprep.subr.bf16.mxu0 %v1727
        %3381 = vmatpush1.bf16.msra.mxu0 %v1726
        %3382 = vmatprep.mubr.bf16.mxu0 %v2784
        %3383 = vmatmul.mubr.bf16.gmra.mrb[0].mxu0 %v2782
        %v3384 = vpop.f32.mrb[0].mxu0
        %v3385 = vadd.f32 %v3344, %v3384
        %v3386 = vpop.f32.mrb[0].mxu0
        %v3387 = vadd.f32 %v3346, %v3386
        %v3388 = vpop.f32.mrb[0].mxu0
        %v3389 = vpop.f32.mrb[0].mxu0
        %3390 = vdwg.mxu0
        %3391 = vmatprep.subr.bf16.mxu0 %v1731
        %3392 = vmatpush1.bf16.msra.mxu0 %v1730
        %3393 = vmatprep.subr.bf16.mxu0 %v1735
        %3394 = vmatpush1.bf16.msra.mxu0 %v1734
        %3395 = vmatprep.subr.bf16.mxu0 %v1739
        %3396 = vmatpush1.bf16.msra.mxu0 %v1738
        %3397 = vmatprep.subr.bf16.mxu0 %v1743
        %3398 = vmatpush1.bf16.msra.mxu0 %v1742
        %3399 = vmatprep.subr.bf16.mxu0 %v1747
        %3400 = vmatpush1.bf16.msra.mxu0 %v1746
        %3401 = vmatprep.subr.bf16.mxu0 %v1751
        %3402 = vmatpush1.bf16.msra.mxu0 %v1750
        %3403 = vmatprep.subr.bf16.mxu0 %v1755
        %3404 = vmatpush1.bf16.msra.mxu0 %v1754
        %3405 = vmatprep.subr.bf16.mxu0 %v1759
        %3406 = vmatpush1.bf16.msra.mxu0 %v1758
        %3407 = vmatprep.subr.bf16.mxu0 %v1763
        %3408 = vmatpush1.bf16.msra.mxu0 %v1762
        %3409 = vmatprep.subr.bf16.mxu0 %v1767
        %3410 = vmatpush1.bf16.msra.mxu0 %v1766
        %3411 = vmatprep.subr.bf16.mxu0 %v1771
        %3412 = vmatpush1.bf16.msra.mxu0 %v1770
        %3413 = vmatprep.subr.bf16.mxu0 %v1775
        %3414 = vmatpush1.bf16.msra.mxu0 %v1774
        %3415 = vmatprep.subr.bf16.mxu0 %v1779
        %3416 = vmatpush1.bf16.msra.mxu0 %v1778
        %3417 = vmatprep.subr.bf16.mxu0 %v1783
        %3418 = vmatpush1.bf16.msra.mxu0 %v1782
        %3419 = vmatprep.subr.bf16.mxu0 %v1787
        %3420 = vmatpush1.bf16.msra.mxu0 %v1786
        %3421 = vmatprep.subr.bf16.mxu0 %v1791
        %3422 = vmatpush1.bf16.msra.mxu0 %v1790
        %3423 = vmatprep.mubr.bf16.mxu0 %v2781
        %3424 = vmatmul.mubr.bf16.gmra.mrb[0].mxu0 %v2767
        %v3425 = vpop.f32.mrb[0].mxu0
        %v3426 = vadd.f32 %v3385, %v3425
        %v3427 = vpop.f32.mrb[0].mxu0
        %v3428 = vadd.f32 %v3387, %v3427
        %v3429 = vpop.f32.mrb[0].mxu0
        %v3430 = vpop.f32.mrb[0].mxu0
        %3431 = vdwg.mxu0
        %3432 = vmatprep.subr.bf16.mxu0 %v1795
        %3433 = vmatpush1.bf16.msra.mxu0 %v1794
        %3434 = vmatprep.subr.bf16.mxu0 %v1799
        %3435 = vmatpush1.bf16.msra.mxu0 %v1798
        %3436 = vmatprep.subr.bf16.mxu0 %v1803
        %3437 = vmatpush1.bf16.msra.mxu0 %v1802
        %3438 = vmatprep.subr.bf16.mxu0 %v1807
        %3439 = vmatpush1.bf16.msra.mxu0 %v1806
        %3440 = vmatprep.subr.bf16.mxu0 %v1811
        %3441 = vmatpush1.bf16.msra.mxu0 %v1810
        %3442 = vmatprep.subr.bf16.mxu0 %v1815
        %3443 = vmatpush1.bf16.msra.mxu0 %v1814
        %3444 = vmatprep.subr.bf16.mxu0 %v1819
        %3445 = vmatpush1.bf16.msra.mxu0 %v1818
        %3446 = vmatprep.subr.bf16.mxu0 %v1823
        %3447 = vmatpush1.bf16.msra.mxu0 %v1822
        %3448 = vmatprep.subr.bf16.mxu0 %v1827
        %3449 = vmatpush1.bf16.msra.mxu0 %v1826
        %3450 = vmatprep.subr.bf16.mxu0 %v1831
        %3451 = vmatpush1.bf16.msra.mxu0 %v1830
        %3452 = vmatprep.subr.bf16.mxu0 %v1835
        %3453 = vmatpush1.bf16.msra.mxu0 %v1834
        %3454 = vmatprep.subr.bf16.mxu0 %v1839
        %3455 = vmatpush1.bf16.msra.mxu0 %v1838
        %3456 = vmatprep.subr.bf16.mxu0 %v1843
        %3457 = vmatpush1.bf16.msra.mxu0 %v1842
        %3458 = vmatprep.subr.bf16.mxu0 %v1847
        %3459 = vmatpush1.bf16.msra.mxu0 %v1846
        %3460 = vmatprep.subr.bf16.mxu0 %v1851
        %3461 = vmatpush1.bf16.msra.mxu0 %v1850
        %3462 = vmatprep.subr.bf16.mxu0 %v1855
        %3463 = vmatpush1.bf16.msra.mxu0 %v1854
        %3464 = vmatprep.mubr.bf16.mxu0 %v2785
        %3465 = vmatmul.mubr.bf16.gmra.mrb[0].mxu0 %v2783
        %v3466 = vpop.f32.mrb[0].mxu0
        %v3467 = vadd.f32 %v3426, %v3466
        %v3468 = vpop.f32.mrb[0].mxu0
        %v3469 = vadd.f32 %v3428, %v3468
        %v3470 = vpop.f32.mrb[0].mxu0
        %v3471 = vpop.f32.mrb[0].mxu0
        %3472 = vdwg.mxu0
        %3473 = vmatprep.subr.bf16.mxu0 %v1859
        %3474 = vmatpush1.bf16.msra.mxu0 %v1858
        %3475 = vmatprep.subr.bf16.mxu0 %v1863
        %3476 = vmatpush1.bf16.msra.mxu0 %v1862
        %3477 = vmatprep.subr.bf16.mxu0 %v1867
        %3478 = vmatpush1.bf16.msra.mxu0 %v1866
        %3479 = vmatprep.subr.bf16.mxu0 %v1871
        %3480 = vmatpush1.bf16.msra.mxu0 %v1870
        %3481 = vmatprep.subr.bf16.mxu0 %v1875
        %3482 = vmatpush1.bf16.msra.mxu0 %v1874
        %3483 = vmatprep.subr.bf16.mxu0 %v1879
        %3484 = vmatpush1.bf16.msra.mxu0 %v1878
        %3485 = vmatprep.subr.bf16.mxu0 %v1883
        %3486 = vmatpush1.bf16.msra.mxu0 %v1882
        %3487 = vmatprep.subr.bf16.mxu0 %v1887
        %3488 = vmatpush1.bf16.msra.mxu0 %v1886
        %3489 = vmatprep.subr.bf16.mxu0 %v1891
        %3490 = vmatpush1.bf16.msra.mxu0 %v1890
        %3491 = vmatprep.subr.bf16.mxu0 %v1895
        %3492 = vmatpush1.bf16.msra.mxu0 %v1894
        %3493 = vmatprep.subr.bf16.mxu0 %v1899
        %3494 = vmatpush1.bf16.msra.mxu0 %v1898
        %3495 = vmatprep.subr.bf16.mxu0 %v1903
        %3496 = vmatpush1.bf16.msra.mxu0 %v1902
        %3497 = vmatprep.subr.bf16.mxu0 %v1907
        %3498 = vmatpush1.bf16.msra.mxu0 %v1906
        %3499 = vmatprep.subr.bf16.mxu0 %v1911
        %3500 = vmatpush1.bf16.msra.mxu0 %v1910
        %3501 = vmatprep.subr.bf16.mxu0 %v1915
        %3502 = vmatpush1.bf16.msra.mxu0 %v1914
        %3503 = vmatprep.subr.bf16.mxu0 %v1919
        %3504 = vmatpush1.bf16.msra.mxu0 %v1918
        %3505 = vmatprep.mubr.bf16.mxu0 %v2823
        %3506 = vmatmul.mubr.bf16.gmra.mrb[0].mxu0 %v2809
        %v3507 = vpop.f32.mrb[0].mxu0
        %v3508 = vadd.f32 %v3467, %v3507
        %v3509 = vpop.f32.mrb[0].mxu0
        %v3510 = vadd.f32 %v3469, %v3509
        %v3511 = vpop.f32.mrb[0].mxu0
        %v3512 = vpop.f32.mrb[0].mxu0
        %3513 = vdwg.mxu0
        %3514 = vmatprep.subr.bf16.mxu0 %v1923
        %3515 = vmatpush1.bf16.msra.mxu0 %v1922
        %3516 = vmatprep.subr.bf16.mxu0 %v1927
        %3517 = vmatpush1.bf16.msra.mxu0 %v1926
        %3518 = vmatprep.subr.bf16.mxu0 %v1931
        %3519 = vmatpush1.bf16.msra.mxu0 %v1930
        %3520 = vmatprep.subr.bf16.mxu0 %v1935
        %3521 = vmatpush1.bf16.msra.mxu0 %v1934
        %3522 = vmatprep.subr.bf16.mxu0 %v1939
        %3523 = vmatpush1.bf16.msra.mxu0 %v1938
        %3524 = vmatprep.subr.bf16.mxu0 %v1943
        %3525 = vmatpush1.bf16.msra.mxu0 %v1942
        %3526 = vmatprep.subr.bf16.mxu0 %v1947
        %3527 = vmatpush1.bf16.msra.mxu0 %v1946
        %3528 = vmatprep.subr.bf16.mxu0 %v1951
        %3529 = vmatpush1.bf16.msra.mxu0 %v1950
        %3530 = vmatprep.subr.bf16.mxu0 %v1955
        %3531 = vmatpush1.bf16.msra.mxu0 %v1954
        %3532 = vmatprep.subr.bf16.mxu0 %v1959
        %3533 = vmatpush1.bf16.msra.mxu0 %v1958
        %3534 = vmatprep.subr.bf16.mxu0 %v1963
        %3535 = vmatpush1.bf16.msra.mxu0 %v1962
        %3536 = vmatprep.subr.bf16.mxu0 %v1967
        %3537 = vmatpush1.bf16.msra.mxu0 %v1966
        %3538 = vmatprep.subr.bf16.mxu0 %v1971
        %3539 = vmatpush1.bf16.msra.mxu0 %v1970
        %3540 = vmatprep.subr.bf16.mxu0 %v1975
        %3541 = vmatpush1.bf16.msra.mxu0 %v1974
        %3542 = vmatprep.subr.bf16.mxu0 %v1979
        %3543 = vmatpush1.bf16.msra.mxu0 %v1978
        %3544 = vmatprep.subr.bf16.mxu0 %v1983
        %3545 = vmatpush1.bf16.msra.mxu0 %v1982
        %3546 = vmatprep.mubr.bf16.mxu0 %v2833
        %3547 = vmatmul.mubr.bf16.gmra.mrb[0].mxu0 %v2831
        %v3548 = vpop.f32.mrb[0].mxu0
        %v3549 = vadd.f32 %v3508, %v3548
        %v3550 = vpop.f32.mrb[0].mxu0
        %v3551 = vadd.f32 %v3510, %v3550
        %v3552 = vpop.f32.mrb[0].mxu0
        %v3553 = vpop.f32.mrb[0].mxu0
        %3554 = vdwg.mxu0
        %3555 = vmatprep.subr.bf16.mxu0 %v1987
        %3556 = vmatpush1.bf16.msra.mxu0 %v1986
        %3557 = vmatprep.subr.bf16.mxu0 %v1991
        %3558 = vmatpush1.bf16.msra.mxu0 %v1990
        %3559 = vmatprep.subr.bf16.mxu0 %v1995
        %3560 = vmatpush1.bf16.msra.mxu0 %v1994
        %3561 = vmatprep.subr.bf16.mxu0 %v1999
        %3562 = vmatpush1.bf16.msra.mxu0 %v1998
        %3563 = vmatprep.subr.bf16.mxu0 %v2003
        %3564 = vmatpush1.bf16.msra.mxu0 %v2002
        %3565 = vmatprep.subr.bf16.mxu0 %v2007
        %3566 = vmatpush1.bf16.msra.mxu0 %v2006
        %3567 = vmatprep.subr.bf16.mxu0 %v2011
        %3568 = vmatpush1.bf16.msra.mxu0 %v2010
        %3569 = vmatprep.subr.bf16.mxu0 %v2015
        %3570 = vmatpush1.bf16.msra.mxu0 %v2014
        %3571 = vmatprep.subr.bf16.mxu0 %v2019
        %3572 = vmatpush1.bf16.msra.mxu0 %v2018
        %3573 = vmatprep.subr.bf16.mxu0 %v2023
        %3574 = vmatpush1.bf16.msra.mxu0 %v2022
        %3575 = vmatprep.subr.bf16.mxu0 %v2027
        %3576 = vmatpush1.bf16.msra.mxu0 %v2026
        %3577 = vmatprep.subr.bf16.mxu0 %v2031
        %3578 = vmatpush1.bf16.msra.mxu0 %v2030
        %3579 = vmatprep.subr.bf16.mxu0 %v2035
        %3580 = vmatpush1.bf16.msra.mxu0 %v2034
        %3581 = vmatprep.subr.bf16.mxu0 %v2039
        %3582 = vmatpush1.bf16.msra.mxu0 %v2038
        %3583 = vmatprep.subr.bf16.mxu0 %v2043
        %3584 = vmatpush1.bf16.msra.mxu0 %v2042
        %3585 = vmatprep.subr.bf16.mxu0 %v2047
        %3586 = vmatpush1.bf16.msra.mxu0 %v2046
        %3587 = vmatprep.mubr.bf16.mxu0 %v2830
        %3588 = vmatmul.mubr.bf16.gmra.mrb[0].mxu0 %v2816
        %v3589 = vpop.f32.mrb[0].mxu0
        %v3590 = vadd.f32 %v3549, %v3589
        %v3591 = vpop.f32.mrb[0].mxu0
        %v3592 = vadd.f32 %v3551, %v3591
        %v3593 = vpop.f32.mrb[0].mxu0
        %v3594 = vpop.f32.mrb[0].mxu0
        %3595 = vdwg.mxu0
        %3596 = vmatprep.subr.bf16.mxu0 %v2051
        %3597 = vmatpush1.bf16.msra.mxu0 %v2050
        %3598 = vmatprep.subr.bf16.mxu0 %v2055
        %3599 = vmatpush1.bf16.msra.mxu0 %v2054
        %3600 = vmatprep.subr.bf16.mxu0 %v2059
        %3601 = vmatpush1.bf16.msra.mxu0 %v2058
        %3602 = vmatprep.subr.bf16.mxu0 %v2063
        %3603 = vmatpush1.bf16.msra.mxu0 %v2062
        %3604 = vmatprep.subr.bf16.mxu0 %v2067
        %3605 = vmatpush1.bf16.msra.mxu0 %v2066
        %3606 = vmatprep.subr.bf16.mxu0 %v2071
        %3607 = vmatpush1.bf16.msra.mxu0 %v2070
        %3608 = vmatprep.subr.bf16.mxu0 %v2075
        %3609 = vmatpush1.bf16.msra.mxu0 %v2074
        %3610 = vmatprep.subr.bf16.mxu0 %v2079
        %3611 = vmatpush1.bf16.msra.mxu0 %v2078
        %3612 = vmatprep.subr.bf16.mxu0 %v2083
        %3613 = vmatpush1.bf16.msra.mxu0 %v2082
        %3614 = vmatprep.subr.bf16.mxu0 %v2087
        %3615 = vmatpush1.bf16.msra.mxu0 %v2086
        %3616 = vmatprep.subr.bf16.mxu0 %v2091
        %3617 = vmatpush1.bf16.msra.mxu0 %v2090
        %3618 = vmatprep.subr.bf16.mxu0 %v2095
        %3619 = vmatpush1.bf16.msra.mxu0 %v2094
        %3620 = vmatprep.subr.bf16.mxu0 %v2099
        %3621 = vmatpush1.bf16.msra.mxu0 %v2098
        %3622 = vmatprep.subr.bf16.mxu0 %v2103
        %3623 = vmatpush1.bf16.msra.mxu0 %v2102
        %3624 = vmatprep.subr.bf16.mxu0 %v2107
        %3625 = vmatpush1.bf16.msra.mxu0 %v2106
        %3626 = vmatprep.subr.bf16.mxu0 %v2111
        %3627 = vmatpush1.bf16.msra.mxu0 %v2110
        %3628 = vmatprep.mubr.bf16.mxu0 %v2834
        %3629 = vmatmul.mubr.bf16.gmra.mrb[0].mxu0 %v2832
        %v3630 = vpop.f32.mrb[0].mxu0
        %v3631 = vadd.f32 %v3590, %v3630
        %v3632 = vpop.f32.mrb[0].mxu0
        %v3633 = vadd.f32 %v3592, %v3632
        %v3634 = vpop.f32.mrb[0].mxu0
        %v3635 = vpop.f32.mrb[0].mxu0
        %3636 = vdwg.mxu0
        %3637 = vmatprep.subr.bf16.mxu0 %v2115
        %3638 = vmatpush1.bf16.msra.mxu0 %v2114
        %3639 = vmatprep.subr.bf16.mxu0 %v2119
        %3640 = vmatpush1.bf16.msra.mxu0 %v2118
        %3641 = vmatprep.subr.bf16.mxu0 %v2123
        %3642 = vmatpush1.bf16.msra.mxu0 %v2122
        %3643 = vmatprep.subr.bf16.mxu0 %v2127
        %3644 = vmatpush1.bf16.msra.mxu0 %v2126
        %3645 = vmatprep.subr.bf16.mxu0 %v2131
        %3646 = vmatpush1.bf16.msra.mxu0 %v2130
        %3647 = vmatprep.subr.bf16.mxu0 %v2135
        %3648 = vmatpush1.bf16.msra.mxu0 %v2134
        %3649 = vmatprep.subr.bf16.mxu0 %v2139
        %3650 = vmatpush1.bf16.msra.mxu0 %v2138
        %3651 = vmatprep.subr.bf16.mxu0 %v2143
        %3652 = vmatpush1.bf16.msra.mxu0 %v2142
        %3653 = vmatprep.subr.bf16.mxu0 %v2147
        %3654 = vmatpush1.bf16.msra.mxu0 %v2146
        %3655 = vmatprep.subr.bf16.mxu0 %v2151
        %3656 = vmatpush1.bf16.msra.mxu0 %v2150
        %3657 = vmatprep.subr.bf16.mxu0 %v2155
        %3658 = vmatpush1.bf16.msra.mxu0 %v2154
        %3659 = vmatprep.subr.bf16.mxu0 %v2159
        %3660 = vmatpush1.bf16.msra.mxu0 %v2158
        %3661 = vmatprep.subr.bf16.mxu0 %v2163
        %3662 = vmatpush1.bf16.msra.mxu0 %v2162
        %3663 = vmatprep.subr.bf16.mxu0 %v2167
        %3664 = vmatpush1.bf16.msra.mxu0 %v2166
        %3665 = vmatprep.subr.bf16.mxu0 %v2171
        %3666 = vmatpush1.bf16.msra.mxu0 %v2170
        %3667 = vmatprep.subr.bf16.mxu0 %v2175
        %3668 = vmatpush1.bf16.msra.mxu0 %v2174
        %3669 = vmatprep.mubr.bf16.mxu0 %v2872
        %3670 = vmatmul.mubr.bf16.gmra.mrb[0].mxu0 %v2858
        %v3671 = vpop.f32.mrb[0].mxu0
        %v3672 = vadd.f32 %v3631, %v3671
        %v3673 = vpop.f32.mrb[0].mxu0
        %v3674 = vadd.f32 %v3633, %v3673
        %v3675 = vpop.f32.mrb[0].mxu0
        %v3676 = vpop.f32.mrb[0].mxu0
        %3677 = vdwg.mxu0
        %3678 = vmatprep.subr.bf16.mxu0 %v2179
        %3679 = vmatpush1.bf16.msra.mxu0 %v2178
        %3680 = vmatprep.subr.bf16.mxu0 %v2183
        %3681 = vmatpush1.bf16.msra.mxu0 %v2182
        %3682 = vmatprep.subr.bf16.mxu0 %v2187
        %3683 = vmatpush1.bf16.msra.mxu0 %v2186
        %3684 = vmatprep.subr.bf16.mxu0 %v2191
        %3685 = vmatpush1.bf16.msra.mxu0 %v2190
        %3686 = vmatprep.subr.bf16.mxu0 %v2195
        %3687 = vmatpush1.bf16.msra.mxu0 %v2194
        %3688 = vmatprep.subr.bf16.mxu0 %v2199
        %3689 = vmatpush1.bf16.msra.mxu0 %v2198
        %3690 = vmatprep.subr.bf16.mxu0 %v2203
        %3691 = vmatpush1.bf16.msra.mxu0 %v2202
        %3692 = vmatprep.subr.bf16.mxu0 %v2207
        %3693 = vmatpush1.bf16.msra.mxu0 %v2206
        %3694 = vmatprep.subr.bf16.mxu0 %v2211
        %3695 = vmatpush1.bf16.msra.mxu0 %v2210
        %3696 = vmatprep.subr.bf16.mxu0 %v2215
        %3697 = vmatpush1.bf16.msra.mxu0 %v2214
        %3698 = vmatprep.subr.bf16.mxu0 %v2219
        %3699 = vmatpush1.bf16.msra.mxu0 %v2218
        %3700 = vmatprep.subr.bf16.mxu0 %v2223
        %3701 = vmatpush1.bf16.msra.mxu0 %v2222
        %3702 = vmatprep.subr.bf16.mxu0 %v2227
        %3703 = vmatpush1.bf16.msra.mxu0 %v2226
        %3704 = vmatprep.subr.bf16.mxu0 %v2231
        %3705 = vmatpush1.bf16.msra.mxu0 %v2230
        %3706 = vmatprep.subr.bf16.mxu0 %v2235
        %3707 = vmatpush1.bf16.msra.mxu0 %v2234
        %3708 = vmatprep.subr.bf16.mxu0 %v2239
        %3709 = vmatpush1.bf16.msra.mxu0 %v2238
        %3710 = vmatprep.mubr.bf16.mxu0 %v2882
        %3711 = vmatmul.mubr.bf16.gmra.mrb[0].mxu0 %v2880
        %v3712 = vpop.f32.mrb[0].mxu0
        %v3713 = vadd.f32 %v3672, %v3712
        %v3714 = vpop.f32.mrb[0].mxu0
        %v3715 = vadd.f32 %v3674, %v3714
        %v3716 = vpop.f32.mrb[0].mxu0
        %v3717 = vpop.f32.mrb[0].mxu0
        %3718 = vdwg.mxu0
        %3719 = vmatprep.subr.bf16.mxu0 %v2243
        %3720 = vmatpush1.bf16.msra.mxu0 %v2242
        %3721 = vmatprep.subr.bf16.mxu0 %v2247
        %3722 = vmatpush1.bf16.msra.mxu0 %v2246
        %3723 = vmatprep.subr.bf16.mxu0 %v2251
        %3724 = vmatpush1.bf16.msra.mxu0 %v2250
        %3725 = vmatprep.subr.bf16.mxu0 %v2255
        %3726 = vmatpush1.bf16.msra.mxu0 %v2254
        %3727 = vmatprep.subr.bf16.mxu0 %v2259
        %3728 = vmatpush1.bf16.msra.mxu0 %v2258
        %3729 = vmatprep.subr.bf16.mxu0 %v2263
        %3730 = vmatpush1.bf16.msra.mxu0 %v2262
        %3731 = vmatprep.subr.bf16.mxu0 %v2267
        %3732 = vmatpush1.bf16.msra.mxu0 %v2266
        %3733 = vmatprep.subr.bf16.mxu0 %v2271
        %3734 = vmatpush1.bf16.msra.mxu0 %v2270
        %3735 = vmatprep.subr.bf16.mxu0 %v2275
        %3736 = vmatpush1.bf16.msra.mxu0 %v2274
        %3737 = vmatprep.subr.bf16.mxu0 %v2279
        %3738 = vmatpush1.bf16.msra.mxu0 %v2278
        %3739 = vmatprep.subr.bf16.mxu0 %v2283
        %3740 = vmatpush1.bf16.msra.mxu0 %v2282
        %3741 = vmatprep.subr.bf16.mxu0 %v2287
        %3742 = vmatpush1.bf16.msra.mxu0 %v2286
        %3743 = vmatprep.subr.bf16.mxu0 %v2291
        %3744 = vmatpush1.bf16.msra.mxu0 %v2290
        %3745 = vmatprep.subr.bf16.mxu0 %v2295
        %3746 = vmatpush1.bf16.msra.mxu0 %v2294
        %3747 = vmatprep.subr.bf16.mxu0 %v2299
        %3748 = vmatpush1.bf16.msra.mxu0 %v2298
        %3749 = vmatprep.subr.bf16.mxu0 %v2303
        %3750 = vmatpush1.bf16.msra.mxu0 %v2302
        %3751 = vmatprep.mubr.bf16.mxu0 %v2879
        %3752 = vmatmul.mubr.bf16.gmra.mrb[0].mxu0 %v2865
        %v3753 = vpop.f32.mrb[0].mxu0
        %v3754 = vadd.f32 %v3713, %v3753
        %v3755 = vpop.f32.mrb[0].mxu0
        %v3756 = vadd.f32 %v3715, %v3755
        %v3757 = vpop.f32.mrb[0].mxu0
        %v3758 = vpop.f32.mrb[0].mxu0
        %3759 = vdwg.mxu0
        %3760 = vmatprep.subr.bf16.mxu0 %v2307
        %3761 = vmatpush1.bf16.msra.mxu0 %v2306
        %3762 = vmatprep.subr.bf16.mxu0 %v2311
        %3763 = vmatpush1.bf16.msra.mxu0 %v2310
        %3764 = vmatprep.subr.bf16.mxu0 %v2315
        %3765 = vmatpush1.bf16.msra.mxu0 %v2314
        %3766 = vmatprep.subr.bf16.mxu0 %v2319
        %3767 = vmatpush1.bf16.msra.mxu0 %v2318
        %3768 = vmatprep.subr.bf16.mxu0 %v2323
        %3769 = vmatpush1.bf16.msra.mxu0 %v2322
        %3770 = vmatprep.subr.bf16.mxu0 %v2327
        %3771 = vmatpush1.bf16.msra.mxu0 %v2326
        %3772 = vmatprep.subr.bf16.mxu0 %v2331
        %3773 = vmatpush1.bf16.msra.mxu0 %v2330
        %3774 = vmatprep.subr.bf16.mxu0 %v2335
        %3775 = vmatpush1.bf16.msra.mxu0 %v2334
        %3776 = vmatprep.subr.bf16.mxu0 %v2339
        %3777 = vmatpush1.bf16.msra.mxu0 %v2338
        %3778 = vmatprep.subr.bf16.mxu0 %v2343
        %3779 = vmatpush1.bf16.msra.mxu0 %v2342
        %3780 = vmatprep.subr.bf16.mxu0 %v2347
        %3781 = vmatpush1.bf16.msra.mxu0 %v2346
        %3782 = vmatprep.subr.bf16.mxu0 %v2351
        %3783 = vmatpush1.bf16.msra.mxu0 %v2350
        %3784 = vmatprep.subr.bf16.mxu0 %v2355
        %3785 = vmatpush1.bf16.msra.mxu0 %v2354
        %3786 = vmatprep.subr.bf16.mxu0 %v2359
        %3787 = vmatpush1.bf16.msra.mxu0 %v2358
        %3788 = vmatprep.subr.bf16.mxu0 %v2363
        %3789 = vmatpush1.bf16.msra.mxu0 %v2362
        %3790 = vmatprep.subr.bf16.mxu0 %v2367
        %3791 = vmatpush1.bf16.msra.mxu0 %v2366
        %3792 = vmatprep.mubr.bf16.mxu0 %v2883
        %3793 = vmatmul.mubr.bf16.gmra.mrb[0].mxu0 %v2881
        %v3794 = vpop.f32.mrb[0].mxu0
        %v3795 = vadd.f32 %v3754, %v3794
        %v3796 = vpop.f32.mrb[0].mxu0
        %v3797 = vadd.f32 %v3756, %v3796
        %v3798 = vpop.f32.mrb[0].mxu0
        %v3799 = vpop.f32.mrb[0].mxu0
        %3800 = vdwg.mxu0
        %3801 = vmatprep.subr.bf16.mxu0 %v2371
        %3802 = vmatpush1.bf16.msra.mxu0 %v2370
        %3803 = vmatprep.subr.bf16.mxu0 %v2375
        %3804 = vmatpush1.bf16.msra.mxu0 %v2374
        %3805 = vmatprep.subr.bf16.mxu0 %v2379
        %3806 = vmatpush1.bf16.msra.mxu0 %v2378
        %3807 = vmatprep.subr.bf16.mxu0 %v2383
        %3808 = vmatpush1.bf16.msra.mxu0 %v2382
        %3809 = vmatprep.subr.bf16.mxu0 %v2387
        %3810 = vmatpush1.bf16.msra.mxu0 %v2386
        %3811 = vmatprep.subr.bf16.mxu0 %v2391
        %3812 = vmatpush1.bf16.msra.mxu0 %v2390
        %3813 = vmatprep.subr.bf16.mxu0 %v2395
        %3814 = vmatpush1.bf16.msra.mxu0 %v2394
        %3815 = vmatprep.subr.bf16.mxu0 %v2399
        %3816 = vmatpush1.bf16.msra.mxu0 %v2398
        %3817 = vmatprep.subr.bf16.mxu0 %v2403
        %3818 = vmatpush1.bf16.msra.mxu0 %v2402
        %3819 = vmatprep.subr.bf16.mxu0 %v2407
        %3820 = vmatpush1.bf16.msra.mxu0 %v2406
        %3821 = vmatprep.subr.bf16.mxu0 %v2411
        %3822 = vmatpush1.bf16.msra.mxu0 %v2410
        %3823 = vmatprep.subr.bf16.mxu0 %v2415
        %3824 = vmatpush1.bf16.msra.mxu0 %v2414
        %3825 = vmatprep.subr.bf16.mxu0 %v2419
        %3826 = vmatpush1.bf16.msra.mxu0 %v2418
        %3827 = vmatprep.subr.bf16.mxu0 %v2423
        %3828 = vmatpush1.bf16.msra.mxu0 %v2422
        %3829 = vmatprep.subr.bf16.mxu0 %v2427
        %3830 = vmatpush1.bf16.msra.mxu0 %v2426
        %3831 = vmatprep.subr.bf16.mxu0 %v2431
        %3832 = vmatpush1.bf16.msra.mxu0 %v2430
        %3833 = vmatprep.mubr.bf16.mxu0 %v2921
        %3834 = vmatmul.mubr.bf16.gmra.mrb[0].mxu0 %v2907
        %v3835 = vpop.f32.mrb[0].mxu0
        %v3836 = vadd.f32 %v3795, %v3835
        %v3837 = vpop.f32.mrb[0].mxu0
        %v3838 = vadd.f32 %v3797, %v3837
        %v3839 = vpop.f32.mrb[0].mxu0
        %v3840 = vpop.f32.mrb[0].mxu0
        %3841 = vdwg.mxu0
        %3842 = vmatprep.subr.bf16.mxu0 %v2435
        %3843 = vmatpush1.bf16.msra.mxu0 %v2434
        %3844 = vmatprep.subr.bf16.mxu0 %v2439
        %3845 = vmatpush1.bf16.msra.mxu0 %v2438
        %3846 = vmatprep.subr.bf16.mxu0 %v2443
        %3847 = vmatpush1.bf16.msra.mxu0 %v2442
        %3848 = vmatprep.subr.bf16.mxu0 %v2447
        %3849 = vmatpush1.bf16.msra.mxu0 %v2446
        %3850 = vmatprep.subr.bf16.mxu0 %v2451
        %3851 = vmatpush1.bf16.msra.mxu0 %v2450
        %3852 = vmatprep.subr.bf16.mxu0 %v2455
        %3853 = vmatpush1.bf16.msra.mxu0 %v2454
        %3854 = vmatprep.subr.bf16.mxu0 %v2459
        %3855 = vmatpush1.bf16.msra.mxu0 %v2458
        %3856 = vmatprep.subr.bf16.mxu0 %v2463
        %3857 = vmatpush1.bf16.msra.mxu0 %v2462
        %3858 = vmatprep.subr.bf16.mxu0 %v2467
        %3859 = vmatpush1.bf16.msra.mxu0 %v2466
        %3860 = vmatprep.subr.bf16.mxu0 %v2471
        %3861 = vmatpush1.bf16.msra.mxu0 %v2470
        %3862 = vmatprep.subr.bf16.mxu0 %v2475
        %3863 = vmatpush1.bf16.msra.mxu0 %v2474
        %3864 = vmatprep.subr.bf16.mxu0 %v2479
        %3865 = vmatpush1.bf16.msra.mxu0 %v2478
        %3866 = vmatprep.subr.bf16.mxu0 %v2483
        %3867 = vmatpush1.bf16.msra.mxu0 %v2482
        %3868 = vmatprep.subr.bf16.mxu0 %v2487
        %3869 = vmatpush1.bf16.msra.mxu0 %v2486
        %3870 = vmatprep.subr.bf16.mxu0 %v2491
        %3871 = vmatpush1.bf16.msra.mxu0 %v2490
        %3872 = vmatprep.subr.bf16.mxu0 %v2495
        %3873 = vmatpush1.bf16.msra.mxu0 %v2494
        %3874 = vmatprep.mubr.bf16.mxu0 %v2931
        %3875 = vmatmul.mubr.bf16.gmra.mrb[0].mxu0 %v2929
        %v3876 = vpop.f32.mrb[0].mxu0
        %v3877 = vadd.f32 %v3836, %v3876
        %v3878 = vpop.f32.mrb[0].mxu0
        %v3879 = vadd.f32 %v3838, %v3878
        %v3880 = vpop.f32.mrb[0].mxu0
        %v3881 = vpop.f32.mrb[0].mxu0
        %3882 = vdwg.mxu0
        %3883 = vmatprep.subr.bf16.mxu0 %v2499
        %3884 = vmatpush1.bf16.msra.mxu0 %v2498
        %3885 = vmatprep.subr.bf16.mxu0 %v2503
        %3886 = vmatpush1.bf16.msra.mxu0 %v2502
        %3887 = vmatprep.subr.bf16.mxu0 %v2507
        %3888 = vmatpush1.bf16.msra.mxu0 %v2506
        %3889 = vmatprep.subr.bf16.mxu0 %v2511
        %3890 = vmatpush1.bf16.msra.mxu0 %v2510
        %3891 = vmatprep.subr.bf16.mxu0 %v2515
        %3892 = vmatpush1.bf16.msra.mxu0 %v2514
        %3893 = vmatprep.subr.bf16.mxu0 %v2519
        %3894 = vmatpush1.bf16.msra.mxu0 %v2518
        %3895 = vmatprep.subr.bf16.mxu0 %v2523
        %3896 = vmatpush1.bf16.msra.mxu0 %v2522
        %3897 = vmatprep.subr.bf16.mxu0 %v2527
        %3898 = vmatpush1.bf16.msra.mxu0 %v2526
        %3899 = vmatprep.subr.bf16.mxu0 %v2531
        %3900 = vmatpush1.bf16.msra.mxu0 %v2530
        %3901 = vmatprep.subr.bf16.mxu0 %v2535
        %3902 = vmatpush1.bf16.msra.mxu0 %v2534
        %3903 = vmatprep.subr.bf16.mxu0 %v2539
        %3904 = vmatpush1.bf16.msra.mxu0 %v2538
        %3905 = vmatprep.subr.bf16.mxu0 %v2543
        %3906 = vmatpush1.bf16.msra.mxu0 %v2542
        %3907 = vmatprep.subr.bf16.mxu0 %v2547
        %3908 = vmatpush1.bf16.msra.mxu0 %v2546
        %3909 = vmatprep.subr.bf16.mxu0 %v2551
        %3910 = vmatpush1.bf16.msra.mxu0 %v2550
        %3911 = vmatprep.subr.bf16.mxu0 %v2555
        %3912 = vmatpush1.bf16.msra.mxu0 %v2554
        %3913 = vmatprep.subr.bf16.mxu0 %v2559
        %3914 = vmatpush1.bf16.msra.mxu0 %v2558
        %3915 = vmatprep.mubr.bf16.mxu0 %v2928
        %3916 = vmatmul.mubr.bf16.gmra.mrb[0].mxu0 %v2914
        %v3917 = vpop.f32.mrb[0].mxu0
        %v3918 = vadd.f32 %v3877, %v3917
        %v3919 = vpop.f32.mrb[0].mxu0
        %v3920 = vadd.f32 %v3879, %v3919
        %v3921 = vpop.f32.mrb[0].mxu0
        %v3922 = vpop.f32.mrb[0].mxu0
        %3923 = vdwg.mxu0
        %3924 = vmatprep.subr.bf16.mxu0 %v2563
        %3925 = vmatpush1.bf16.msra.mxu0 %v2562
        %3926 = vmatprep.subr.bf16.mxu0 %v2567
        %3927 = vmatpush1.bf16.msra.mxu0 %v2566
        %3928 = vmatprep.subr.bf16.mxu0 %v2571
        %3929 = vmatpush1.bf16.msra.mxu0 %v2570
        %3930 = vmatprep.subr.bf16.mxu0 %v2575
        %3931 = vmatpush1.bf16.msra.mxu0 %v2574
        %3932 = vmatprep.subr.bf16.mxu0 %v2579
        %3933 = vmatpush1.bf16.msra.mxu0 %v2578
        %3934 = vmatprep.subr.bf16.mxu0 %v2583
        %3935 = vmatpush1.bf16.msra.mxu0 %v2582
        %3936 = vmatprep.subr.bf16.mxu0 %v2587
        %3937 = vmatpush1.bf16.msra.mxu0 %v2586
        %3938 = vmatprep.subr.bf16.mxu0 %v2591
        %3939 = vmatpush1.bf16.msra.mxu0 %v2590
        %3940 = vmatprep.subr.bf16.mxu0 %v2595
        %3941 = vmatpush1.bf16.msra.mxu0 %v2594
        %3942 = vmatprep.subr.bf16.mxu0 %v2599
        %3943 = vmatpush1.bf16.msra.mxu0 %v2598
        %3944 = vmatprep.subr.bf16.mxu0 %v2603
        %3945 = vmatpush1.bf16.msra.mxu0 %v2602
        %3946 = vmatprep.subr.bf16.mxu0 %v2607
        %3947 = vmatpush1.bf16.msra.mxu0 %v2606
        %3948 = vmatprep.subr.bf16.mxu0 %v2611
        %3949 = vmatpush1.bf16.msra.mxu0 %v2610
        %3950 = vmatprep.subr.bf16.mxu0 %v2615
        %3951 = vmatpush1.bf16.msra.mxu0 %v2614
        %3952 = vmatprep.subr.bf16.mxu0 %v2619
        %3953 = vmatpush1.bf16.msra.mxu0 %v2618
        %3954 = vmatprep.subr.bf16.mxu0 %v2623
        %3955 = vmatpush1.bf16.msra.mxu0 %v2622
        %3956 = vmatprep.mubr.bf16.mxu0 %v2932
        %3957 = vmatmul.mubr.bf16.gmra.mrb[0].mxu0 %v2930
        %v3958 = vpop.f32.mrb[0].mxu0
        %v3959 = vadd.f32 %v3918, %v3958
        %v3960 = vpop.f32.mrb[0].mxu0
        %v3961 = vadd.f32 %v3920, %v3960
        %v3962 = vpop.f32.mrb[0].mxu0
        %v3963 = vpop.f32.mrb[0].mxu0
        %3964 = vdwg.mxu0
        %3965 = vmatprep.subr.bf16.mxu0 %v1093
        %3966 = vmatpush1.bf16.msra.mxu0 %v1092
        %3967 = vmatprep.subr.bf16.mxu0 %v1097
        %3968 = vmatpush1.bf16.msra.mxu0 %v1096
        %3969 = vmatprep.subr.bf16.mxu0 %v1101
        %3970 = vmatpush1.bf16.msra.mxu0 %v1100
        %3971 = vmatprep.subr.bf16.mxu0 %v1105
        %3972 = vmatpush1.bf16.msra.mxu0 %v1104
        %3973 = vmatprep.subr.bf16.mxu0 %v1109
        %3974 = vmatpush1.bf16.msra.mxu0 %v1108
        %3975 = vmatprep.subr.bf16.mxu0 %v1113
        %3976 = vmatpush1.bf16.msra.mxu0 %v1112
        %3977 = vmatprep.subr.bf16.mxu0 %v1117
        %3978 = vmatpush1.bf16.msra.mxu0 %v1116
        %3979 = vmatprep.subr.bf16.mxu0 %v1121
        %3980 = vmatpush1.bf16.msra.mxu0 %v1120
        %3981 = vmatprep.subr.bf16.mxu0 %v1125
        %3982 = vmatpush1.bf16.msra.mxu0 %v1124
        %3983 = vmatprep.subr.bf16.mxu0 %v1129
        %3984 = vmatpush1.bf16.msra.mxu0 %v1128
        %3985 = vmatprep.subr.bf16.mxu0 %v1133
        %3986 = vmatpush1.bf16.msra.mxu0 %v1132
        %3987 = vmatprep.subr.bf16.mxu0 %v1137
        %3988 = vmatpush1.bf16.msra.mxu0 %v1136
        %3989 = vmatprep.subr.bf16.mxu0 %v1141
        %3990 = vmatpush1.bf16.msra.mxu0 %v1140
        %3991 = vmatprep.subr.bf16.mxu0 %v1145
        %3992 = vmatpush1.bf16.msra.mxu0 %v1144
        %3993 = vmatprep.subr.bf16.mxu0 %v1149
        %3994 = vmatpush1.bf16.msra.mxu0 %v1148
        %3995 = vmatprep.subr.bf16.mxu0 %v1153
        %3996 = vmatpush1.bf16.msra.mxu0 %v1152
        %3997 = vmatprep.mubr.bf16.mxu0 %v2676
        %3998 = vmatmul.mubr.bf16.gmra.mrb[0].mxu0 %v2662
        %v3999 = vpop.f32.mrb[0].mxu0
        %v4000 = vadd.f32 0.0, %v3999
        %v4001 = vpop.f32.mrb[0].mxu0
        %v4002 = vadd.f32 0.0, %v4001
        %v4003 = vpop.f32.mrb[0].mxu0
        %v4004 = vpop.f32.mrb[0].mxu0
        %4005 = vdwg.mxu0
        %4006 = vmatprep.subr.bf16.mxu0 %v1157
        %4007 = vmatpush1.bf16.msra.mxu0 %v1156
        %4008 = vmatprep.subr.bf16.mxu0 %v1161
        %4009 = vmatpush1.bf16.msra.mxu0 %v1160
        %4010 = vmatprep.subr.bf16.mxu0 %v1165
        %4011 = vmatpush1.bf16.msra.mxu0 %v1164
        %4012 = vmatprep.subr.bf16.mxu0 %v1169
        %4013 = vmatpush1.bf16.msra.mxu0 %v1168
        %4014 = vmatprep.subr.bf16.mxu0 %v1173
        %4015 = vmatpush1.bf16.msra.mxu0 %v1172
        %4016 = vmatprep.subr.bf16.mxu0 %v1177
        %4017 = vmatpush1.bf16.msra.mxu0 %v1176
        %4018 = vmatprep.subr.bf16.mxu0 %v1181
        %4019 = vmatpush1.bf16.msra.mxu0 %v1180
        %4020 = vmatprep.subr.bf16.mxu0 %v1185
        %4021 = vmatpush1.bf16.msra.mxu0 %v1184
        %4022 = vmatprep.subr.bf16.mxu0 %v1189
        %4023 = vmatpush1.bf16.msra.mxu0 %v1188
        %4024 = vmatprep.subr.bf16.mxu0 %v1193
        %4025 = vmatpush1.bf16.msra.mxu0 %v1192
        %4026 = vmatprep.subr.bf16.mxu0 %v1197
        %4027 = vmatpush1.bf16.msra.mxu0 %v1196
        %4028 = vmatprep.subr.bf16.mxu0 %v1201
        %4029 = vmatpush1.bf16.msra.mxu0 %v1200
        %4030 = vmatprep.subr.bf16.mxu0 %v1205
        %4031 = vmatpush1.bf16.msra.mxu0 %v1204
        %4032 = vmatprep.subr.bf16.mxu0 %v1209
        %4033 = vmatpush1.bf16.msra.mxu0 %v1208
        %4034 = vmatprep.subr.bf16.mxu0 %v1213
        %4035 = vmatpush1.bf16.msra.mxu0 %v1212
        %4036 = vmatprep.subr.bf16.mxu0 %v1217
        %4037 = vmatpush1.bf16.msra.mxu0 %v1216
        %4038 = vmatprep.mubr.bf16.mxu0 %v2686
        %4039 = vmatmul.mubr.bf16.gmra.mrb[0].mxu0 %v2684
        %v4040 = vpop.f32.mrb[0].mxu0
        %v4041 = vadd.f32 %v4000, %v4040
        %v4042 = vpop.f32.mrb[0].mxu0
        %v4043 = vadd.f32 %v4002, %v4042
        %v4044 = vpop.f32.mrb[0].mxu0
        %v4045 = vpop.f32.mrb[0].mxu0
        %4046 = vdwg.mxu0
        %4047 = vmatprep.subr.bf16.mxu0 %v1221
        %4048 = vmatpush1.bf16.msra.mxu0 %v1220
        %4049 = vmatprep.subr.bf16.mxu0 %v1225
        %4050 = vmatpush1.bf16.msra.mxu0 %v1224
        %4051 = vmatprep.subr.bf16.mxu0 %v1229
        %4052 = vmatpush1.bf16.msra.mxu0 %v1228
        %4053 = vmatprep.subr.bf16.mxu0 %v1233
        %4054 = vmatpush1.bf16.msra.mxu0 %v1232
        %4055 = vmatprep.subr.bf16.mxu0 %v1237
        %4056 = vmatpush1.bf16.msra.mxu0 %v1236
        %4057 = vmatprep.subr.bf16.mxu0 %v1241
        %4058 = vmatpush1.bf16.msra.mxu0 %v1240
        %4059 = vmatprep.subr.bf16.mxu0 %v1245
        %4060 = vmatpush1.bf16.msra.mxu0 %v1244
        %4061 = vmatprep.subr.bf16.mxu0 %v1249
        %4062 = vmatpush1.bf16.msra.mxu0 %v1248
        %4063 = vmatprep.subr.bf16.mxu0 %v1253
        %4064 = vmatpush1.bf16.msra.mxu0 %v1252
        %4065 = vmatprep.subr.bf16.mxu0 %v1257
        %4066 = vmatpush1.bf16.msra.mxu0 %v1256
        %4067 = vmatprep.subr.bf16.mxu0 %v1261
        %4068 = vmatpush1.bf16.msra.mxu0 %v1260
        %4069 = vmatprep.subr.bf16.mxu0 %v1265
        %4070 = vmatpush1.bf16.msra.mxu0 %v1264
        %4071 = vmatprep.subr.bf16.mxu0 %v1269
        %4072 = vmatpush1.bf16.msra.mxu0 %v1268
        %4073 = vmatprep.subr.bf16.mxu0 %v1273
        %4074 = vmatpush1.bf16.msra.mxu0 %v1272
        %4075 = vmatprep.subr.bf16.mxu0 %v1277
        %4076 = vmatpush1.bf16.msra.mxu0 %v1276
        %4077 = vmatprep.subr.bf16.mxu0 %v1281
        %4078 = vmatpush1.bf16.msra.mxu0 %v1280
        %4079 = vmatprep.mubr.bf16.mxu0 %v2683
        %4080 = vmatmul.mubr.bf16.gmra.mrb[0].mxu0 %v2669
        %v4081 = vpop.f32.mrb[0].mxu0
        %v4082 = vadd.f32 %v4041, %v4081
        %v4083 = vpop.f32.mrb[0].mxu0
        %v4084 = vadd.f32 %v4043, %v4083
        %v4085 = vpop.f32.mrb[0].mxu0
        %v4086 = vpop.f32.mrb[0].mxu0
        %4087 = vdwg.mxu0
        %4088 = vmatprep.subr.bf16.mxu0 %v1285
        %4089 = vmatpush1.bf16.msra.mxu0 %v1284
        %4090 = vmatprep.subr.bf16.mxu0 %v1289
        %4091 = vmatpush1.bf16.msra.mxu0 %v1288
        %4092 = vmatprep.subr.bf16.mxu0 %v1293
        %4093 = vmatpush1.bf16.msra.mxu0 %v1292
        %4094 = vmatprep.subr.bf16.mxu0 %v1297
        %4095 = vmatpush1.bf16.msra.mxu0 %v1296
        %4096 = vmatprep.subr.bf16.mxu0 %v1301
        %4097 = vmatpush1.bf16.msra.mxu0 %v1300
        %4098 = vmatprep.subr.bf16.mxu0 %v1305
        %4099 = vmatpush1.bf16.msra.mxu0 %v1304
        %4100 = vmatprep.subr.bf16.mxu0 %v1309
        %4101 = vmatpush1.bf16.msra.mxu0 %v1308
        %4102 = vmatprep.subr.bf16.mxu0 %v1313
        %4103 = vmatpush1.bf16.msra.mxu0 %v1312
        %4104 = vmatprep.subr.bf16.mxu0 %v1317
        %4105 = vmatpush1.bf16.msra.mxu0 %v1316
        %4106 = vmatprep.subr.bf16.mxu0 %v1321
        %4107 = vmatpush1.bf16.msra.mxu0 %v1320
        %4108 = vmatprep.subr.bf16.mxu0 %v1325
        %4109 = vmatpush1.bf16.msra.mxu0 %v1324
        %4110 = vmatprep.subr.bf16.mxu0 %v1329
        %4111 = vmatpush1.bf16.msra.mxu0 %v1328
        %4112 = vmatprep.subr.bf16.mxu0 %v1333
        %4113 = vmatpush1.bf16.msra.mxu0 %v1332
        %4114 = vmatprep.subr.bf16.mxu0 %v1337
        %4115 = vmatpush1.bf16.msra.mxu0 %v1336
        %4116 = vmatprep.subr.bf16.mxu0 %v1341
        %4117 = vmatpush1.bf16.msra.mxu0 %v1340
        %4118 = vmatprep.subr.bf16.mxu0 %v1345
        %4119 = vmatpush1.bf16.msra.mxu0 %v1344
        %4120 = vmatprep.mubr.bf16.mxu0 %v2687
        %4121 = vmatmul.mubr.bf16.gmra.mrb[0].mxu0 %v2685
        %v4122 = vpop.f32.mrb[0].mxu0
        %v4123 = vadd.f32 %v4082, %v4122
        %v4124 = vpop.f32.mrb[0].mxu0
        %v4125 = vadd.f32 %v4084, %v4124
        %v4126 = vpop.f32.mrb[0].mxu0
        %v4127 = vpop.f32.mrb[0].mxu0
        %4128 = vdwg.mxu0
        %4129 = vmatprep.subr.bf16.mxu0 %v1349
        %4130 = vmatpush1.bf16.msra.mxu0 %v1348
        %4131 = vmatprep.subr.bf16.mxu0 %v1353
        %4132 = vmatpush1.bf16.msra.mxu0 %v1352
        %4133 = vmatprep.subr.bf16.mxu0 %v1357
        %4134 = vmatpush1.bf16.msra.mxu0 %v1356
        %4135 = vmatprep.subr.bf16.mxu0 %v1361
        %4136 = vmatpush1.bf16.msra.mxu0 %v1360
        %4137 = vmatprep.subr.bf16.mxu0 %v1365
        %4138 = vmatpush1.bf16.msra.mxu0 %v1364
        %4139 = vmatprep.subr.bf16.mxu0 %v1369
        %4140 = vmatpush1.bf16.msra.mxu0 %v1368
        %4141 = vmatprep.subr.bf16.mxu0 %v1373
        %4142 = vmatpush1.bf16.msra.mxu0 %v1372
        %4143 = vmatprep.subr.bf16.mxu0 %v1377
        %4144 = vmatpush1.bf16.msra.mxu0 %v1376
        %4145 = vmatprep.subr.bf16.mxu0 %v1381
        %4146 = vmatpush1.bf16.msra.mxu0 %v1380
        %4147 = vmatprep.subr.bf16.mxu0 %v1385
        %4148 = vmatpush1.bf16.msra.mxu0 %v1384
        %4149 = vmatprep.subr.bf16.mxu0 %v1389
        %4150 = vmatpush1.bf16.msra.mxu0 %v1388
        %4151 = vmatprep.subr.bf16.mxu0 %v1393
        %4152 = vmatpush1.bf16.msra.mxu0 %v1392
        %4153 = vmatprep.subr.bf16.mxu0 %v1397
        %4154 = vmatpush1.bf16.msra.mxu0 %v1396
        %4155 = vmatprep.subr.bf16.mxu0 %v1401
        %4156 = vmatpush1.bf16.msra.mxu0 %v1400
        %4157 = vmatprep.subr.bf16.mxu0 %v1405
        %4158 = vmatpush1.bf16.msra.mxu0 %v1404
        %4159 = vmatprep.subr.bf16.mxu0 %v1409
        %4160 = vmatpush1.bf16.msra.mxu0 %v1408
        %4161 = vmatprep.mubr.bf16.mxu0 %v2725
        %4162 = vmatmul.mubr.bf16.gmra.mrb[0].mxu0 %v2711
        %v4163 = vpop.f32.mrb[0].mxu0
        %v4164 = vadd.f32 %v4123, %v4163
        %v4165 = vpop.f32.mrb[0].mxu0
        %v4166 = vadd.f32 %v4125, %v4165
        %v4167 = vpop.f32.mrb[0].mxu0
        %v4168 = vpop.f32.mrb[0].mxu0
        %4169 = vdwg.mxu0
        %4170 = vmatprep.subr.bf16.mxu0 %v1413
        %4171 = vmatpush1.bf16.msra.mxu0 %v1412
        %4172 = vmatprep.subr.bf16.mxu0 %v1417
        %4173 = vmatpush1.bf16.msra.mxu0 %v1416
        %4174 = vmatprep.subr.bf16.mxu0 %v1421
        %4175 = vmatpush1.bf16.msra.mxu0 %v1420
        %4176 = vmatprep.subr.bf16.mxu0 %v1425
        %4177 = vmatpush1.bf16.msra.mxu0 %v1424
        %4178 = vmatprep.subr.bf16.mxu0 %v1429
        %4179 = vmatpush1.bf16.msra.mxu0 %v1428
        %4180 = vmatprep.subr.bf16.mxu0 %v1433
        %4181 = vmatpush1.bf16.msra.mxu0 %v1432
        %4182 = vmatprep.subr.bf16.mxu0 %v1437
        %4183 = vmatpush1.bf16.msra.mxu0 %v1436
        %4184 = vmatprep.subr.bf16.mxu0 %v1441
        %4185 = vmatpush1.bf16.msra.mxu0 %v1440
        %4186 = vmatprep.subr.bf16.mxu0 %v1445
        %4187 = vmatpush1.bf16.msra.mxu0 %v1444
        %4188 = vmatprep.subr.bf16.mxu0 %v1449
        %4189 = vmatpush1.bf16.msra.mxu0 %v1448
        %4190 = vmatprep.subr.bf16.mxu0 %v1453
        %4191 = vmatpush1.bf16.msra.mxu0 %v1452
        %4192 = vmatprep.subr.bf16.mxu0 %v1457
        %4193 = vmatpush1.bf16.msra.mxu0 %v1456
        %4194 = vmatprep.subr.bf16.mxu0 %v1461
        %4195 = vmatpush1.bf16.msra.mxu0 %v1460
        %4196 = vmatprep.subr.bf16.mxu0 %v1465
        %4197 = vmatpush1.bf16.msra.mxu0 %v1464
        %4198 = vmatprep.subr.bf16.mxu0 %v1469
        %4199 = vmatpush1.bf16.msra.mxu0 %v1468
        %4200 = vmatprep.subr.bf16.mxu0 %v1473
        %4201 = vmatpush1.bf16.msra.mxu0 %v1472
        %4202 = vmatprep.mubr.bf16.mxu0 %v2735
        %4203 = vmatmul.mubr.bf16.gmra.mrb[0].mxu0 %v2733
        %v4204 = vpop.f32.mrb[0].mxu0
        %v4205 = vadd.f32 %v4164, %v4204
        %v4206 = vpop.f32.mrb[0].mxu0
        %v4207 = vadd.f32 %v4166, %v4206
        %v4208 = vpop.f32.mrb[0].mxu0
        %v4209 = vpop.f32.mrb[0].mxu0
        %4210 = vdwg.mxu0
        %4211 = vmatprep.subr.bf16.mxu0 %v1477
        %4212 = vmatpush1.bf16.msra.mxu0 %v1476
        %4213 = vmatprep.subr.bf16.mxu0 %v1481
        %4214 = vmatpush1.bf16.msra.mxu0 %v1480
        %4215 = vmatprep.subr.bf16.mxu0 %v1485
        %4216 = vmatpush1.bf16.msra.mxu0 %v1484
        %4217 = vmatprep.subr.bf16.mxu0 %v1489
        %4218 = vmatpush1.bf16.msra.mxu0 %v1488
        %4219 = vmatprep.subr.bf16.mxu0 %v1493
        %4220 = vmatpush1.bf16.msra.mxu0 %v1492
        %4221 = vmatprep.subr.bf16.mxu0 %v1497
        %4222 = vmatpush1.bf16.msra.mxu0 %v1496
        %4223 = vmatprep.subr.bf16.mxu0 %v1501
        %4224 = vmatpush1.bf16.msra.mxu0 %v1500
        %4225 = vmatprep.subr.bf16.mxu0 %v1505
        %4226 = vmatpush1.bf16.msra.mxu0 %v1504
        %4227 = vmatprep.subr.bf16.mxu0 %v1509
        %4228 = vmatpush1.bf16.msra.mxu0 %v1508
        %4229 = vmatprep.subr.bf16.mxu0 %v1513
        %4230 = vmatpush1.bf16.msra.mxu0 %v1512
        %4231 = vmatprep.subr.bf16.mxu0 %v1517
        %4232 = vmatpush1.bf16.msra.mxu0 %v1516
        %4233 = vmatprep.subr.bf16.mxu0 %v1521
        %4234 = vmatpush1.bf16.msra.mxu0 %v1520
        %4235 = vmatprep.subr.bf16.mxu0 %v1525
        %4236 = vmatpush1.bf16.msra.mxu0 %v1524
        %4237 = vmatprep.subr.bf16.mxu0 %v1529
        %4238 = vmatpush1.bf16.msra.mxu0 %v1528
        %4239 = vmatprep.subr.bf16.mxu0 %v1533
        %4240 = vmatpush1.bf16.msra.mxu0 %v1532
        %4241 = vmatprep.subr.bf16.mxu0 %v1537
        %4242 = vmatpush1.bf16.msra.mxu0 %v1536
        %4243 = vmatprep.mubr.bf16.mxu0 %v2732
        %4244 = vmatmul.mubr.bf16.gmra.mrb[0].mxu0 %v2718
        %v4245 = vpop.f32.mrb[0].mxu0
        %v4246 = vadd.f32 %v4205, %v4245
        %v4247 = vpop.f32.mrb[0].mxu0
        %v4248 = vadd.f32 %v4207, %v4247
        %v4249 = vpop.f32.mrb[0].mxu0
        %v4250 = vpop.f32.mrb[0].mxu0
        %4251 = vdwg.mxu0
        %4252 = vmatprep.subr.bf16.mxu0 %v1541
        %4253 = vmatpush1.bf16.msra.mxu0 %v1540
        %4254 = vmatprep.subr.bf16.mxu0 %v1545
        %4255 = vmatpush1.bf16.msra.mxu0 %v1544
        %4256 = vmatprep.subr.bf16.mxu0 %v1549
        %4257 = vmatpush1.bf16.msra.mxu0 %v1548
        %4258 = vmatprep.subr.bf16.mxu0 %v1553
        %4259 = vmatpush1.bf16.msra.mxu0 %v1552
        %4260 = vmatprep.subr.bf16.mxu0 %v1557
        %4261 = vmatpush1.bf16.msra.mxu0 %v1556
        %4262 = vmatprep.subr.bf16.mxu0 %v1561
        %4263 = vmatpush1.bf16.msra.mxu0 %v1560
        %4264 = vmatprep.subr.bf16.mxu0 %v1565
        %4265 = vmatpush1.bf16.msra.mxu0 %v1564
        %4266 = vmatprep.subr.bf16.mxu0 %v1569
        %4267 = vmatpush1.bf16.msra.mxu0 %v1568
        %4268 = vmatprep.subr.bf16.mxu0 %v1573
        %4269 = vmatpush1.bf16.msra.mxu0 %v1572
        %4270 = vmatprep.subr.bf16.mxu0 %v1577
        %4271 = vmatpush1.bf16.msra.mxu0 %v1576
        %4272 = vmatprep.subr.bf16.mxu0 %v1581
        %4273 = vmatpush1.bf16.msra.mxu0 %v1580
        %4274 = vmatprep.subr.bf16.mxu0 %v1585
        %4275 = vmatpush1.bf16.msra.mxu0 %v1584
        %4276 = vmatprep.subr.bf16.mxu0 %v1589
        %4277 = vmatpush1.bf16.msra.mxu0 %v1588
        %4278 = vmatprep.subr.bf16.mxu0 %v1593
        %4279 = vmatpush1.bf16.msra.mxu0 %v1592
        %4280 = vmatprep.subr.bf16.mxu0 %v1597
        %4281 = vmatpush1.bf16.msra.mxu0 %v1596
        %4282 = vmatprep.subr.bf16.mxu0 %v1601
        %4283 = vmatpush1.bf16.msra.mxu0 %v1600
        %4284 = vmatprep.mubr.bf16.mxu0 %v2736
        %4285 = vmatmul.mubr.bf16.gmra.mrb[0].mxu0 %v2734
        %v4286 = vpop.f32.mrb[0].mxu0
        %v4287 = vadd.f32 %v4246, %v4286
        %v4288 = vpop.f32.mrb[0].mxu0
        %v4289 = vadd.f32 %v4248, %v4288
        %v4290 = vpop.f32.mrb[0].mxu0
        %v4291 = vpop.f32.mrb[0].mxu0
        %4292 = vdwg.mxu0
        %4293 = vmatprep.subr.bf16.mxu0 %v1605
        %4294 = vmatpush1.bf16.msra.mxu0 %v1604
        %4295 = vmatprep.subr.bf16.mxu0 %v1609
        %4296 = vmatpush1.bf16.msra.mxu0 %v1608
        %4297 = vmatprep.subr.bf16.mxu0 %v1613
        %4298 = vmatpush1.bf16.msra.mxu0 %v1612
        %4299 = vmatprep.subr.bf16.mxu0 %v1617
        %4300 = vmatpush1.bf16.msra.mxu0 %v1616
        %4301 = vmatprep.subr.bf16.mxu0 %v1621
        %4302 = vmatpush1.bf16.msra.mxu0 %v1620
        %4303 = vmatprep.subr.bf16.mxu0 %v1625
        %4304 = vmatpush1.bf16.msra.mxu0 %v1624
        %4305 = vmatprep.subr.bf16.mxu0 %v1629
        %4306 = vmatpush1.bf16.msra.mxu0 %v1628
        %4307 = vmatprep.subr.bf16.mxu0 %v1633
        %4308 = vmatpush1.bf16.msra.mxu0 %v1632
        %4309 = vmatprep.subr.bf16.mxu0 %v1637
        %4310 = vmatpush1.bf16.msra.mxu0 %v1636
        %4311 = vmatprep.subr.bf16.mxu0 %v1641
        %4312 = vmatpush1.bf16.msra.mxu0 %v1640
        %4313 = vmatprep.subr.bf16.mxu0 %v1645
        %4314 = vmatpush1.bf16.msra.mxu0 %v1644
        %4315 = vmatprep.subr.bf16.mxu0 %v1649
        %4316 = vmatpush1.bf16.msra.mxu0 %v1648
        %4317 = vmatprep.subr.bf16.mxu0 %v1653
        %4318 = vmatpush1.bf16.msra.mxu0 %v1652
        %4319 = vmatprep.subr.bf16.mxu0 %v1657
        %4320 = vmatpush1.bf16.msra.mxu0 %v1656
        %4321 = vmatprep.subr.bf16.mxu0 %v1661
        %4322 = vmatpush1.bf16.msra.mxu0 %v1660
        %4323 = vmatprep.subr.bf16.mxu0 %v1665
        %4324 = vmatpush1.bf16.msra.mxu0 %v1664
        %4325 = vmatprep.mubr.bf16.mxu0 %v2774
        %4326 = vmatmul.mubr.bf16.gmra.mrb[0].mxu0 %v2760
        %v4327 = vpop.f32.mrb[0].mxu0
        %v4328 = vadd.f32 %v4287, %v4327
        %v4329 = vpop.f32.mrb[0].mxu0
        %v4330 = vadd.f32 %v4289, %v4329
        %v4331 = vpop.f32.mrb[0].mxu0
        %v4332 = vpop.f32.mrb[0].mxu0
        %4333 = vdwg.mxu0
        %4334 = vmatprep.subr.bf16.mxu0 %v1669
        %4335 = vmatpush1.bf16.msra.mxu0 %v1668
        %4336 = vmatprep.subr.bf16.mxu0 %v1673
        %4337 = vmatpush1.bf16.msra.mxu0 %v1672
        %4338 = vmatprep.subr.bf16.mxu0 %v1677
        %4339 = vmatpush1.bf16.msra.mxu0 %v1676
        %4340 = vmatprep.subr.bf16.mxu0 %v1681
        %4341 = vmatpush1.bf16.msra.mxu0 %v1680
        %4342 = vmatprep.subr.bf16.mxu0 %v1685
        %4343 = vmatpush1.bf16.msra.mxu0 %v1684
        %4344 = vmatprep.subr.bf16.mxu0 %v1689
        %4345 = vmatpush1.bf16.msra.mxu0 %v1688
        %4346 = vmatprep.subr.bf16.mxu0 %v1693
        %4347 = vmatpush1.bf16.msra.mxu0 %v1692
        %4348 = vmatprep.subr.bf16.mxu0 %v1697
        %4349 = vmatpush1.bf16.msra.mxu0 %v1696
        %4350 = vmatprep.subr.bf16.mxu0 %v1701
        %4351 = vmatpush1.bf16.msra.mxu0 %v1700
        %4352 = vmatprep.subr.bf16.mxu0 %v1705
        %4353 = vmatpush1.bf16.msra.mxu0 %v1704
        %4354 = vmatprep.subr.bf16.mxu0 %v1709
        %4355 = vmatpush1.bf16.msra.mxu0 %v1708
        %4356 = vmatprep.subr.bf16.mxu0 %v1713
        %4357 = vmatpush1.bf16.msra.mxu0 %v1712
        %4358 = vmatprep.subr.bf16.mxu0 %v1717
        %4359 = vmatpush1.bf16.msra.mxu0 %v1716
        %4360 = vmatprep.subr.bf16.mxu0 %v1721
        %4361 = vmatpush1.bf16.msra.mxu0 %v1720
        %4362 = vmatprep.subr.bf16.mxu0 %v1725
        %4363 = vmatpush1.bf16.msra.mxu0 %v1724
        %4364 = vmatprep.subr.bf16.mxu0 %v1729
        %4365 = vmatpush1.bf16.msra.mxu0 %v1728
        %4366 = vmatprep.mubr.bf16.mxu0 %v2784
        %4367 = vmatmul.mubr.bf16.gmra.mrb[0].mxu0 %v2782
        %v4368 = vpop.f32.mrb[0].mxu0
        %v4369 = vadd.f32 %v4328, %v4368
        %v4370 = vpop.f32.mrb[0].mxu0
        %v4371 = vadd.f32 %v4330, %v4370
        %v4372 = vpop.f32.mrb[0].mxu0
        %v4373 = vpop.f32.mrb[0].mxu0
        %4374 = vdwg.mxu0
        %4375 = vmatprep.subr.bf16.mxu0 %v1733
        %4376 = vmatpush1.bf16.msra.mxu0 %v1732
        %4377 = vmatprep.subr.bf16.mxu0 %v1737
        %4378 = vmatpush1.bf16.msra.mxu0 %v1736
        %4379 = vmatprep.subr.bf16.mxu0 %v1741
        %4380 = vmatpush1.bf16.msra.mxu0 %v1740
        %4381 = vmatprep.subr.bf16.mxu0 %v1745
        %4382 = vmatpush1.bf16.msra.mxu0 %v1744
        %4383 = vmatprep.subr.bf16.mxu0 %v1749
        %4384 = vmatpush1.bf16.msra.mxu0 %v1748
        %4385 = vmatprep.subr.bf16.mxu0 %v1753
        %4386 = vmatpush1.bf16.msra.mxu0 %v1752
        %4387 = vmatprep.subr.bf16.mxu0 %v1757
        %4388 = vmatpush1.bf16.msra.mxu0 %v1756
        %4389 = vmatprep.subr.bf16.mxu0 %v1761
        %4390 = vmatpush1.bf16.msra.mxu0 %v1760
        %4391 = vmatprep.subr.bf16.mxu0 %v1765
        %4392 = vmatpush1.bf16.msra.mxu0 %v1764
        %4393 = vmatprep.subr.bf16.mxu0 %v1769
        %4394 = vmatpush1.bf16.msra.mxu0 %v1768
        %4395 = vmatprep.subr.bf16.mxu0 %v1773
        %4396 = vmatpush1.bf16.msra.mxu0 %v1772
        %4397 = vmatprep.subr.bf16.mxu0 %v1777
        %4398 = vmatpush1.bf16.msra.mxu0 %v1776
        %4399 = vmatprep.subr.bf16.mxu0 %v1781
        %4400 = vmatpush1.bf16.msra.mxu0 %v1780
        %4401 = vmatprep.subr.bf16.mxu0 %v1785
        %4402 = vmatpush1.bf16.msra.mxu0 %v1784
        %4403 = vmatprep.subr.bf16.mxu0 %v1789
        %4404 = vmatpush1.bf16.msra.mxu0 %v1788
        %4405 = vmatprep.subr.bf16.mxu0 %v1793
        %4406 = vmatpush1.bf16.msra.mxu0 %v1792
        %4407 = vmatprep.mubr.bf16.mxu0 %v2781
        %4408 = vmatmul.mubr.bf16.gmra.mrb[0].mxu0 %v2767
        %v4409 = vpop.f32.mrb[0].mxu0
        %v4410 = vadd.f32 %v4369, %v4409
        %v4411 = vpop.f32.mrb[0].mxu0
        %v4412 = vadd.f32 %v4371, %v4411
        %v4413 = vpop.f32.mrb[0].mxu0
        %v4414 = vpop.f32.mrb[0].mxu0
        %4415 = vdwg.mxu0
        %4416 = vmatprep.subr.bf16.mxu0 %v1797
        %4417 = vmatpush1.bf16.msra.mxu0 %v1796
        %4418 = vmatprep.subr.bf16.mxu0 %v1801
        %4419 = vmatpush1.bf16.msra.mxu0 %v1800
        %4420 = vmatprep.subr.bf16.mxu0 %v1805
        %4421 = vmatpush1.bf16.msra.mxu0 %v1804
        %4422 = vmatprep.subr.bf16.mxu0 %v1809
        %4423 = vmatpush1.bf16.msra.mxu0 %v1808
        %4424 = vmatprep.subr.bf16.mxu0 %v1813
        %4425 = vmatpush1.bf16.msra.mxu0 %v1812
        %4426 = vmatprep.subr.bf16.mxu0 %v1817
        %4427 = vmatpush1.bf16.msra.mxu0 %v1816
        %4428 = vmatprep.subr.bf16.mxu0 %v1821
        %4429 = vmatpush1.bf16.msra.mxu0 %v1820
        %4430 = vmatprep.subr.bf16.mxu0 %v1825
        %4431 = vmatpush1.bf16.msra.mxu0 %v1824
        %4432 = vmatprep.subr.bf16.mxu0 %v1829
        %4433 = vmatpush1.bf16.msra.mxu0 %v1828
        %4434 = vmatprep.subr.bf16.mxu0 %v1833
        %4435 = vmatpush1.bf16.msra.mxu0 %v1832
        %4436 = vmatprep.subr.bf16.mxu0 %v1837
        %4437 = vmatpush1.bf16.msra.mxu0 %v1836
        %4438 = vmatprep.subr.bf16.mxu0 %v1841
        %4439 = vmatpush1.bf16.msra.mxu0 %v1840
        %4440 = vmatprep.subr.bf16.mxu0 %v1845
        %4441 = vmatpush1.bf16.msra.mxu0 %v1844
        %4442 = vmatprep.subr.bf16.mxu0 %v1849
        %4443 = vmatpush1.bf16.msra.mxu0 %v1848
        %4444 = vmatprep.subr.bf16.mxu0 %v1853
        %4445 = vmatpush1.bf16.msra.mxu0 %v1852
        %4446 = vmatprep.subr.bf16.mxu0 %v1857
        %4447 = vmatpush1.bf16.msra.mxu0 %v1856
        %4448 = vmatprep.mubr.bf16.mxu0 %v2785
        %4449 = vmatmul.mubr.bf16.gmra.mrb[0].mxu0 %v2783
        %v4450 = vpop.f32.mrb[0].mxu0
        %v4451 = vadd.f32 %v4410, %v4450
        %v4452 = vpop.f32.mrb[0].mxu0
        %v4453 = vadd.f32 %v4412, %v4452
        %v4454 = vpop.f32.mrb[0].mxu0
        %v4455 = vpop.f32.mrb[0].mxu0
        %4456 = vdwg.mxu0
        %4457 = vmatprep.subr.bf16.mxu0 %v1861
        %4458 = vmatpush1.bf16.msra.mxu0 %v1860
        %4459 = vmatprep.subr.bf16.mxu0 %v1865
        %4460 = vmatpush1.bf16.msra.mxu0 %v1864
        %4461 = vmatprep.subr.bf16.mxu0 %v1869
        %4462 = vmatpush1.bf16.msra.mxu0 %v1868
        %4463 = vmatprep.subr.bf16.mxu0 %v1873
        %4464 = vmatpush1.bf16.msra.mxu0 %v1872
        %4465 = vmatprep.subr.bf16.mxu0 %v1877
        %4466 = vmatpush1.bf16.msra.mxu0 %v1876
        %4467 = vmatprep.subr.bf16.mxu0 %v1881
        %4468 = vmatpush1.bf16.msra.mxu0 %v1880
        %4469 = vmatprep.subr.bf16.mxu0 %v1885
        %4470 = vmatpush1.bf16.msra.mxu0 %v1884
        %4471 = vmatprep.subr.bf16.mxu0 %v1889
        %4472 = vmatpush1.bf16.msra.mxu0 %v1888
        %4473 = vmatprep.subr.bf16.mxu0 %v1893
        %4474 = vmatpush1.bf16.msra.mxu0 %v1892
        %4475 = vmatprep.subr.bf16.mxu0 %v1897
        %4476 = vmatpush1.bf16.msra.mxu0 %v1896
        %4477 = vmatprep.subr.bf16.mxu0 %v1901
        %4478 = vmatpush1.bf16.msra.mxu0 %v1900
        %4479 = vmatprep.subr.bf16.mxu0 %v1905
        %4480 = vmatpush1.bf16.msra.mxu0 %v1904
        %4481 = vmatprep.subr.bf16.mxu0 %v1909
        %4482 = vmatpush1.bf16.msra.mxu0 %v1908
        %4483 = vmatprep.subr.bf16.mxu0 %v1913
        %4484 = vmatpush1.bf16.msra.mxu0 %v1912
        %4485 = vmatprep.subr.bf16.mxu0 %v1917
        %4486 = vmatpush1.bf16.msra.mxu0 %v1916
        %4487 = vmatprep.subr.bf16.mxu0 %v1921
        %4488 = vmatpush1.bf16.msra.mxu0 %v1920
        %4489 = vmatprep.mubr.bf16.mxu0 %v2823
        %4490 = vmatmul.mubr.bf16.gmra.mrb[0].mxu0 %v2809
        %v4491 = vpop.f32.mrb[0].mxu0
        %v4492 = vadd.f32 %v4451, %v4491
        %v4493 = vpop.f32.mrb[0].mxu0
        %v4494 = vadd.f32 %v4453, %v4493
        %v4495 = vpop.f32.mrb[0].mxu0
        %v4496 = vpop.f32.mrb[0].mxu0
        %4497 = vdwg.mxu0
        %4498 = vmatprep.subr.bf16.mxu0 %v1925
        %4499 = vmatpush1.bf16.msra.mxu0 %v1924
        %4500 = vmatprep.subr.bf16.mxu0 %v1929
        %4501 = vmatpush1.bf16.msra.mxu0 %v1928
        %4502 = vmatprep.subr.bf16.mxu0 %v1933
        %4503 = vmatpush1.bf16.msra.mxu0 %v1932
        %4504 = vmatprep.subr.bf16.mxu0 %v1937
        %4505 = vmatpush1.bf16.msra.mxu0 %v1936
        %4506 = vmatprep.subr.bf16.mxu0 %v1941
        %4507 = vmatpush1.bf16.msra.mxu0 %v1940
        %4508 = vmatprep.subr.bf16.mxu0 %v1945
        %4509 = vmatpush1.bf16.msra.mxu0 %v1944
        %4510 = vmatprep.subr.bf16.mxu0 %v1949
        %4511 = vmatpush1.bf16.msra.mxu0 %v1948
        %4512 = vmatprep.subr.bf16.mxu0 %v1953
        %4513 = vmatpush1.bf16.msra.mxu0 %v1952
        %4514 = vmatprep.subr.bf16.mxu0 %v1957
        %4515 = vmatpush1.bf16.msra.mxu0 %v1956
        %4516 = vmatprep.subr.bf16.mxu0 %v1961
        %4517 = vmatpush1.bf16.msra.mxu0 %v1960
        %4518 = vmatprep.subr.bf16.mxu0 %v1965
        %4519 = vmatpush1.bf16.msra.mxu0 %v1964
        %4520 = vmatprep.subr.bf16.mxu0 %v1969
        %4521 = vmatpush1.bf16.msra.mxu0 %v1968
        %4522 = vmatprep.subr.bf16.mxu0 %v1973
        %4523 = vmatpush1.bf16.msra.mxu0 %v1972
        %4524 = vmatprep.subr.bf16.mxu0 %v1977
        %4525 = vmatpush1.bf16.msra.mxu0 %v1976
        %4526 = vmatprep.subr.bf16.mxu0 %v1981
        %4527 = vmatpush1.bf16.msra.mxu0 %v1980
        %4528 = vmatprep.subr.bf16.mxu0 %v1985
        %4529 = vmatpush1.bf16.msra.mxu0 %v1984
        %4530 = vmatprep.mubr.bf16.mxu0 %v2833
        %4531 = vmatmul.mubr.bf16.gmra.mrb[0].mxu0 %v2831
        %v4532 = vpop.f32.mrb[0].mxu0
        %v4533 = vadd.f32 %v4492, %v4532
        %v4534 = vpop.f32.mrb[0].mxu0
        %v4535 = vadd.f32 %v4494, %v4534
        %v4536 = vpop.f32.mrb[0].mxu0
        %v4537 = vpop.f32.mrb[0].mxu0
        %4538 = vdwg.mxu0
        %4539 = vmatprep.subr.bf16.mxu0 %v1989
        %4540 = vmatpush1.bf16.msra.mxu0 %v1988
        %4541 = vmatprep.subr.bf16.mxu0 %v1993
        %4542 = vmatpush1.bf16.msra.mxu0 %v1992
        %4543 = vmatprep.subr.bf16.mxu0 %v1997
        %4544 = vmatpush1.bf16.msra.mxu0 %v1996
        %4545 = vmatprep.subr.bf16.mxu0 %v2001
        %4546 = vmatpush1.bf16.msra.mxu0 %v2000
        %4547 = vmatprep.subr.bf16.mxu0 %v2005
        %4548 = vmatpush1.bf16.msra.mxu0 %v2004
        %4549 = vmatprep.subr.bf16.mxu0 %v2009
        %4550 = vmatpush1.bf16.msra.mxu0 %v2008
        %4551 = vmatprep.subr.bf16.mxu0 %v2013
        %4552 = vmatpush1.bf16.msra.mxu0 %v2012
        %4553 = vmatprep.subr.bf16.mxu0 %v2017
        %4554 = vmatpush1.bf16.msra.mxu0 %v2016
        %4555 = vmatprep.subr.bf16.mxu0 %v2021
        %4556 = vmatpush1.bf16.msra.mxu0 %v2020
        %4557 = vmatprep.subr.bf16.mxu0 %v2025
        %4558 = vmatpush1.bf16.msra.mxu0 %v2024
        %4559 = vmatprep.subr.bf16.mxu0 %v2029
        %4560 = vmatpush1.bf16.msra.mxu0 %v2028
        %4561 = vmatprep.subr.bf16.mxu0 %v2033
        %4562 = vmatpush1.bf16.msra.mxu0 %v2032
        %4563 = vmatprep.subr.bf16.mxu0 %v2037
        %4564 = vmatpush1.bf16.msra.mxu0 %v2036
        %4565 = vmatprep.subr.bf16.mxu0 %v2041
        %4566 = vmatpush1.bf16.msra.mxu0 %v2040
        %4567 = vmatprep.subr.bf16.mxu0 %v2045
        %4568 = vmatpush1.bf16.msra.mxu0 %v2044
        %4569 = vmatprep.subr.bf16.mxu0 %v2049
        %4570 = vmatpush1.bf16.msra.mxu0 %v2048
        %4571 = vmatprep.mubr.bf16.mxu0 %v2830
        %4572 = vmatmul.mubr.bf16.gmra.mrb[0].mxu0 %v2816
        %v4573 = vpop.f32.mrb[0].mxu0
        %v4574 = vadd.f32 %v4533, %v4573
        %v4575 = vpop.f32.mrb[0].mxu0
        %v4576 = vadd.f32 %v4535, %v4575
        %v4577 = vpop.f32.mrb[0].mxu0
        %v4578 = vpop.f32.mrb[0].mxu0
        %4579 = vdwg.mxu0
        %4580 = vmatprep.subr.bf16.mxu0 %v2053
        %4581 = vmatpush1.bf16.msra.mxu0 %v2052
        %4582 = vmatprep.subr.bf16.mxu0 %v2057
        %4583 = vmatpush1.bf16.msra.mxu0 %v2056
        %4584 = vmatprep.subr.bf16.mxu0 %v2061
        %4585 = vmatpush1.bf16.msra.mxu0 %v2060
        %4586 = vmatprep.subr.bf16.mxu0 %v2065
        %4587 = vmatpush1.bf16.msra.mxu0 %v2064
        %4588 = vmatprep.subr.bf16.mxu0 %v2069
        %4589 = vmatpush1.bf16.msra.mxu0 %v2068
        %4590 = vmatprep.subr.bf16.mxu0 %v2073
        %4591 = vmatpush1.bf16.msra.mxu0 %v2072
        %4592 = vmatprep.subr.bf16.mxu0 %v2077
        %4593 = vmatpush1.bf16.msra.mxu0 %v2076
        %4594 = vmatprep.subr.bf16.mxu0 %v2081
        %4595 = vmatpush1.bf16.msra.mxu0 %v2080
        %4596 = vmatprep.subr.bf16.mxu0 %v2085
        %4597 = vmatpush1.bf16.msra.mxu0 %v2084
        %4598 = vmatprep.subr.bf16.mxu0 %v2089
        %4599 = vmatpush1.bf16.msra.mxu0 %v2088
        %4600 = vmatprep.subr.bf16.mxu0 %v2093
        %4601 = vmatpush1.bf16.msra.mxu0 %v2092
        %4602 = vmatprep.subr.bf16.mxu0 %v2097
        %4603 = vmatpush1.bf16.msra.mxu0 %v2096
        %4604 = vmatprep.subr.bf16.mxu0 %v2101
        %4605 = vmatpush1.bf16.msra.mxu0 %v2100
        %4606 = vmatprep.subr.bf16.mxu0 %v2105
        %4607 = vmatpush1.bf16.msra.mxu0 %v2104
        %4608 = vmatprep.subr.bf16.mxu0 %v2109
        %4609 = vmatpush1.bf16.msra.mxu0 %v2108
        %4610 = vmatprep.subr.bf16.mxu0 %v2113
        %4611 = vmatpush1.bf16.msra.mxu0 %v2112
        %4612 = vmatprep.mubr.bf16.mxu0 %v2834
        %4613 = vmatmul.mubr.bf16.gmra.mrb[0].mxu0 %v2832
        %v4614 = vpop.f32.mrb[0].mxu0
        %v4615 = vadd.f32 %v4574, %v4614
        %v4616 = vpop.f32.mrb[0].mxu0
        %v4617 = vadd.f32 %v4576, %v4616
        %v4618 = vpop.f32.mrb[0].mxu0
        %v4619 = vpop.f32.mrb[0].mxu0
        %4620 = vdwg.mxu0
        %4621 = vmatprep.subr.bf16.mxu0 %v2117
        %4622 = vmatpush1.bf16.msra.mxu0 %v2116
        %4623 = vmatprep.subr.bf16.mxu0 %v2121
        %4624 = vmatpush1.bf16.msra.mxu0 %v2120
        %4625 = vmatprep.subr.bf16.mxu0 %v2125
        %4626 = vmatpush1.bf16.msra.mxu0 %v2124
        %4627 = vmatprep.subr.bf16.mxu0 %v2129
        %4628 = vmatpush1.bf16.msra.mxu0 %v2128
        %4629 = vmatprep.subr.bf16.mxu0 %v2133
        %4630 = vmatpush1.bf16.msra.mxu0 %v2132
        %4631 = vmatprep.subr.bf16.mxu0 %v2137
        %4632 = vmatpush1.bf16.msra.mxu0 %v2136
        %4633 = vmatprep.subr.bf16.mxu0 %v2141
        %4634 = vmatpush1.bf16.msra.mxu0 %v2140
        %4635 = vmatprep.subr.bf16.mxu0 %v2145
        %4636 = vmatpush1.bf16.msra.mxu0 %v2144
        %4637 = vmatprep.subr.bf16.mxu0 %v2149
        %4638 = vmatpush1.bf16.msra.mxu0 %v2148
        %4639 = vmatprep.subr.bf16.mxu0 %v2153
        %4640 = vmatpush1.bf16.msra.mxu0 %v2152
        %4641 = vmatprep.subr.bf16.mxu0 %v2157
        %4642 = vmatpush1.bf16.msra.mxu0 %v2156
        %4643 = vmatprep.subr.bf16.mxu0 %v2161
        %4644 = vmatpush1.bf16.msra.mxu0 %v2160
        %4645 = vmatprep.subr.bf16.mxu0 %v2165
        %4646 = vmatpush1.bf16.msra.mxu0 %v2164
        %4647 = vmatprep.subr.bf16.mxu0 %v2169
        %4648 = vmatpush1.bf16.msra.mxu0 %v2168
        %4649 = vmatprep.subr.bf16.mxu0 %v2173
        %4650 = vmatpush1.bf16.msra.mxu0 %v2172
        %4651 = vmatprep.subr.bf16.mxu0 %v2177
        %4652 = vmatpush1.bf16.msra.mxu0 %v2176
        %4653 = vmatprep.mubr.bf16.mxu0 %v2872
        %4654 = vmatmul.mubr.bf16.gmra.mrb[0].mxu0 %v2858
        %v4655 = vpop.f32.mrb[0].mxu0
        %v4656 = vadd.f32 %v4615, %v4655
        %v4657 = vpop.f32.mrb[0].mxu0
        %v4658 = vadd.f32 %v4617, %v4657
        %v4659 = vpop.f32.mrb[0].mxu0
        %v4660 = vpop.f32.mrb[0].mxu0
        %4661 = vdwg.mxu0
        %4662 = vmatprep.subr.bf16.mxu0 %v2181
        %4663 = vmatpush1.bf16.msra.mxu0 %v2180
        %4664 = vmatprep.subr.bf16.mxu0 %v2185
        %4665 = vmatpush1.bf16.msra.mxu0 %v2184
        %4666 = vmatprep.subr.bf16.mxu0 %v2189
        %4667 = vmatpush1.bf16.msra.mxu0 %v2188
        %4668 = vmatprep.subr.bf16.mxu0 %v2193
        %4669 = vmatpush1.bf16.msra.mxu0 %v2192
        %4670 = vmatprep.subr.bf16.mxu0 %v2197
        %4671 = vmatpush1.bf16.msra.mxu0 %v2196
        %4672 = vmatprep.subr.bf16.mxu0 %v2201
        %4673 = vmatpush1.bf16.msra.mxu0 %v2200
        %4674 = vmatprep.subr.bf16.mxu0 %v2205
        %4675 = vmatpush1.bf16.msra.mxu0 %v2204
        %4676 = vmatprep.subr.bf16.mxu0 %v2209
        %4677 = vmatpush1.bf16.msra.mxu0 %v2208
        %4678 = vmatprep.subr.bf16.mxu0 %v2213
        %4679 = vmatpush1.bf16.msra.mxu0 %v2212
        %4680 = vmatprep.subr.bf16.mxu0 %v2217
        %4681 = vmatpush1.bf16.msra.mxu0 %v2216
        %4682 = vmatprep.subr.bf16.mxu0 %v2221
        %4683 = vmatpush1.bf16.msra.mxu0 %v2220
        %4684 = vmatprep.subr.bf16.mxu0 %v2225
        %4685 = vmatpush1.bf16.msra.mxu0 %v2224
        %4686 = vmatprep.subr.bf16.mxu0 %v2229
        %4687 = vmatpush1.bf16.msra.mxu0 %v2228
        %4688 = vmatprep.subr.bf16.mxu0 %v2233
        %4689 = vmatpush1.bf16.msra.mxu0 %v2232
        %4690 = vmatprep.subr.bf16.mxu0 %v2237
        %4691 = vmatpush1.bf16.msra.mxu0 %v2236
        %4692 = vmatprep.subr.bf16.mxu0 %v2241
        %4693 = vmatpush1.bf16.msra.mxu0 %v2240
        %4694 = vmatprep.mubr.bf16.mxu0 %v2882
        %4695 = vmatmul.mubr.bf16.gmra.mrb[0].mxu0 %v2880
        %v4696 = vpop.f32.mrb[0].mxu0
        %v4697 = vadd.f32 %v4656, %v4696
        %v4698 = vpop.f32.mrb[0].mxu0
        %v4699 = vadd.f32 %v4658, %v4698
        %v4700 = vpop.f32.mrb[0].mxu0
        %v4701 = vpop.f32.mrb[0].mxu0
        %4702 = vdwg.mxu0
        %4703 = vmatprep.subr.bf16.mxu0 %v2245
        %4704 = vmatpush1.bf16.msra.mxu0 %v2244
        %4705 = vmatprep.subr.bf16.mxu0 %v2249
        %4706 = vmatpush1.bf16.msra.mxu0 %v2248
        %4707 = vmatprep.subr.bf16.mxu0 %v2253
        %4708 = vmatpush1.bf16.msra.mxu0 %v2252
        %4709 = vmatprep.subr.bf16.mxu0 %v2257
        %4710 = vmatpush1.bf16.msra.mxu0 %v2256
        %4711 = vmatprep.subr.bf16.mxu0 %v2261
        %4712 = vmatpush1.bf16.msra.mxu0 %v2260
        %4713 = vmatprep.subr.bf16.mxu0 %v2265
        %4714 = vmatpush1.bf16.msra.mxu0 %v2264
        %4715 = vmatprep.subr.bf16.mxu0 %v2269
        %4716 = vmatpush1.bf16.msra.mxu0 %v2268
        %4717 = vmatprep.subr.bf16.mxu0 %v2273
        %4718 = vmatpush1.bf16.msra.mxu0 %v2272
        %4719 = vmatprep.subr.bf16.mxu0 %v2277
        %4720 = vmatpush1.bf16.msra.mxu0 %v2276
        %4721 = vmatprep.subr.bf16.mxu0 %v2281
        %4722 = vmatpush1.bf16.msra.mxu0 %v2280
        %4723 = vmatprep.subr.bf16.mxu0 %v2285
        %4724 = vmatpush1.bf16.msra.mxu0 %v2284
        %4725 = vmatprep.subr.bf16.mxu0 %v2289
        %4726 = vmatpush1.bf16.msra.mxu0 %v2288
        %4727 = vmatprep.subr.bf16.mxu0 %v2293
        %4728 = vmatpush1.bf16.msra.mxu0 %v2292
        %4729 = vmatprep.subr.bf16.mxu0 %v2297
        %4730 = vmatpush1.bf16.msra.mxu0 %v2296
        %4731 = vmatprep.subr.bf16.mxu0 %v2301
        %4732 = vmatpush1.bf16.msra.mxu0 %v2300
        %4733 = vmatprep.subr.bf16.mxu0 %v2305
        %4734 = vmatpush1.bf16.msra.mxu0 %v2304
        %4735 = vmatprep.mubr.bf16.mxu0 %v2879
        %4736 = vmatmul.mubr.bf16.gmra.mrb[0].mxu0 %v2865
        %v4737 = vpop.f32.mrb[0].mxu0
        %v4738 = vadd.f32 %v4697, %v4737
        %v4739 = vpop.f32.mrb[0].mxu0
        %v4740 = vadd.f32 %v4699, %v4739
        %v4741 = vpop.f32.mrb[0].mxu0
        %v4742 = vpop.f32.mrb[0].mxu0
        %4743 = vdwg.mxu0
        %4744 = vmatprep.subr.bf16.mxu0 %v2309
        %4745 = vmatpush1.bf16.msra.mxu0 %v2308
        %4746 = vmatprep.subr.bf16.mxu0 %v2313
        %4747 = vmatpush1.bf16.msra.mxu0 %v2312
        %4748 = vmatprep.subr.bf16.mxu0 %v2317
        %4749 = vmatpush1.bf16.msra.mxu0 %v2316
        %4750 = vmatprep.subr.bf16.mxu0 %v2321
        %4751 = vmatpush1.bf16.msra.mxu0 %v2320
        %4752 = vmatprep.subr.bf16.mxu0 %v2325
        %4753 = vmatpush1.bf16.msra.mxu0 %v2324
        %4754 = vmatprep.subr.bf16.mxu0 %v2329
        %4755 = vmatpush1.bf16.msra.mxu0 %v2328
        %4756 = vmatprep.subr.bf16.mxu0 %v2333
        %4757 = vmatpush1.bf16.msra.mxu0 %v2332
        %4758 = vmatprep.subr.bf16.mxu0 %v2337
        %4759 = vmatpush1.bf16.msra.mxu0 %v2336
        %4760 = vmatprep.subr.bf16.mxu0 %v2341
        %4761 = vmatpush1.bf16.msra.mxu0 %v2340
        %4762 = vmatprep.subr.bf16.mxu0 %v2345
        %4763 = vmatpush1.bf16.msra.mxu0 %v2344
        %4764 = vmatprep.subr.bf16.mxu0 %v2349
        %4765 = vmatpush1.bf16.msra.mxu0 %v2348
        %4766 = vmatprep.subr.bf16.mxu0 %v2353
        %4767 = vmatpush1.bf16.msra.mxu0 %v2352
        %4768 = vmatprep.subr.bf16.mxu0 %v2357
        %4769 = vmatpush1.bf16.msra.mxu0 %v2356
        %4770 = vmatprep.subr.bf16.mxu0 %v2361
        %4771 = vmatpush1.bf16.msra.mxu0 %v2360
        %4772 = vmatprep.subr.bf16.mxu0 %v2365
        %4773 = vmatpush1.bf16.msra.mxu0 %v2364
        %4774 = vmatprep.subr.bf16.mxu0 %v2369
        %4775 = vmatpush1.bf16.msra.mxu0 %v2368
        %4776 = vmatprep.mubr.bf16.mxu0 %v2883
        %4777 = vmatmul.mubr.bf16.gmra.mrb[0].mxu0 %v2881
        %v4778 = vpop.f32.mrb[0].mxu0
        %v4779 = vadd.f32 %v4738, %v4778
        %v4780 = vpop.f32.mrb[0].mxu0
        %v4781 = vadd.f32 %v4740, %v4780
        %v4782 = vpop.f32.mrb[0].mxu0
        %v4783 = vpop.f32.mrb[0].mxu0
        %4784 = vdwg.mxu0
        %4785 = vmatprep.subr.bf16.mxu0 %v2373
        %4786 = vmatpush1.bf16.msra.mxu0 %v2372
        %4787 = vmatprep.subr.bf16.mxu0 %v2377
        %4788 = vmatpush1.bf16.msra.mxu0 %v2376
        %4789 = vmatprep.subr.bf16.mxu0 %v2381
        %4790 = vmatpush1.bf16.msra.mxu0 %v2380
        %4791 = vmatprep.subr.bf16.mxu0 %v2385
        %4792 = vmatpush1.bf16.msra.mxu0 %v2384
        %4793 = vmatprep.subr.bf16.mxu0 %v2389
        %4794 = vmatpush1.bf16.msra.mxu0 %v2388
        %4795 = vmatprep.subr.bf16.mxu0 %v2393
        %4796 = vmatpush1.bf16.msra.mxu0 %v2392
        %4797 = vmatprep.subr.bf16.mxu0 %v2397
        %4798 = vmatpush1.bf16.msra.mxu0 %v2396
        %4799 = vmatprep.subr.bf16.mxu0 %v2401
        %4800 = vmatpush1.bf16.msra.mxu0 %v2400
        %4801 = vmatprep.subr.bf16.mxu0 %v2405
        %4802 = vmatpush1.bf16.msra.mxu0 %v2404
        %4803 = vmatprep.subr.bf16.mxu0 %v2409
        %4804 = vmatpush1.bf16.msra.mxu0 %v2408
        %4805 = vmatprep.subr.bf16.mxu0 %v2413
        %4806 = vmatpush1.bf16.msra.mxu0 %v2412
        %4807 = vmatprep.subr.bf16.mxu0 %v2417
        %4808 = vmatpush1.bf16.msra.mxu0 %v2416
        %4809 = vmatprep.subr.bf16.mxu0 %v2421
        %4810 = vmatpush1.bf16.msra.mxu0 %v2420
        %4811 = vmatprep.subr.bf16.mxu0 %v2425
        %4812 = vmatpush1.bf16.msra.mxu0 %v2424
        %4813 = vmatprep.subr.bf16.mxu0 %v2429
        %4814 = vmatpush1.bf16.msra.mxu0 %v2428
        %4815 = vmatprep.subr.bf16.mxu0 %v2433
        %4816 = vmatpush1.bf16.msra.mxu0 %v2432
        %4817 = vmatprep.mubr.bf16.mxu0 %v2921
        %4818 = vmatmul.mubr.bf16.gmra.mrb[0].mxu0 %v2907
        %v4819 = vpop.f32.mrb[0].mxu0
        %v4820 = vadd.f32 %v4779, %v4819
        %v4821 = vpop.f32.mrb[0].mxu0
        %v4822 = vadd.f32 %v4781, %v4821
        %v4823 = vpop.f32.mrb[0].mxu0
        %v4824 = vpop.f32.mrb[0].mxu0
        %4825 = vdwg.mxu0
        %4826 = vmatprep.subr.bf16.mxu0 %v2437
        %4827 = vmatpush1.bf16.msra.mxu0 %v2436
        %4828 = vmatprep.subr.bf16.mxu0 %v2441
        %4829 = vmatpush1.bf16.msra.mxu0 %v2440
        %4830 = vmatprep.subr.bf16.mxu0 %v2445
        %4831 = vmatpush1.bf16.msra.mxu0 %v2444
        %4832 = vmatprep.subr.bf16.mxu0 %v2449
        %4833 = vmatpush1.bf16.msra.mxu0 %v2448
        %4834 = vmatprep.subr.bf16.mxu0 %v2453
        %4835 = vmatpush1.bf16.msra.mxu0 %v2452
        %4836 = vmatprep.subr.bf16.mxu0 %v2457
        %4837 = vmatpush1.bf16.msra.mxu0 %v2456
        %4838 = vmatprep.subr.bf16.mxu0 %v2461
        %4839 = vmatpush1.bf16.msra.mxu0 %v2460
        %4840 = vmatprep.subr.bf16.mxu0 %v2465
        %4841 = vmatpush1.bf16.msra.mxu0 %v2464
        %4842 = vmatprep.subr.bf16.mxu0 %v2469
        %4843 = vmatpush1.bf16.msra.mxu0 %v2468
        %4844 = vmatprep.subr.bf16.mxu0 %v2473
        %4845 = vmatpush1.bf16.msra.mxu0 %v2472
        %4846 = vmatprep.subr.bf16.mxu0 %v2477
        %4847 = vmatpush1.bf16.msra.mxu0 %v2476
        %4848 = vmatprep.subr.bf16.mxu0 %v2481
        %4849 = vmatpush1.bf16.msra.mxu0 %v2480
        %4850 = vmatprep.subr.bf16.mxu0 %v2485
        %4851 = vmatpush1.bf16.msra.mxu0 %v2484
        %4852 = vmatprep.subr.bf16.mxu0 %v2489
        %4853 = vmatpush1.bf16.msra.mxu0 %v2488
        %4854 = vmatprep.subr.bf16.mxu0 %v2493
        %4855 = vmatpush1.bf16.msra.mxu0 %v2492
        %4856 = vmatprep.subr.bf16.mxu0 %v2497
        %4857 = vmatpush1.bf16.msra.mxu0 %v2496
        %4858 = vmatprep.mubr.bf16.mxu0 %v2931
        %4859 = vmatmul.mubr.bf16.gmra.mrb[0].mxu0 %v2929
        %v4860 = vpop.f32.mrb[0].mxu0
        %v4861 = vadd.f32 %v4820, %v4860
        %v4862 = vpop.f32.mrb[0].mxu0
        %v4863 = vadd.f32 %v4822, %v4862
        %v4864 = vpop.f32.mrb[0].mxu0
        %v4865 = vpop.f32.mrb[0].mxu0
        %4866 = vdwg.mxu0
        %4867 = vmatprep.subr.bf16.mxu0 %v2501
        %4868 = vmatpush1.bf16.msra.mxu0 %v2500
        %4869 = vmatprep.subr.bf16.mxu0 %v2505
        %4870 = vmatpush1.bf16.msra.mxu0 %v2504
        %4871 = vmatprep.subr.bf16.mxu0 %v2509
        %4872 = vmatpush1.bf16.msra.mxu0 %v2508
        %4873 = vmatprep.subr.bf16.mxu0 %v2513
        %4874 = vmatpush1.bf16.msra.mxu0 %v2512
        %4875 = vmatprep.subr.bf16.mxu0 %v2517
        %4876 = vmatpush1.bf16.msra.mxu0 %v2516
        %4877 = vmatprep.subr.bf16.mxu0 %v2521
        %4878 = vmatpush1.bf16.msra.mxu0 %v2520
        %4879 = vmatprep.subr.bf16.mxu0 %v2525
        %4880 = vmatpush1.bf16.msra.mxu0 %v2524
        %4881 = vmatprep.subr.bf16.mxu0 %v2529
        %4882 = vmatpush1.bf16.msra.mxu0 %v2528
        %4883 = vmatprep.subr.bf16.mxu0 %v2533
        %4884 = vmatpush1.bf16.msra.mxu0 %v2532
        %4885 = vmatprep.subr.bf16.mxu0 %v2537
        %4886 = vmatpush1.bf16.msra.mxu0 %v2536
        %4887 = vmatprep.subr.bf16.mxu0 %v2541
        %4888 = vmatpush1.bf16.msra.mxu0 %v2540
        %4889 = vmatprep.subr.bf16.mxu0 %v2545
        %4890 = vmatpush1.bf16.msra.mxu0 %v2544
        %4891 = vmatprep.subr.bf16.mxu0 %v2549
        %4892 = vmatpush1.bf16.msra.mxu0 %v2548
        %4893 = vmatprep.subr.bf16.mxu0 %v2553
        %4894 = vmatpush1.bf16.msra.mxu0 %v2552
        %4895 = vmatprep.subr.bf16.mxu0 %v2557
        %4896 = vmatpush1.bf16.msra.mxu0 %v2556
        %4897 = vmatprep.subr.bf16.mxu0 %v2561
        %4898 = vmatpush1.bf16.msra.mxu0 %v2560
        %4899 = vmatprep.mubr.bf16.mxu0 %v2928
        %4900 = vmatmul.mubr.bf16.gmra.mrb[0].mxu0 %v2914
        %v4901 = vpop.f32.mrb[0].mxu0
        %v4902 = vadd.f32 %v4861, %v4901
        %v4903 = vpop.f32.mrb[0].mxu0
        %v4904 = vadd.f32 %v4863, %v4903
        %v4905 = vpop.f32.mrb[0].mxu0
        %v4906 = vpop.f32.mrb[0].mxu0
        %4907 = vdwg.mxu0
        %4908 = vmatprep.subr.bf16.mxu0 %v2565
        %4909 = vmatpush1.bf16.msra.mxu0 %v2564
        %4910 = vmatprep.subr.bf16.mxu0 %v2569
        %4911 = vmatpush1.bf16.msra.mxu0 %v2568
        %4912 = vmatprep.subr.bf16.mxu0 %v2573
        %4913 = vmatpush1.bf16.msra.mxu0 %v2572
        %4914 = vmatprep.subr.bf16.mxu0 %v2577
        %4915 = vmatpush1.bf16.msra.mxu0 %v2576
        %4916 = vmatprep.subr.bf16.mxu0 %v2581
        %4917 = vmatpush1.bf16.msra.mxu0 %v2580
        %4918 = vmatprep.subr.bf16.mxu0 %v2585
        %4919 = vmatpush1.bf16.msra.mxu0 %v2584
        %4920 = vmatprep.subr.bf16.mxu0 %v2589
        %4921 = vmatpush1.bf16.msra.mxu0 %v2588
        %4922 = vmatprep.subr.bf16.mxu0 %v2593
        %4923 = vmatpush1.bf16.msra.mxu0 %v2592
        %4924 = vmatprep.subr.bf16.mxu0 %v2597
        %4925 = vmatpush1.bf16.msra.mxu0 %v2596
        %4926 = vmatprep.subr.bf16.mxu0 %v2601
        %4927 = vmatpush1.bf16.msra.mxu0 %v2600
        %4928 = vmatprep.subr.bf16.mxu0 %v2605
        %4929 = vmatpush1.bf16.msra.mxu0 %v2604
        %4930 = vmatprep.subr.bf16.mxu0 %v2609
        %4931 = vmatpush1.bf16.msra.mxu0 %v2608
        %4932 = vmatprep.subr.bf16.mxu0 %v2613
        %4933 = vmatpush1.bf16.msra.mxu0 %v2612
        %4934 = vmatprep.subr.bf16.mxu0 %v2617
        %4935 = vmatpush1.bf16.msra.mxu0 %v2616
        %4936 = vmatprep.subr.bf16.mxu0 %v2621
        %4937 = vmatpush1.bf16.msra.mxu0 %v2620
        %4938 = vmatprep.subr.bf16.mxu0 %v2625
        %4939 = vmatpush1.bf16.msra.mxu0 %v2624
        %4940 = vmatprep.mubr.bf16.mxu0 %v2932
        %4941 = vmatmul.mubr.bf16.gmra.mrb[0].mxu0 %v2930
        %v4942 = vpop.f32.mrb[0].mxu0
        %v4943 = vadd.f32 %v4902, %v4942
        %v4944 = vpop.f32.mrb[0].mxu0
        %v4945 = vadd.f32 %v4904, %v4944
        %v4946 = vpop.f32.mrb[0].mxu0
        %v4947 = vpop.f32.mrb[0].mxu0
        %4948 = vdwg.mxu0
        %v4953 = vcombine.low %v3959, %v3961
        %v4954 = vcombine.low %v4943, %v4945
        %v4956 = vunpack.c.l.s4 1983009808
        %v4957 = vunpack.c.0.s8 %v4956
        %v4958 = vlaneseq
        %v4959 = vshrl.u32 %v4958, 7
        %v4960 = vsub.s32 %v4957, %v4959
        %v4961 = vrot.slane %v4953, %v4960
        %v4963 = vunpack.c.l.s4 1983009808
        %v4964 = vunpack.c.0.s8 %v4963
        %v4965 = vlaneseq
        %v4966 = vshrl.u32 %v4965, 7
        %v4967 = vsub.s32 %v4964, %v4966
        %v4968 = vrot.slane %v4954, %v4967
        %v4969 = vcombine.low %v4961, %v4968
        %v4971 = vadd.f32 %v2626, %v4969
        %4972 = vst [vmem:[#allocation2] sm:$0xff] %v4971
        %p4973 = scmp.eq.s32.totalorder %s23, 1
        // Predicated region
        $region65: #{lstm_head_forward.1} parent=43 // pred_check
          %p4974 = pneg %p4973
        $region66: #{lstm_head_forward.1} parent=43 // pred_check_branch
          %4976 = sbr.rel (%p4974) target = $region68
        $region67: #{lstm_head_forward.1} parent=43 // pred_region
          %v4977 = vld [vmem:[#allocation2] sm:$0xff]
          %v4978 = vld [vmem:[#allocation6] sm:$0xf]
          %v4980 = vlaneseq
          %v4981 = vshrl.u32 %v4980, 7
          %v4982 = vsub.s32 0, %v4981
          %v4983 = vrot.slane %v4978, %v4982
          %v4984 = vlaneseq
          %v4985 = vshrl.u32 %v4984, 7
          %v4986 = vsub.s32 1, %v4985
          %v4987 = vrot.slane %v4978, %v4986
          %v4988 = vlaneseq
          %v4989 = vshrl.u32 %v4988, 7
          %v4990 = vsub.s32 2, %v4989
          %v4991 = vrot.slane %v4978, %v4990
          %v4992 = vlaneseq
          %v4993 = vshrl.u32 %v4992, 7
          %v4994 = vsub.s32 3, %v4993
          %v4995 = vrot.slane %v4978, %v4994
          %v4996 = vcombine.low %v4983, %v4987
          %v4997 = vcombine.low %v4991, %v4995
          %v4999 = vunpack.c.l.s4 1983009808
          %v5000 = vunpack.c.0.s8 %v4999
          %v5001 = vlaneseq
          %v5002 = vshrl.u32 %v5001, 7
          %v5003 = vsub.s32 %v5000, %v5002
          %v5004 = vrot.slane %v4996, %v5003
          %v5006 = vunpack.c.l.s4 1983009808
          %v5007 = vunpack.c.0.s8 %v5006
          %v5008 = vlaneseq
          %v5009 = vshrl.u32 %v5008, 7
          %v5010 = vsub.s32 %v5007, %v5009
          %v5011 = vrot.slane %v4997, %v5010
          %v5012 = vcombine.low %v5004, %v5011
          %v5014 = vmul.f32 %v4977, %v5012
          %v5015 = vld [vmem:[#allocation8] sm:$0xf]
          %v5017 = vlaneseq
          %v5018 = vshrl.u32 %v5017, 7
          %v5019 = vsub.s32 0, %v5018
          %v5020 = vrot.slane %v5015, %v5019
          %v5021 = vlaneseq
          %v5022 = vshrl.u32 %v5021, 7
          %v5023 = vsub.s32 1, %v5022
          %v5024 = vrot.slane %v5015, %v5023
          %v5025 = vlaneseq
          %v5026 = vshrl.u32 %v5025, 7
          %v5027 = vsub.s32 2, %v5026
          %v5028 = vrot.slane %v5015, %v5027
          %v5029 = vlaneseq
          %v5030 = vshrl.u32 %v5029, 7
          %v5031 = vsub.s32 3, %v5030
          %v5032 = vrot.slane %v5015, %v5031
          %v5033 = vcombine.low %v5020, %v5024
          %v5034 = vcombine.low %v5028, %v5032
          %v5036 = vunpack.c.l.s4 1983009808
          %v5037 = vunpack.c.0.s8 %v5036
          %v5038 = vlaneseq
          %v5039 = vshrl.u32 %v5038, 7
          %v5040 = vsub.s32 %v5037, %v5039
          %v5041 = vrot.slane %v5033, %v5040
          %v5043 = vunpack.c.l.s4 1983009808
          %v5044 = vunpack.c.0.s8 %v5043
          %v5045 = vlaneseq
          %v5046 = vshrl.u32 %v5045, 7
          %v5047 = vsub.s32 %v5044, %v5046
          %v5048 = vrot.slane %v5034, %v5047
          %v5049 = vcombine.low %v5041, %v5048
          %v5051 = vadd.f32 %v5014, %v5049
          %v5052 = vmax.f32 %v5051, 0.0
          %v5053 = vld [vmem:[%s4] sm:$0xff]
          %v5054 = vld [vmem:[%s4 + $0x8] sm:$0xff]
          %v5055 = vld [vmem:[%s4 + $0x10] sm:$0xff]
          %v5056 = vld [vmem:[%s4 + $0x18] sm:$0xff]
          %v5057 = vld [vmem:[%s4 + $0x20] sm:$0xff]
          %v5058 = vld [vmem:[%s4 + $0x28] sm:$0xff]
          %v5059 = vld [vmem:[%s4 + $0x30] sm:$0xff]
          %v5060 = vld [vmem:[%s4 + $0x38] sm:$0xff]
          %v5061 = vld [vmem:[%s4 + $0x40] sm:$0xff]
          %v5062 = vld [vmem:[%s4 + $0x48] sm:$0xff]
          %v5063 = vld [vmem:[%s4 + $0x50] sm:$0xff]
          %v5064 = vld [vmem:[%s4 + $0x58] sm:$0xff]
          %v5065 = vld [vmem:[%s4 + $0x60] sm:$0xff]
          %v5066 = vld [vmem:[%s4 + $0x68] sm:$0xff]
          %v5067 = vld [vmem:[%s4 + $0x70] sm:$0xff]
          %v5068 = vld [vmem:[%s4 + $0x78] sm:$0xff]
          %v5069 = vld [vmem:[%s4 + $0x80] sm:$0xff]
          %v5070 = vld [vmem:[%s4 + $0x88] sm:$0xff]
          %v5071 = vld [vmem:[%s4 + $0x90] sm:$0xff]
          %v5072 = vld [vmem:[%s4 + $0x98] sm:$0xff]
          %v5073 = vld [vmem:[%s4 + $0xa0] sm:$0xff]
          %v5074 = vld [vmem:[%s4 + $0xa8] sm:$0xff]
          %v5075 = vld [vmem:[%s4 + $0xb0] sm:$0xff]
          %v5076 = vld [vmem:[%s4 + $0xb8] sm:$0xff]
          %v5077 = vld [vmem:[%s4 + $0xc0] sm:$0xff]
          %v5078 = vld [vmem:[%s4 + $0xc8] sm:$0xff]
          %v5079 = vld [vmem:[%s4 + $0xd0] sm:$0xff]
          %v5080 = vld [vmem:[%s4 + $0xd8] sm:$0xff]
          %v5081 = vld [vmem:[%s4 + $0xe0] sm:$0xff]
          %v5082 = vld [vmem:[%s4 + $0xe8] sm:$0xff]
          %v5083 = vld [vmem:[%s4 + $0xf0] sm:$0xff]
          %v5084 = vld [vmem:[%s4 + $0xf8] sm:$0xff]
          %v5085 = vld [vmem:[%s4 + $0x100] sm:$0xff]
          %v5086 = vld [vmem:[%s4 + $0x108] sm:$0xff]
          %v5087 = vld [vmem:[%s4 + $0x110] sm:$0xff]
          %v5088 = vld [vmem:[%s4 + $0x118] sm:$0xff]
          %v5089 = vld [vmem:[%s4 + $0x120] sm:$0xff]
          %v5090 = vld [vmem:[%s4 + $0x128] sm:$0xff]
          %v5091 = vld [vmem:[%s4 + $0x130] sm:$0xff]
          %v5092 = vld [vmem:[%s4 + $0x138] sm:$0xff]
          %v5093 = vld [vmem:[%s4 + $0x140] sm:$0xff]
          %v5094 = vld [vmem:[%s4 + $0x148] sm:$0xff]
          %v5095 = vld [vmem:[%s4 + $0x150] sm:$0xff]
          %v5096 = vld [vmem:[%s4 + $0x158] sm:$0xff]
          %v5097 = vld [vmem:[%s4 + $0x160] sm:$0xff]
          %v5098 = vld [vmem:[%s4 + $0x168] sm:$0xff]
          %v5099 = vld [vmem:[%s4 + $0x170] sm:$0xff]
          %v5100 = vld [vmem:[%s4 + $0x178] sm:$0xff]
          %v5101 = vld [vmem:[%s4 + $0x180] sm:$0xff]
          %v5102 = vld [vmem:[%s4 + $0x188] sm:$0xff]
          %v5103 = vld [vmem:[%s4 + $0x190] sm:$0xff]
          %v5104 = vld [vmem:[%s4 + $0x198] sm:$0xff]
          %v5105 = vld [vmem:[%s4 + $0x1a0] sm:$0xff]
          %v5106 = vld [vmem:[%s4 + $0x1a8] sm:$0xff]
          %v5107 = vld [vmem:[%s4 + $0x1b0] sm:$0xff]
          %v5108 = vld [vmem:[%s4 + $0x1b8] sm:$0xff]
          %v5109 = vld [vmem:[%s4 + $0x1c0] sm:$0xff]
          %v5110 = vld [vmem:[%s4 + $0x1c8] sm:$0xff]
          %v5111 = vld [vmem:[%s4 + $0x1d0] sm:$0xff]
          %v5112 = vld [vmem:[%s4 + $0x1d8] sm:$0xff]
          %v5113 = vld [vmem:[%s4 + $0x1e0] sm:$0xff]
          %v5114 = vld [vmem:[%s4 + $0x1e8] sm:$0xff]
          %v5115 = vld [vmem:[%s4 + $0x1f0] sm:$0xff]
          %v5116 = vld [vmem:[%s4 + $0x1f8] sm:$0xff]
          %v5117 = vld [vmem:[#allocation9] sm:$0x1]
          %v5119 = vlaneseq
          %v5120 = vshrl.u32 %v5119, 7
          %v5121 = vsub.s32 0, %v5120
          %v5122 = vrot.slane %v5117, %v5121
          %v5125 = vcombine.high %v5052, %v5052
          %v5127 = vunpack.c.l.s4 1983009808
          %v5128 = vunpack.c.0.s8 %v5127
          %v5129 = vlaneseq
          %v5130 = vshrl.u32 %v5129, 7
          %v5131 = vsub.s32 %v5128, %v5130
          %v5132 = vrot.slane %v5052, %v5131
          %v5134 = vunpack.c.l.s4 1983009808
          %v5135 = vunpack.c.0.s8 %v5134
          %v5136 = vlaneseq
          %v5137 = vshrl.u32 %v5136, 7
          %v5138 = vsub.s32 %v5135, %v5137
          %v5139 = vrot.slane %v5125, %v5138
          %v5140 = vcombine.high %v5132, %v5132
          %v5141 = vcombine.high %v5139, %v5139
          %5146 = vmatprep.subr.mxu0 0.0
          %5147 = vmatpush1.msra.mxu0 %v5053
          %5148 = vmatprep.subr.mxu0 0.0
          %5149 = vmatpush1.msra.mxu0 %v5054
          %5150 = vmatprep.subr.mxu0 0.0
          %5151 = vmatpush1.msra.mxu0 %v5055
          %5152 = vmatprep.subr.mxu0 0.0
          %5153 = vmatpush1.msra.mxu0 %v5056
          %5154 = vmatprep.subr.mxu0 0.0
          %5155 = vmatpush1.msra.mxu0 %v5057
          %5156 = vmatprep.subr.mxu0 0.0
          %5157 = vmatpush1.msra.mxu0 %v5058
          %5158 = vmatprep.subr.mxu0 0.0
          %5159 = vmatpush1.msra.mxu0 %v5059
          %5160 = vmatprep.subr.mxu0 0.0
          %5161 = vmatpush1.msra.mxu0 %v5060
          %5162 = vmatprep.subr.mxu0 0.0
          %5163 = vmatpush1.msra.mxu0 %v5061
          %5164 = vmatprep.subr.mxu0 0.0
          %5165 = vmatpush1.msra.mxu0 %v5062
          %5166 = vmatprep.subr.mxu0 0.0
          %5167 = vmatpush1.msra.mxu0 %v5063
          %5168 = vmatprep.subr.mxu0 0.0
          %5169 = vmatpush1.msra.mxu0 %v5064
          %5170 = vmatprep.subr.mxu0 0.0
          %5171 = vmatpush1.msra.mxu0 %v5065
          %5172 = vmatprep.subr.mxu0 0.0
          %5173 = vmatpush1.msra.mxu0 %v5066
          %5174 = vmatprep.subr.mxu0 0.0
          %5175 = vmatpush1.msra.mxu0 %v5067
          %5176 = vmatprep.subr.mxu0 0.0
          %5177 = vmatpush1.msra.mxu0 %v5068
          %5178 = vmatprep.subr.mxu0 0.0
          %5179 = vmatpush1.msra.mxu0 %v5069
          %5180 = vmatprep.subr.mxu0 0.0
          %5181 = vmatpush1.msra.mxu0 %v5070
          %5182 = vmatprep.subr.mxu0 0.0
          %5183 = vmatpush1.msra.mxu0 %v5071
          %5184 = vmatprep.subr.mxu0 0.0
          %5185 = vmatpush1.msra.mxu0 %v5072
          %5186 = vmatprep.subr.mxu0 0.0
          %5187 = vmatpush1.msra.mxu0 %v5073
          %5188 = vmatprep.subr.mxu0 0.0
          %5189 = vmatpush1.msra.mxu0 %v5074
          %5190 = vmatprep.subr.mxu0 0.0
          %5191 = vmatpush1.msra.mxu0 %v5075
          %5192 = vmatprep.subr.mxu0 0.0
          %5193 = vmatpush1.msra.mxu0 %v5076
          %5194 = vmatprep.subr.mxu0 0.0
          %5195 = vmatpush1.msra.mxu0 %v5077
          %5196 = vmatprep.subr.mxu0 0.0
          %5197 = vmatpush1.msra.mxu0 %v5078
          %5198 = vmatprep.subr.mxu0 0.0
          %5199 = vmatpush1.msra.mxu0 %v5079
          %5200 = vmatprep.subr.mxu0 0.0
          %5201 = vmatpush1.msra.mxu0 %v5080
          %5202 = vmatprep.subr.mxu0 0.0
          %5203 = vmatpush1.msra.mxu0 %v5081
          %5204 = vmatprep.subr.mxu0 0.0
          %5205 = vmatpush1.msra.mxu0 %v5082
          %5206 = vmatprep.subr.mxu0 0.0
          %5207 = vmatpush1.msra.mxu0 %v5083
          %5208 = vmatprep.subr.mxu0 0.0
          %5209 = vmatpush1.msra.mxu0 %v5084
          %5210 = vmatprep.mubr.f32.mxu0 %v5140
          %5211 = vmatmul.mubr.f32.gmra.mrb[0].mxu0 %v5132
          %v5212 = vpop.f32.mrb[0].mxu0
          %v5213 = vadd.f32 %v5122, %v5212
          %v5214 = vpop.f32.mrb[0].mxu0
          %5215 = vdwg.mxu0
          %5216 = vmatprep.subr.mxu0 0.0
          %5217 = vmatpush1.msra.mxu0 %v5085
          %5218 = vmatprep.subr.mxu0 0.0
          %5219 = vmatpush1.msra.mxu0 %v5086
          %5220 = vmatprep.subr.mxu0 0.0
          %5221 = vmatpush1.msra.mxu0 %v5087
          %5222 = vmatprep.subr.mxu0 0.0
          %5223 = vmatpush1.msra.mxu0 %v5088
          %5224 = vmatprep.subr.mxu0 0.0
          %5225 = vmatpush1.msra.mxu0 %v5089
          %5226 = vmatprep.subr.mxu0 0.0
          %5227 = vmatpush1.msra.mxu0 %v5090
          %5228 = vmatprep.subr.mxu0 0.0
          %5229 = vmatpush1.msra.mxu0 %v5091
          %5230 = vmatprep.subr.mxu0 0.0
          %5231 = vmatpush1.msra.mxu0 %v5092
          %5232 = vmatprep.subr.mxu0 0.0
          %5233 = vmatpush1.msra.mxu0 %v5093
          %5234 = vmatprep.subr.mxu0 0.0
          %5235 = vmatpush1.msra.mxu0 %v5094
          %5236 = vmatprep.subr.mxu0 0.0
          %5237 = vmatpush1.msra.mxu0 %v5095
          %5238 = vmatprep.subr.mxu0 0.0
          %5239 = vmatpush1.msra.mxu0 %v5096
          %5240 = vmatprep.subr.mxu0 0.0
          %5241 = vmatpush1.msra.mxu0 %v5097
          %5242 = vmatprep.subr.mxu0 0.0
          %5243 = vmatpush1.msra.mxu0 %v5098
          %5244 = vmatprep.subr.mxu0 0.0
          %5245 = vmatpush1.msra.mxu0 %v5099
          %5246 = vmatprep.subr.mxu0 0.0
          %5247 = vmatpush1.msra.mxu0 %v5100
          %5248 = vmatprep.subr.mxu0 0.0
          %5249 = vmatpush1.msra.mxu0 %v5101
          %5250 = vmatprep.subr.mxu0 0.0
          %5251 = vmatpush1.msra.mxu0 %v5102
          %5252 = vmatprep.subr.mxu0 0.0
          %5253 = vmatpush1.msra.mxu0 %v5103
          %5254 = vmatprep.subr.mxu0 0.0
          %5255 = vmatpush1.msra.mxu0 %v5104
          %5256 = vmatprep.subr.mxu0 0.0
          %5257 = vmatpush1.msra.mxu0 %v5105
          %5258 = vmatprep.subr.mxu0 0.0
          %5259 = vmatpush1.msra.mxu0 %v5106
          %5260 = vmatprep.subr.mxu0 0.0
          %5261 = vmatpush1.msra.mxu0 %v5107
          %5262 = vmatprep.subr.mxu0 0.0
          %5263 = vmatpush1.msra.mxu0 %v5108
          %5264 = vmatprep.subr.mxu0 0.0
          %5265 = vmatpush1.msra.mxu0 %v5109
          %5266 = vmatprep.subr.mxu0 0.0
          %5267 = vmatpush1.msra.mxu0 %v5110
          %5268 = vmatprep.subr.mxu0 0.0
          %5269 = vmatpush1.msra.mxu0 %v5111
          %5270 = vmatprep.subr.mxu0 0.0
          %5271 = vmatpush1.msra.mxu0 %v5112
          %5272 = vmatprep.subr.mxu0 0.0
          %5273 = vmatpush1.msra.mxu0 %v5113
          %5274 = vmatprep.subr.mxu0 0.0
          %5275 = vmatpush1.msra.mxu0 %v5114
          %5276 = vmatprep.subr.mxu0 0.0
          %5277 = vmatpush1.msra.mxu0 %v5115
          %5278 = vmatprep.subr.mxu0 0.0
          %5279 = vmatpush1.msra.mxu0 %v5116
          %5280 = vmatprep.mubr.f32.mxu0 %v5141
          %5281 = vmatmul.mubr.f32.gmra.mrb[0].mxu0 %v5139
          %v5282 = vpop.f32.mrb[0].mxu0
          %v5283 = vadd.f32 %v5213, %v5282
          %v5284 = vpop.f32.mrb[0].mxu0
          %5285 = vdwg.mxu0
          %vm5286 = vcmask 74752
          %5287 = vst.msk [vmem:[#allocation11] sm:$0x3] %vm5286, %v5283
        $region68: #{lstm_head_forward.1} parent=43 // pred_fallthru
          _
        // Predicated region
        $region69: #{lstm_head_forward.1} parent=43 // pred_check
          %p5288 = pneg %p172
        $region70: #{lstm_head_forward.1} parent=43 // pred_check_branch
          %5290 = sbr.rel (%p5288) target = $region72
        $region71: #{lstm_head_forward.1} parent=43 // pred_region
          %s5292 = ssub.s32 32, 32
          %5293 = vsyncadd [#allocation5], %s5292
          %s5295 = sshll.u32 [#allocation11], 4
          %s5296 = int_to_ptr.vmem [resolvable:$true] %s5295
          %5298 = dma.vmem_to_hbm [thread:$0]  %s5296, 32, %s6, [#allocation5]
        $region72: #{lstm_head_forward.1} parent=43 // pred_fallthru
          _
        // Predicated region
        $region73: #{lstm_head_forward.1} parent=43 // pred_check
          %p5299 = pneg %p172
        $region74: #{lstm_head_forward.1} parent=43 // pred_check_branch
          %5301 = sbr.rel (%p5299) target = $region76
        $region75: #{lstm_head_forward.1} parent=43 // pred_region
          %5302 = dma.done [#allocation5], 32
        $region76: #{lstm_head_forward.1} parent=43 // pred_fallthru
          _
      $region44: #{lstm_head_forward.1} parent=5 // pred_fallthru
        _
      %p5303 = scmp.le.s32.totalorder 2, %s18
      // Predicated region
      $region77: #{lstm_head_forward.1} parent=5 // pred_check
        %p5304 = pneg %p5303
      $region78: #{lstm_head_forward.1} parent=5 // pred_check_branch
        %5306 = sbr.rel (%p5304) target = $region80
      $region79: #{lstm_head_forward.1} parent=5 // pred_region
        %s5307 = ssub.s32 %s18, 2
      $region80: #{lstm_head_forward.1} parent=5 // pred_fallthru
        _
    $region6: #{lstm_head_forward.1} parent=1 // loop_footer
      %s22 = sadd.s32 1, %s18
    $region7: #{lstm_head_forward.1} parent=1 // loop_footer_branch
      %17 = sbr.rel target = $region3
    $region8: #{lstm_head_forward.1} parent=1 // loop_exit
      _
    %5308 = vsyncpa [#allocation4], 1
    %s5309 = scalar_lea.sflag [#allocation4], 1
    %5310 = vsyncpa %s5309, 1
    %5311 = vsyncpa [#allocation7], 1
    %5312 = vsyncpa [#allocation10], 1
    %5313 = vsyncpa [#allocation5], 1
    %s5314 = scalar_lea.sflag [#allocation5], 1
    %5315 = vsyncpa %s5314, 1

</llo_original>
